<compile_context>
chip_gen: v6e
topology: v6e:2x2x1
jax: 0.10.0
libtpu: 0.0.40
codegen_flags: <defaults>
</compile_context>

<pallas_src>
import functools
import math

import jax
import jax.numpy as jnp
from jax.experimental import pallas as pl
from jax.experimental.pallas import tpu as pltpu

LN_EPS = 1e-5  # torch.nn.LayerNorm default


def _layernorm_cols(x, gamma, beta):
    """Two-pass LayerNorm over axis 0 (channels) of a channel-major (c, n) tile."""
    mu = jnp.mean(x, axis=0, keepdims=True)                # (1, n)
    xc = x - mu
    var = jnp.mean(xc * xc, axis=0, keepdims=True)         # (1, n)
    return xc * jax.lax.rsqrt(var + LN_EPS) * gamma + beta  # gamma/beta: (c, 1)


def _layernorm_rows(x, gamma, beta):
    """Reference LayerNorm over the last axis (token-major)."""
    mu = jnp.mean(x, axis=-1, keepdims=True)
    xc = x - mu
    var = jnp.mean(xc * xc, axis=-1, keepdims=True)
    return xc * jax.lax.rsqrt(var + LN_EPS) * gamma + beta


# -----------------------------------------------------------------------------
# Stage 1: src2 -> packed K|V (channel-major bf16), one n2 tile per grid step.
# -----------------------------------------------------------------------------
def kv_proj_kernel(x2_ref, wpT_ref, wkvT_ref, vecs_ref, bkv_ref, kv_ref):
    bf16 = jnp.bfloat16
    vecs = vecs_ref[...]
    bp, g13, b13 = vecs[:, 0:1], vecs[:, 1:2], vecs[:, 2:3]

    x2 = x2_ref[0]                                                   # (dm, tkv) bf16
    h2 = jnp.dot(wpT_ref[...], x2, preferred_element_type=jnp.float32) + bp
    s2 = _layernorm_cols(h2, g13, b13)                               # (c, tkv) f32
    kv = jnp.dot(wkvT_ref[...], s2.astype(bf16),
                 preferred_element_type=jnp.float32) + bkv_ref[...]  # (2c, tkv) f32
    kv_ref[0] = kv.astype(kv_ref.dtype)


# -----------------------------------------------------------------------------
# Stage 2: cross-attention + FFN for one (batch, q-tile) grid point.
# -----------------------------------------------------------------------------
def cross_attn_kernel(
    x1_ref,      # (1, dm, tq)  bf16   query points, native channel-major layout
    kv_ref,      # (1, 2c, n2)  bf16   packed K|V from stage 1 (one block / batch)
    wpT_ref,     # (c, dm)      bf16
    wqT_ref,     # (c, c)       bf16
    woT_ref,     # (c, c)       bf16
    w11T_ref,    # (ff, c)      bf16
    w12T_ref,    # (c, ff)      bf16
    vecs_ref,    # (c, 8)       f32    columns: [bp g13 b13 bq bo g12 b12 b12f]
    b11_ref,     # (ff, 1)      f32
    out_ref,     # (1, c, tq)   output dtype
    *, nhead,
):
    bf16 = jnp.bfloat16
    c = wqT_ref.shape[0]
    hd = c // nhead
    n2 = kv_ref.shape[2]
    tq = x1_ref.shape[2]
    scale = 1.0 / math.sqrt(hd)

    vecs = vecs_ref[...]
    bp, g13, b13, bq = vecs[:, 0:1], vecs[:, 1:2], vecs[:, 2:3], vecs[:, 3:4]
    bo, g12, b12, b12f = vecs[:, 4:5], vecs[:, 5:6], vecs[:, 6:7], vecs[:, 7:8]

    # ---- input_proj + norm13 for the query tile (channel-major (c, tq)) ----
    x1 = x1_ref[0]                                                   # (dm, tq) bf16
    h1 = jnp.dot(wpT_ref[...], x1, preferred_element_type=jnp.float32) + bp
    s1 = _layernorm_cols(h1, g13, b13)                               # (c, tq) f32

    # ---- multi-head cross attention (K|V precomputed, heads = sublane groups)
    q = (jnp.dot(wqT_ref[...], s1.astype(bf16),
                 preferred_element_type=jnp.float32) + bq) * scale   # (c, tq) f32
    kvb = kv_ref[0]                                                  # (2c, n2) bf16
    k_heads = kvb[:c].reshape(nhead, hd, n2)                         # (h, hd, n2)
    v_heads = kvb[c:].reshape(nhead, hd, n2)                         # (h, hd, n2)
    # Only the small q tile gets relayouted to (h, tq, hd); the big K/V tensors
    # stay lane-dense in n2.  Per-head 2-D transposes, stacked on the batch dim.
    q_heads = jnp.stack(
        [q[h * hd:(h + 1) * hd, :].T.astype(bf16) for h in range(nhead)],
        axis=0)                                                      # (h, tq, hd) bf16

    s = jnp.einsum("hqd,hdk->hqk", q_heads, k_heads,
                   preferred_element_type=jnp.float32)               # (h, tq, n2)
    s = s - jnp.max(s, axis=-1, keepdims=True)
    p = jnp.exp(s)
    p = p * pl.reciprocal(jnp.sum(p, axis=-1, keepdims=True), approx=True)

    # o^T[h, d, t] = sum_j v[h, d, j] * p[h, t, j]   (contract the lane dim n2)
    oT = jnp.einsum("hdk,hqk->hdq", v_heads, p.astype(bf16),
                    preferred_element_type=jnp.float32)              # (h, hd, tq)
    attnT = oT.reshape(c, tq)                                        # (c, tq) f32

    attn = jnp.dot(woT_ref[...], attnT.astype(bf16),
                   preferred_element_type=jnp.float32) + bo          # (c, tq)

    # ---- residual + norm12 ----
    y = _layernorm_cols(s1 + attn, g12, b12)                         # (c, tq) f32

    # ---- feed-forward (exact erf GELU, torch default) + residual ----
    f1 = jnp.dot(w11T_ref[...], y.astype(bf16),
                 preferred_element_type=jnp.float32) + b11_ref[...]  # (ff, tq)
    f1 = jax.nn.gelu(f1, approximate=False)
    f2 = jnp.dot(w12T_ref[...], f1.astype(bf16),
                 preferred_element_type=jnp.float32) + b12f          # (c, tq)

    out_ref[0] = (y + f2).astype(out_ref.dtype)                      # native (c, tq)


# -----------------------------------------------------------------------------
# Wrapper
# -----------------------------------------------------------------------------
_VEC_COLS = ("bp", "g13", "b13", "bq", "bo", "g12", "b12", "b12f")


def _pick_tile(n, preferred=(256, 128)):
    for t in preferred:
        if n % t == 0:
            return t
    return n  # full axis is always a legal block extent


def cross_transformer_forward(src1, src2, params, *, nhead, tq=None, tkv=None,
                              out_dtype=jnp.float32):
    """src1: (b, d_model, n1), src2: (b, d_model, n2) -> (b, d_model_out, n1)."""
    b, dm, n1 = src1.shape
    n2 = src2.shape[2]
    c = params["wp"].shape[1]
    ff = params["w11"].shape[1]
    assert c % nhead == 0

    tq = tq or _pick_tile(n1)
    tkv = tkv or _pick_tile(n2)
    assert n1 % tq == 0 and n2 % tkv == 0

    bf16 = jnp.bfloat16
    x1 = src1.astype(bf16)   # native (b, dm, n) layout: no wrapper transposes
    x2 = src2.astype(bf16)

    # Pre-transpose the (tiny) weights once so every in-kernel matmul is a
    # natural-form W^T @ X MXU op; fuse wk|wv; pack per-channel vectors.
    wpT = params["wp"].T.astype(bf16)                                        # (c, dm)
    wqT = params["wq"].T.astype(bf16)                                        # (c, c)
    wkvT = jnp.concatenate([params["wk"].T, params["wv"].T], 0).astype(bf16)  # (2c, c)
    woT = params["wo"].T.astype(bf16)                                        # (c, c)
    w11T = params["w11"].T.astype(bf16)                                      # (ff, c)
    w12T = params["w12"].T.astype(bf16)                                      # (c, ff)
    vecs = jnp.concatenate([params[k].reshape(-1, 1) for k in _VEC_COLS],
                           axis=1).astype(jnp.float32)                       # (c, 8)
    bkv = jnp.concatenate([params["bk"].reshape(-1, 1),
                           params["bv"].reshape(-1, 1)], 0).astype(jnp.float32)  # (2c, 1)
    b11 = params["b11"].reshape(-1, 1).astype(jnp.float32)                   # (ff, 1)

    cparams = pltpu.CompilerParams(
        dimension_semantics=("parallel", "parallel"),
        vmem_limit_bytes=48 * 1024 * 1024)

    def run(single_buffer):
        def wspec(shape):
            # grid-invariant inputs: 1 VMEM buffer instead of the default 2
            if single_buffer:
                return pl.BlockSpec(shape, lambda i, j: (0, 0),
                                    pipeline_mode=pl.Buffered(1))
            return pl.BlockSpec(shape, lambda i, j: (0, 0))

        # ---------- stage 1: src2 -> packed K|V, (b, 2c, n2) bf16 ----------
        kv = pl.pallas_call(
            kv_proj_kernel,
            out_shape=jax.ShapeDtypeStruct((b, 2 * c, n2), bf16),
            grid=(b, n2 // tkv),
            in_specs=[
                pl.BlockSpec((1, dm, tkv), lambda i, j: (i, 0, j)),
                wspec((c, dm)), wspec((2 * c, c)), wspec((c, 8)), wspec((2 * c, 1)),
            ],
            out_specs=pl.BlockSpec((1, 2 * c, tkv), lambda i, j: (i, 0, j)),
            compiler_params=cparams,
        )(x2, wpT, wkvT, vecs, bkv)

        # ---------- stage 2: attention + FFN over query tiles ---------------
        return pl.pallas_call(
            functools.partial(cross_attn_kernel, nhead=nhead),
            out_shape=jax.ShapeDtypeStruct((b, c, n1), out_dtype),
            grid=(b, n1 // tq),
            in_specs=[
                pl.BlockSpec((1, dm, tq), lambda i, j: (i, 0, j)),      # src1 tile
                pl.BlockSpec((1, 2 * c, n2), lambda i, j: (i, 0, 0)),   # K|V / batch
                wspec((c, dm)), wspec((c, c)), wspec((c, c)),
                wspec((ff, c)), wspec((c, ff)), wspec((c, 8)), wspec((ff, 1)),
            ],
            out_specs=pl.BlockSpec((1, c, tq), lambda i, j: (i, 0, j)),
            compiler_params=cparams,
        )(x1, kv, wpT, wqT, woT, w11T, w12T, vecs, b11)

    try:
        return run(single_buffer=True)
    except Exception:
        # This JAX/Mosaic version rejects pl.Buffered(1): fall back to the
        # default double-buffered pipeline (identical semantics).
        return run(single_buffer=False)


# -----------------------------------------------------------------------------
# Pure-JAX f32 reference (faithful to the PyTorch forward) and param init
# -----------------------------------------------------------------------------
def reference_forward(src1, src2, params, *, nhead):
    def one_batch(x1, x2):  # x1: (d_model, n1), x2: (d_model, n2)
        h1 = x1.T @ params["wp"] + params["bp"]
        h2 = x2.T @ params["wp"] + params["bp"]
        s1 = _layernorm_rows(h1, params["g13"], params["b13"])
        s2 = _layernorm_rows(h2, params["g13"], params["b13"])
        q = s1 @ params["wq"] + params["bq"]
        k = s2 @ params["wk"] + params["bk"]
        v = s2 @ params["wv"] + params["bv"]
        c = q.shape[-1]
        hd = c // nhead
        outs = []
        for h in range(nhead):
            sl = slice(h * hd, (h + 1) * hd)
            sc = (q[:, sl] @ k[:, sl].T) / math.sqrt(hd)
            p = jax.nn.softmax(sc, axis=-1)
            outs.append(p @ v[:, sl])
        attn = jnp.concatenate(outs, axis=-1) @ params["wo"] + params["bo"]
        y = _layernorm_rows(s1 + attn, params["g12"], params["b12"])
        ffn = jax.nn.gelu(y @ params["w11"] + params["b11"], approximate=False)
        ffn = ffn @ params["w12"] + params["b12f"]
        return (y + ffn).T  # (c, n1)

    return jax.vmap(one_batch)(src1, src2)


def init_params(key, d_model, d_model_out, nhead, dim_feedforward):
    assert d_model_out % nhead == 0
    c = d_model_out
    ks = jax.random.split(key, 12)

    def w(k, shape, scale):
        return (jax.random.normal(k, shape, jnp.float32) * scale).astype(jnp.float32)

    params = {
        # input_proj: Conv1d(k=1) weight stored transposed as (c_in, c_out)
        "wp": w(ks[0], (d_model, c), 1.0 / math.sqrt(d_model)),
        "bp": w(ks[1], (1, c), 0.02),
        # norm13
        "g13": jnp.ones((1, c), jnp.float32) + w(ks[2], (1, c), 0.05),
        "b13": w(ks[3], (1, c), 0.02),
        # MHA in_proj (q/k/v stored transposed as (c, c))
        "wq": w(ks[4], (c, c), 1.0 / math.sqrt(c)),
        "bq": w(ks[5], (1, c), 0.02),
        "wk": w(ks[6], (c, c), 1.0 / math.sqrt(c)),
        "bk": w(ks[7], (1, c), 0.02),
        "wv": w(ks[8], (c, c), 1.0 / math.sqrt(c)),
        "bv": w(ks[9], (1, c), 0.02),
        # MHA out_proj
        "wo": w(ks[10], (c, c), 1.0 / math.sqrt(c)),
        "bo": w(ks[11], (1, c), 0.02),
    }
    ks2 = jax.random.split(jax.random.fold_in(key, 7), 6)
    params.update({
        # norm12
        "g12": jnp.ones((1, c), jnp.float32) + w(ks2[0], (1, c), 0.05),
        "b12": w(ks2[1], (1, c), 0.02),
        # linear11 / linear12 (stored transposed: (in, out))
        "w11": w(ks2[2], (c, dim_feedforward), 1.0 / math.sqrt(c)),
        "b11": w(ks2[3], (1, dim_feedforward), 0.02),
        "w12": w(ks2[4], (dim_feedforward, c), 1.0 / math.sqrt(dim_feedforward)),
        "b12f": w(ks2[5], (1, c), 0.02),
    })
    return params


if __name__ == "__main__":
    # small, lane-dense demo sizes (channels multiples of 128, 2 q tiles/batch)
    d_model, d_model_out, nhead, dim_feedforward = 128, 128, 4, 256
    batch, n1, n2 = 2, 512, 256

    key = jax.random.PRNGKey(0)
    k_p, k_s1, k_s2 = jax.random.split(key, 3)
    params = init_params(k_p, d_model, d_model_out, nhead, dim_feedforward)
    src1 = jax.random.normal(k_s1, (batch, d_model, n1), jnp.float32)
    src2 = jax.random.normal(k_s2, (batch, d_model, n2), jnp.float32)

    out = jax.block_until_ready(
        cross_transformer_forward(src1, src2, params, nhead=nhead))
    assert out.shape == (batch, d_model_out, n1)

    ref = jax.block_until_ready(reference_forward(src1, src2, params, nhead=nhead))
    # Error budget: bf16 matmul operands (f32 accumulation) across ~7 chained
    # matmuls -> worst-element error ~2% of the output dynamic range, <<1% mean.
    rng = float(jnp.max(jnp.abs(ref)))
    max_err = float(jnp.max(jnp.abs(out - ref)))
    mean_err = float(jnp.mean(jnp.abs(out - ref)))
    assert max_err <= 2.5e-2 * rng, (max_err, rng)
    assert mean_err <= 5e-3 * rng, (mean_err, rng)

    print("KERNEL_OK")
</pallas_src>

<mosaic_0001>
module attributes {stable_mosaic.version = 11 : i64} {
  func.func @kv_proj_kernel(%arg0: i32, %arg1: i32, %arg2: memref<1x128x256xbf16, #tpu.memory_space<vmem>>, %arg3: memref<128x128xbf16, #tpu.memory_space<vmem>>, %arg4: memref<256x128xbf16, #tpu.memory_space<vmem>>, %arg5: memref<128x8xf32, #tpu.memory_space<vmem>>, %arg6: memref<256x1xf32, #tpu.memory_space<vmem>>, %arg7: memref<1x256x256xbf16, #tpu.memory_space<vmem>>) attributes {dimension_semantics = [#tpu.dimension_semantics<parallel>, #tpu.dimension_semantics<parallel>], iteration_bounds = array<i64: 2, 1>, scalar_prefetch = 0 : i64, scratch_operands = 0 : i64, tpu.core_type = #tpu.core_type<tc>, window_params = [{transform_indices = @transform_0, window_bounds = array<i64: 1, 128, 256>}, {pipeline_mode = #tpu.pipeline_mode<synchronous>, transform_indices = @transform_1, window_bounds = array<i64: 128, 128>}, {pipeline_mode = #tpu.pipeline_mode<synchronous>, transform_indices = @transform_2, window_bounds = array<i64: 256, 128>}, {pipeline_mode = #tpu.pipeline_mode<synchronous>, transform_indices = @transform_3, window_bounds = array<i64: 128, 8>}, {pipeline_mode = #tpu.pipeline_mode<synchronous>, transform_indices = @transform_4, window_bounds = array<i64: 256, 1>}, {transform_indices = @transform_5, window_bounds = array<i64: 1, 256, 256>}]} {
    %c0 = arith.constant 0 : index
    %c0_0 = arith.constant 0 : index
    %0 = vector.load %arg5[%c0, %c0_0] : memref<128x8xf32, #tpu.memory_space<vmem>>, vector<128x8xf32>
    %1 = vector.extract_strided_slice %0 {offsets = [0, 0], sizes = [128, 1], strides = [1, 1]} : vector<128x8xf32> to vector<128x1xf32>
    %2 = vector.extract_strided_slice %0 {offsets = [0, 1], sizes = [128, 1], strides = [1, 1]} : vector<128x8xf32> to vector<128x1xf32>
    %3 = vector.extract_strided_slice %0 {offsets = [0, 2], sizes = [128, 1], strides = [1, 1]} : vector<128x8xf32> to vector<128x1xf32>
    %c0_1 = arith.constant 0 : index
    %c0_2 = arith.constant 0 : index
    %c0_3 = arith.constant 0 : index
    %4 = vector.load %arg2[%c0_1, %c0_2, %c0_3] : memref<1x128x256xbf16, #tpu.memory_space<vmem>>, vector<1x128x256xbf16>
    %5 = vector.shape_cast %4 : vector<1x128x256xbf16> to vector<128x256xbf16>
    %c0_4 = arith.constant 0 : index
    %c0_5 = arith.constant 0 : index
    %6 = vector.load %arg3[%c0_4, %c0_5] : memref<128x128xbf16, #tpu.memory_space<vmem>>, vector<128x128xbf16>
    %cst = arith.constant dense<0.000000e+00> : vector<128x256xf32>
    %7 = tpu.matmul %6, %5, %cst {dimension_numbers = #tpu.dot_dimension_numbers<[1], [0], [0], [1], [0, 0, 1, 1], [], []>} : vector<128x128xbf16>, vector<128x256xbf16>, vector<128x256xf32> -> vector<128x256xf32>
    %8 = vector.broadcast %1 : vector<128x1xf32> to vector<128x256xf32>
    %9 = arith.addf %7, %8 : vector<128x256xf32>
    %cst_6 = arith.constant dense<0.000000e+00> : vector<256xf32>
    %10 = vector.multi_reduction <add>, %9, %cst_6 [0] : vector<128x256xf32> to vector<256xf32>
    %11 = vector.shape_cast %10 : vector<256xf32> to vector<1x256xf32>
    %cst_7 = arith.constant 1.280000e+02 : f32
    %12 = vector.broadcast %cst_7 : f32 to vector<1x256xf32>
    %13 = arith.divf %11, %12 : vector<1x256xf32>
    %14 = vector.broadcast %13 : vector<1x256xf32> to vector<128x256xf32>
    %15 = arith.subf %9, %14 : vector<128x256xf32>
    %16 = arith.mulf %15, %15 : vector<128x256xf32>
    %cst_8 = arith.constant dense<0.000000e+00> : vector<256xf32>
    %17 = vector.multi_reduction <add>, %16, %cst_8 [0] : vector<128x256xf32> to vector<256xf32>
    %18 = vector.shape_cast %17 : vector<256xf32> to vector<1x256xf32>
    %cst_9 = arith.constant 1.280000e+02 : f32
    %19 = vector.broadcast %cst_9 : f32 to vector<1x256xf32>
    %20 = arith.divf %18, %19 : vector<1x256xf32>
    %cst_10 = arith.constant 9.99999974E-6 : f32
    %21 = vector.broadcast %cst_10 : f32 to vector<1x256xf32>
    %22 = arith.addf %20, %21 : vector<1x256xf32>
    %23 = math.rsqrt %22 : vector<1x256xf32>
    %24 = vector.broadcast %23 : vector<1x256xf32> to vector<128x256xf32>
    %25 = arith.mulf %15, %24 : vector<128x256xf32>
    %26 = vector.broadcast %2 : vector<128x1xf32> to vector<128x256xf32>
    %27 = arith.mulf %25, %26 : vector<128x256xf32>
    %28 = vector.broadcast %3 : vector<128x1xf32> to vector<128x256xf32>
    %29 = arith.addf %27, %28 : vector<128x256xf32>
    %c0_11 = arith.constant 0 : index
    %c0_12 = arith.constant 0 : index
    %30 = vector.load %arg4[%c0_11, %c0_12] : memref<256x128xbf16, #tpu.memory_space<vmem>>, vector<256x128xbf16>
    %31 = arith.truncf %29 : vector<128x256xf32> to vector<128x256xbf16>
    %cst_13 = arith.constant dense<0.000000e+00> : vector<256x256xf32>
    %32 = tpu.matmul %30, %31, %cst_13 {dimension_numbers = #tpu.dot_dimension_numbers<[1], [0], [0], [1], [0, 0, 1, 1], [], []>} : vector<256x128xbf16>, vector<128x256xbf16>, vector<256x256xf32> -> vector<256x256xf32>
    %c0_14 = arith.constant 0 : index
    %c0_15 = arith.constant 0 : index
    %33 = vector.load %arg6[%c0_14, %c0_15] : memref<256x1xf32, #tpu.memory_space<vmem>>, vector<256x1xf32>
    %34 = vector.broadcast %33 : vector<256x1xf32> to vector<256x256xf32>
    %35 = arith.addf %32, %34 : vector<256x256xf32>
    %36 = arith.truncf %35 : vector<256x256xf32> to vector<256x256xbf16>
    %c0_16 = arith.constant 0 : index
    %c0_17 = arith.constant 0 : index
    %c0_18 = arith.constant 0 : index
    %37 = vector.load %arg7[%c0_16, %c0_17, %c0_18] : memref<1x256x256xbf16, #tpu.memory_space<vmem>>, vector<1x256x256xbf16>
    %38 = vector.shape_cast %37 : vector<1x256x256xbf16> to vector<256x256xbf16>
    %39 = vector.shape_cast %36 : vector<256x256xbf16> to vector<1x256x256xbf16>
    tpu.vector_store %arg7[%c0_16, %c0_17, %c0_18], %39 {strides = array<i32>} : memref<1x256x256xbf16, #tpu.memory_space<vmem>>, vector<1x256x256xbf16>,
    return
  }
  func.func @transform_0(%arg0: i32, %arg1: i32) -> (i32, i32, i32) {
    %c0_i32 = arith.constant 0 : i32
    %c0_i32_0 = arith.constant 0 : i32
    return %arg0, %c0_i32, %arg1 : i32, i32, i32
  }
  func.func @transform_1(%arg0: i32, %arg1: i32) -> (i32, i32) {
    %c0_i32 = arith.constant 0 : i32
    %c0_i32_0 = arith.constant 0 : i32
    %c0_i32_1 = arith.constant 0 : i32
    return %c0_i32, %c0_i32_0 : i32, i32
  }
  func.func @transform_2(%arg0: i32, %arg1: i32) -> (i32, i32) {
    %c0_i32 = arith.constant 0 : i32
    %c0_i32_0 = arith.constant 0 : i32
    %c0_i32_1 = arith.constant 0 : i32
    return %c0_i32, %c0_i32_0 : i32, i32
  }
  func.func @transform_3(%arg0: i32, %arg1: i32) -> (i32, i32) {
    %c0_i32 = arith.constant 0 : i32
    %c0_i32_0 = arith.constant 0 : i32
    %c0_i32_1 = arith.constant 0 : i32
    return %c0_i32, %c0_i32_0 : i32, i32
  }
  func.func @transform_4(%arg0: i32, %arg1: i32) -> (i32, i32) {
    %c0_i32 = arith.constant 0 : i32
    %c0_i32_0 = arith.constant 0 : i32
    %c0_i32_1 = arith.constant 0 : i32
    return %c0_i32, %c0_i32_0 : i32, i32
  }
  func.func @transform_5(%arg0: i32, %arg1: i32) -> (i32, i32, i32) {
    %c0_i32 = arith.constant 0 : i32
    %c0_i32_0 = arith.constant 0 : i32
    return %arg0, %c0_i32, %arg1 : i32, i32, i32
  }
}

module attributes {stable_mosaic.version = 11 : i64} {
  func.func @kv_proj_kernel(%arg0: i32, %arg1: i32, %arg2: memref<1x128x256xbf16, #tpu.memory_space<vmem>>, %arg3: memref<128x128xbf16, #tpu.memory_space<vmem>>, %arg4: memref<256x128xbf16, #tpu.memory_space<vmem>>, %arg5: memref<128x8xf32, #tpu.memory_space<vmem>>, %arg6: memref<256x1xf32, #tpu.memory_space<vmem>>, %arg7: memref<1x256x256xbf16, #tpu.memory_space<vmem>>) attributes {dimension_semantics = [#tpu.dimension_semantics<parallel>, #tpu.dimension_semantics<parallel>], iteration_bounds = array<i64: 2, 1>, scalar_prefetch = 0 : i64, scratch_operands = 0 : i64, tpu.core_type = #tpu.core_type<tc>, window_params = [{transform_indices = @transform_0, window_bounds = array<i64: 1, 128, 256>}, {pipeline_mode = #tpu.pipeline_mode<synchronous>, transform_indices = @transform_1, window_bounds = array<i64: 128, 128>}, {pipeline_mode = #tpu.pipeline_mode<synchronous>, transform_indices = @transform_2, window_bounds = array<i64: 256, 128>}, {pipeline_mode = #tpu.pipeline_mode<synchronous>, transform_indices = @transform_3, window_bounds = array<i64: 128, 8>}, {pipeline_mode = #tpu.pipeline_mode<synchronous>, transform_indices = @transform_4, window_bounds = array<i64: 256, 1>}, {transform_indices = @transform_5, window_bounds = array<i64: 1, 256, 256>}]} {
    %c0 = arith.constant 0 : index
    %c0_0 = arith.constant 0 : index
    %0 = vector.load %arg5[%c0, %c0_0] : memref<128x8xf32, #tpu.memory_space<vmem>>, vector<128x8xf32>
    %1 = vector.extract_strided_slice %0 {offsets = [0, 0], sizes = [128, 1], strides = [1, 1]} : vector<128x8xf32> to vector<128x1xf32>
    %2 = vector.extract_strided_slice %0 {offsets = [0, 1], sizes = [128, 1], strides = [1, 1]} : vector<128x8xf32> to vector<128x1xf32>
    %3 = vector.extract_strided_slice %0 {offsets = [0, 2], sizes = [128, 1], strides = [1, 1]} : vector<128x8xf32> to vector<128x1xf32>
    %c0_1 = arith.constant 0 : index
    %c0_2 = arith.constant 0 : index
    %c0_3 = arith.constant 0 : index
    %4 = vector.load %arg2[%c0_1, %c0_2, %c0_3] : memref<1x128x256xbf16, #tpu.memory_space<vmem>>, vector<1x128x256xbf16>
    %5 = vector.shape_cast %4 : vector<1x128x256xbf16> to vector<128x256xbf16>
    %c0_4 = arith.constant 0 : index
    %c0_5 = arith.constant 0 : index
    %6 = vector.load %arg3[%c0_4, %c0_5] : memref<128x128xbf16, #tpu.memory_space<vmem>>, vector<128x128xbf16>
    %cst = arith.constant dense<0.000000e+00> : vector<128x256xf32>
    %7 = tpu.matmul %6, %5, %cst {dimension_numbers = #tpu.dot_dimension_numbers<[1], [0], [0], [1], [0, 0, 1, 1], [], []>} : vector<128x128xbf16>, vector<128x256xbf16>, vector<128x256xf32> -> vector<128x256xf32>
    %8 = vector.broadcast %1 : vector<128x1xf32> to vector<128x256xf32>
    %9 = arith.addf %7, %8 : vector<128x256xf32>
    %cst_6 = arith.constant dense<0.000000e+00> : vector<256xf32>
    %10 = vector.multi_reduction <add>, %9, %cst_6 [0] : vector<128x256xf32> to vector<256xf32>
    %11 = vector.shape_cast %10 : vector<256xf32> to vector<1x256xf32>
    %cst_7 = arith.constant 1.280000e+02 : f32
    %12 = vector.broadcast %cst_7 : f32 to vector<1x256xf32>
    %13 = arith.divf %11, %12 : vector<1x256xf32>
    %14 = vector.broadcast %13 : vector<1x256xf32> to vector<128x256xf32>
    %15 = arith.subf %9, %14 : vector<128x256xf32>
    %16 = arith.mulf %15, %15 : vector<128x256xf32>
    %cst_8 = arith.constant dense<0.000000e+00> : vector<256xf32>
    %17 = vector.multi_reduction <add>, %16, %cst_8 [0] : vector<128x256xf32> to vector<256xf32>
    %18 = vector.shape_cast %17 : vector<256xf32> to vector<1x256xf32>
    %cst_9 = arith.constant 1.280000e+02 : f32
    %19 = vector.broadcast %cst_9 : f32 to vector<1x256xf32>
    %20 = arith.divf %18, %19 : vector<1x256xf32>
    %cst_10 = arith.constant 9.99999974E-6 : f32
    %21 = vector.broadcast %cst_10 : f32 to vector<1x256xf32>
    %22 = arith.addf %20, %21 : vector<1x256xf32>
    %23 = math.rsqrt %22 : vector<1x256xf32>
    %24 = vector.broadcast %23 : vector<1x256xf32> to vector<128x256xf32>
    %25 = arith.mulf %15, %24 : vector<128x256xf32>
    %26 = vector.broadcast %2 : vector<128x1xf32> to vector<128x256xf32>
    %27 = arith.mulf %25, %26 : vector<128x256xf32>
    %28 = vector.broadcast %3 : vector<128x1xf32> to vector<128x256xf32>
    %29 = arith.addf %27, %28 : vector<128x256xf32>
    %c0_11 = arith.constant 0 : index
    %c0_12 = arith.constant 0 : index
    %30 = vector.load %arg4[%c0_11, %c0_12] : memref<256x128xbf16, #tpu.memory_space<vmem>>, vector<256x128xbf16>
    %31 = arith.truncf %29 : vector<128x256xf32> to vector<128x256xbf16>
    %cst_13 = arith.constant dense<0.000000e+00> : vector<256x256xf32>
    %32 = tpu.matmul %30, %31, %cst_13 {dimension_numbers = #tpu.dot_dimension_numbers<[1], [0], [0], [1], [0, 0, 1, 1], [], []>} : vector<256x128xbf16>, vector<128x256xbf16>, vector<256x256xf32> -> vector<256x256xf32>
    %c0_14 = arith.constant 0 : index
    %c0_15 = arith.constant 0 : index
    %33 = vector.load %arg6[%c0_14, %c0_15] : memref<256x1xf32, #tpu.memory_space<vmem>>, vector<256x1xf32>
    %34 = vector.broadcast %33 : vector<256x1xf32> to vector<256x256xf32>
    %35 = arith.addf %32, %34 : vector<256x256xf32>
    %36 = arith.truncf %35 : vector<256x256xf32> to vector<256x256xbf16>
    %c0_16 = arith.constant 0 : index
    %c0_17 = arith.constant 0 : index
    %c0_18 = arith.constant 0 : index
    %37 = vector.load %arg7[%c0_16, %c0_17, %c0_18] : memref<1x256x256xbf16, #tpu.memory_space<vmem>>, vector<1x256x256xbf16>
    %38 = vector.shape_cast %37 : vector<1x256x256xbf16> to vector<256x256xbf16>
    %39 = vector.shape_cast %36 : vector<256x256xbf16> to vector<1x256x256xbf16>
    tpu.vector_store %arg7[%c0_16, %c0_17, %c0_18], %39 {strides = array<i32>} : memref<1x256x256xbf16, #tpu.memory_space<vmem>>, vector<1x256x256xbf16>,
    return
  }
  func.func @transform_0(%arg0: i32, %arg1: i32) -> (i32, i32, i32) {
    %c0_i32 = arith.constant 0 : i32
    %c0_i32_0 = arith.constant 0 : i32
    return %arg0, %c0_i32, %arg1 : i32, i32, i32
  }
  func.func @transform_1(%arg0: i32, %arg1: i32) -> (i32, i32) {
    %c0_i32 = arith.constant 0 : i32
    %c0_i32_0 = arith.constant 0 : i32
    %c0_i32_1 = arith.constant 0 : i32
    return %c0_i32, %c0_i32_0 : i32, i32
  }
  func.func @transform_2(%arg0: i32, %arg1: i32) -> (i32, i32) {
    %c0_i32 = arith.constant 0 : i32
    %c0_i32_0 = arith.constant 0 : i32
    %c0_i32_1 = arith.constant 0 : i32
    return %c0_i32, %c0_i32_0 : i32, i32
  }
  func.func @transform_3(%arg0: i32, %arg1: i32) -> (i32, i32) {
    %c0_i32 = arith.constant 0 : i32
    %c0_i32_0 = arith.constant 0 : i32
    %c0_i32_1 = arith.constant 0 : i32
    return %c0_i32, %c0_i32_0 : i32, i32
  }
  func.func @transform_4(%arg0: i32, %arg1: i32) -> (i32, i32) {
    %c0_i32 = arith.constant 0 : i32
    %c0_i32_0 = arith.constant 0 : i32
    %c0_i32_1 = arith.constant 0 : i32
    return %c0_i32, %c0_i32_0 : i32, i32
  }
  func.func @transform_5(%arg0: i32, %arg1: i32) -> (i32, i32, i32) {
    %c0_i32 = arith.constant 0 : i32
    %c0_i32_0 = arith.constant 0 : i32
    return %arg0, %c0_i32, %arg1 : i32, i32, i32
  }
}

</mosaic_0001>

<llo_original>
// kernel: tpu_custom_call.1
$region0: #{tpu_custom_call.1}
  #allocation0 [shape = 'u32[]', space=smem, size = 0x4, offset = 0x4, fixed_abs, tag = 'smem constant byte address 0x4 - core index']
  #allocation1 [shape = 'u32[144,128]{1,0:T(1,128)}', space=vmem, size = 0x12000, scoped, tag = 'internal scratch']
  %s0 = inlined_call_operand.vmem [shape: bf16[2,128,256], index: 0, kind: input, shape index: {}]
  %s1 = inlined_call_operand.hbm [shape: bf16[128,128], index: 1, kind: input, shape index: {}]
  %s2 = inlined_call_operand.vmem [shape: bf16[256,128], index: 2, kind: input, shape index: {}]
  %s3 = inlined_call_operand.vmem [shape: f32[128,8], index: 3, kind: input, shape index: {}]
  %s4 = inlined_call_operand.vmem [shape: f32[256,1], index: 4, kind: input, shape index: {}]
  %s5 = inlined_call_operand.hbm [shape: bf16[2,256,256], index: 5, kind: output, shape index: {}]
  %s6 = sld [smem:[#allocation0]]
  $region57: #{tpu_custom_call.1} parent=0
    _
  %s8 = ssub.s32 1, %s6
  %s9 = scalar_select 0, %s8, %s6
  $region1: #{tpu_custom_call.1} parent=0
    #allocation2 [shape = 'u8[32768]{0}', space=vmem, size = 0x8000, scoped, tag = 'input window, operand 1, single buffered']
    #allocation3 [shape = 's32[2]{0}', space=sflag, size = 0x8, scoped, tag = 'scoped memory for tpu_custom_call.1']
    #allocation4 [shape = 's32[2]{0}', space=sflag, size = 0x8, scoped, tag = 'scoped memory for tpu_custom_call.1']
    #allocation5 [shape = 'u8[262144]{0}', space=vmem, size = 0x40000, scoped, tag = 'output window, operand 0']
    %10 = vsyncpa [#allocation3], 0
    %11 = vsyncpa [#allocation4], 0
    %s12 = scalar_lea.sflag [#allocation4], 1
    %13 = vsyncpa %s12, 0
    loop: start=0, step=1, limit=4
    $region2: #{tpu_custom_call.1} parent=1 // loop_pre_header
      _
    $region3: #{tpu_custom_call.1} parent=1 // loop_header
      %s15 = sphi 0, %s19
      %p16 = scmp.ge.s32.totalorder %s15, 4
      %s22 = sphi 0, %s34
      %s23 = sphi 0, %s30
      %s24 = sphi 0, %s22
      %s25 = sphi 0, %s23
      %s26 = sphi 0, %s24
      %s27 = sphi 0, %s25
      %s39 = sphi 0, %s41
      %s42 = sphi 0, %s39
      %s43 = sphi 0, %s42
      %s59 = sphi 0, %s43
      %s63 = sphi 0, %s63
      %s65 = sphi 0, %s63
      %s66 = sphi 0, %s65
      %s80 = sphi 0, %s66
      %s84 = sphi 0, %s84
      %s86 = sphi 0, %s84
      %s87 = sphi 0, %s86
      %s101 = sphi 0, %s87
      %s105 = sphi 0, %s105
      %s107 = sphi 0, %s105
      %s108 = sphi 0, %s107
      %s122 = sphi 0, %s108
      %s126 = sphi 0, %s126
      %s128 = sphi 0, %s126
      %s129 = sphi 0, %s128
      %s143 = sphi 0, %s129
      %s151 = sphi 0, %s153
      %s154 = sphi 0, %s151
      %s155 = sphi 0, %s154
      %s171 = sphi 0, %s155
    $region4: #{tpu_custom_call.1} parent=1 // loop_header_branch
      %18 = sbr.rel (%p16) target = $region8
    $region5: #{tpu_custom_call.1} parent=1 // loop_body
      %s20 = ssub.s32 %s15, 1
      %s21 = ssub.s32 %s15, 2
      %s28 = sadd.s32 1, %s23
      %p29 = scmp.ge.s32.totalorder %s28, 1
      %s30 = scalar_select %p29, 0, %s28
      %s31 = sadd.s32 1, %s22
      %s32 = scalar_select %p29, %s31, %s22
      %p33 = scmp.ge.s32.totalorder %s32, 2
      %s34 = scalar_select %p33, 0, %s32
      %s35 = ssub.s32 %s22, %s34
      %s36 = ssub.s32 %s23, %s30
      %s37 = sor.u32 %s35, %s36
      %p38 = scmp.eq.s32.totalorder %s37, 0
      %s40 = sadd.s32 %s39, 1
      %s41 = scalar_select %p38, %s39, %s40
      %p44 = pneg %p38
      %p45 = scmp.eq.s32.totalorder %s15, 1
      %p46 = por %p44, %p45
      %p47 = scmp.ne.s32.totalorder %s39, %s42
      %p48 = scmp.eq.s32.totalorder %s15, 0
      %p49 = por %p47, %p48
      %p50 = scmp.ne.s32.totalorder %s39, %s42
      %p51 = scmp.eq.s32.totalorder %s20, 1
      %p52 = por %p50, %p51
      %p53 = scmp.ne.s32.totalorder %s42, %s43
      %p54 = scmp.eq.s32.totalorder %s20, 0
      %p55 = por %p53, %p54
      %p56 = scmp.ne.s32.totalorder %s42, %s43
      %p57 = scmp.eq.s32.totalorder %s21, 1
      %p58 = por %p56, %p57
      %p60 = scmp.ne.s32.totalorder %s43, %s59
      %p61 = scmp.eq.s32.totalorder %s21, 0
      %p62 = por %p60, %p61
      %s64 = sadd.s32 %s63, 1
      %p67 = scmp.eq.s32.totalorder %s15, 1
      %p68 = scmp.ne.s32.totalorder %s63, %s65
      %p69 = scmp.eq.s32.totalorder %s15, 0
      %p70 = por %p68, %p69
      %p71 = scmp.ne.s32.totalorder %s63, %s65
      %p72 = scmp.eq.s32.totalorder %s20, 1
      %p73 = por %p71, %p72
      %p74 = scmp.ne.s32.totalorder %s65, %s66
      %p75 = scmp.eq.s32.totalorder %s20, 0
      %p76 = por %p74, %p75
      %p77 = scmp.ne.s32.totalorder %s65, %s66
      %p78 = scmp.eq.s32.totalorder %s21, 1
      %p79 = por %p77, %p78
      %p81 = scmp.ne.s32.totalorder %s66, %s80
      %p82 = scmp.eq.s32.totalorder %s21, 0
      %p83 = por %p81, %p82
      %s85 = sadd.s32 %s84, 1
      %p88 = scmp.eq.s32.totalorder %s15, 1
      %p89 = scmp.ne.s32.totalorder %s84, %s86
      %p90 = scmp.eq.s32.totalorder %s15, 0
      %p91 = por %p89, %p90
      %p92 = scmp.ne.s32.totalorder %s84, %s86
      %p93 = scmp.eq.s32.totalorder %s20, 1
      %p94 = por %p92, %p93
      %p95 = scmp.ne.s32.totalorder %s86, %s87
      %p96 = scmp.eq.s32.totalorder %s20, 0
      %p97 = por %p95, %p96
      %p98 = scmp.ne.s32.totalorder %s86, %s87
      %p99 = scmp.eq.s32.totalorder %s21, 1
      %p100 = por %p98, %p99
      %p102 = scmp.ne.s32.totalorder %s87, %s101
      %p103 = scmp.eq.s32.totalorder %s21, 0
      %p104 = por %p102, %p103
      %s106 = sadd.s32 %s105, 1
      %p109 = scmp.eq.s32.totalorder %s15, 1
      %p110 = scmp.ne.s32.totalorder %s105, %s107
      %p111 = scmp.eq.s32.totalorder %s15, 0
      %p112 = por %p110, %p111
      %p113 = scmp.ne.s32.totalorder %s105, %s107
      %p114 = scmp.eq.s32.totalorder %s20, 1
      %p115 = por %p113, %p114
      %p116 = scmp.ne.s32.totalorder %s107, %s108
      %p117 = scmp.eq.s32.totalorder %s20, 0
      %p118 = por %p116, %p117
      %p119 = scmp.ne.s32.totalorder %s107, %s108
      %p120 = scmp.eq.s32.totalorder %s21, 1
      %p121 = por %p119, %p120
      %p123 = scmp.ne.s32.totalorder %s108, %s122
      %p124 = scmp.eq.s32.totalorder %s21, 0
      %p125 = por %p123, %p124
      %s127 = sadd.s32 %s126, 1
      %p130 = scmp.eq.s32.totalorder %s15, 1
      %p131 = scmp.ne.s32.totalorder %s126, %s128
      %p132 = scmp.eq.s32.totalorder %s15, 0
      %p133 = por %p131, %p132
      %p134 = scmp.ne.s32.totalorder %s126, %s128
      %p135 = scmp.eq.s32.totalorder %s20, 1
      %p136 = por %p134, %p135
      %p137 = scmp.ne.s32.totalorder %s128, %s129
      %p138 = scmp.eq.s32.totalorder %s20, 0
      %p139 = por %p137, %p138
      %p140 = scmp.ne.s32.totalorder %s128, %s129
      %p141 = scmp.eq.s32.totalorder %s21, 1
      %p142 = por %p140, %p141
      %p144 = scmp.ne.s32.totalorder %s129, %s143
      %p145 = scmp.eq.s32.totalorder %s21, 0
      %p146 = por %p144, %p145
      %s147 = ssub.s32 %s22, %s34
      %s148 = ssub.s32 %s23, %s30
      %s149 = sor.u32 %s147, %s148
      %p150 = scmp.eq.s32.totalorder %s149, 0
      %s152 = sadd.s32 %s151, 1
      %s153 = scalar_select %p150, %s151, %s152
      %p156 = pneg %p150
      %p157 = scmp.eq.s32.totalorder %s15, 1
      %p158 = por %p156, %p157
      %p159 = scmp.ne.s32.totalorder %s151, %s154
      %p160 = scmp.eq.s32.totalorder %s15, 0
      %p161 = por %p159, %p160
      %p162 = scmp.ne.s32.totalorder %s151, %s154
      %p163 = scmp.eq.s32.totalorder %s20, 1
      %p164 = por %p162, %p163
      %p165 = scmp.ne.s32.totalorder %s154, %s155
      %p166 = scmp.eq.s32.totalorder %s20, 0
      %p167 = por %p165, %p166
      %p168 = scmp.ne.s32.totalorder %s154, %s155
      %p169 = scmp.eq.s32.totalorder %s21, 1
      %p170 = por %p168, %p169
      %p172 = scmp.ne.s32.totalorder %s155, %s171
      %p173 = scmp.eq.s32.totalorder %s21, 0
      %p174 = por %p172, %p173
      %p175 = scmp.le.s32.totalorder 1, %s15
      %p176 = scmp.lt.s32.totalorder %s15, 3
      %p177 = pnand %p175, %p176
      %p178 = pneg %p177
      // Predicated region
      $region9: #{tpu_custom_call.1} parent=5 // pred_check
        _
      $region10: #{tpu_custom_call.1} parent=5 // pred_check_branch
        %180 = sbr.rel (%p177) target = $region12
      $region11: #{tpu_custom_call.1} parent=5 // pred_region
        %s181 = ssub.s32 %s15, 1
        // Predicated region
        $region13: #{tpu_custom_call.1} parent=11 // pred_check
          %p182 = pneg %p76
        $region14: #{tpu_custom_call.1} parent=11 // pred_check_branch
          %184 = sbr.rel (%p182) target = $region16
        $region15: #{tpu_custom_call.1} parent=11 // pred_region
          %s186 = ssub.s32 1024, 1024
          %187 = vsyncadd [#allocation3], %s186
          %s188 = sshll.u32 [#allocation2], 4
          %s189 = int_to_ptr.vmem [resolvable:$true] %s188
          %194 = dma.hbm_to_vmem [thread:$0]  %s1, 1024, %s189, [#allocation3], 64, 64, 4
        $region16: #{tpu_custom_call.1} parent=11 // pred_fallthru
          _
        // Predicated region
        $region17: #{tpu_custom_call.1} parent=11 // pred_check
          %p195 = pneg %p97
        $region18: #{tpu_custom_call.1} parent=11 // pred_check_branch
          %197 = sbr.rel (%p195) target = $region20
        $region19: #{tpu_custom_call.1} parent=11 // pred_region
          _
        $region20: #{tpu_custom_call.1} parent=11 // pred_fallthru
          _
        // Predicated region
        $region21: #{tpu_custom_call.1} parent=11 // pred_check
          %p198 = pneg %p118
        $region22: #{tpu_custom_call.1} parent=11 // pred_check_branch
          %200 = sbr.rel (%p198) target = $region24
        $region23: #{tpu_custom_call.1} parent=11 // pred_region
          _
        $region24: #{tpu_custom_call.1} parent=11 // pred_fallthru
          _
        // Predicated region
        $region25: #{tpu_custom_call.1} parent=11 // pred_check
          %p201 = pneg %p139
        $region26: #{tpu_custom_call.1} parent=11 // pred_check_branch
          %203 = sbr.rel (%p201) target = $region28
        $region27: #{tpu_custom_call.1} parent=11 // pred_region
          _
        $region28: #{tpu_custom_call.1} parent=11 // pred_fallthru
          _
      $region12: #{tpu_custom_call.1} parent=5 // pred_fallthru
        _
      %p204 = scmp.lt.s32.totalorder %s15, 2
      // Predicated region
      $region29: #{tpu_custom_call.1} parent=5 // pred_check
        %p205 = pneg %p204
      $region30: #{tpu_custom_call.1} parent=5 // pred_check_branch
        %207 = sbr.rel (%p205) target = $region32
      $region31: #{tpu_custom_call.1} parent=5 // pred_region
        // Predicated region
        $region33: #{tpu_custom_call.1} parent=31 // pred_check
          %p208 = pneg %p49
        $region34: #{tpu_custom_call.1} parent=31 // pred_check_branch
          %210 = sbr.rel (%p208) target = $region36
        $region35: #{tpu_custom_call.1} parent=31 // pred_region
          %s211 = smul.u32 2, %s23
          %p212 = scmp.lt.s32.totalorder %s22, 1
          %s213 = scalar_select %p212, %s22, 1
          %p214 = scmp.lt.s32.totalorder %s211, 1
          %s215 = scalar_select %p214, %s211, 1
          %s216 = smul.addr %s213, 32
          %s217 = sadd.s32 %s215, %s216
          %s218 = smul.addr %s217, 4
          %s219 = scalar_lea.vmem %s0, %s218
          %s220 = smul.u32 2, %s23
        $region36: #{tpu_custom_call.1} parent=31 // pred_fallthru
          _
      $region32: #{tpu_custom_call.1} parent=5 // pred_fallthru
        _
      %p221 = scmp.le.s32.totalorder 1, %s15
      %p222 = scmp.lt.s32.totalorder %s15, 3
      %p223 = pnand %p221, %p222
      %p224 = pneg %p223
      // Predicated region
      $region37: #{tpu_custom_call.1} parent=5 // pred_check
        _
      $region38: #{tpu_custom_call.1} parent=5 // pred_check_branch
        %226 = sbr.rel (%p223) target = $region40
      $region39: #{tpu_custom_call.1} parent=5 // pred_region
        %s227 = ssub.s32 %s15, 1
        // Predicated region
        $region41: #{tpu_custom_call.1} parent=39 // pred_check
          %p228 = pneg %p76
        $region42: #{tpu_custom_call.1} parent=39 // pred_check_branch
          %230 = sbr.rel (%p228) target = $region44
        $region43: #{tpu_custom_call.1} parent=39 // pred_region
          %231 = dma.done [#allocation3], 1024
        $region44: #{tpu_custom_call.1} parent=39 // pred_fallthru
          _
        %s232 = smul.u32 2, %s25
        %p233 = scmp.lt.s32.totalorder %s24, 1
        %s234 = scalar_select %p233, %s24, 1
        %p235 = scmp.lt.s32.totalorder %s232, 1
        %s236 = scalar_select %p235, %s232, 1
        %s237 = smul.addr %s234, 32
        %s238 = sadd.s32 %s236, %s237
        %s239 = smul.addr %s238, 4
        %s240 = scalar_lea.vmem %s0, %s239
        %p241 = pneg %p55
        %p242 = pneg %p52
        %p243 = pneg %p76
        %p244 = pneg %p73
        %p245 = pneg %p97
        %p246 = pneg %p94
        %p247 = pneg %p118
        %p248 = pneg %p115
        %p249 = pneg %p139
        %p250 = pneg %p136
        %p251 = pneg %p167
        %p252 = pneg %p164
        %s253 = sand.u32 %s154, 1
        %s254 = scalar_lea.sflag [#allocation4], %s253
        %s255 = sand.u32 %s154, 1
        %s256 = smul.addr %s255, 256
        %s257 = scalar_lea.vmem [#allocation5], %s256
        %s258 = smul.u32 2, %s25
        %p259 = scmp.lt.s32.totalorder %s24, 1
        %s260 = scalar_select %p259, %s24, 1
        %p261 = scmp.lt.s32.totalorder %s258, 1
        %s262 = scalar_select %p261, %s258, 1
        %s263 = smul.addr %s260, 32
        %s264 = sadd.s32 %s262, %s263
        %s265 = smul.addr %s264, 4
        %s266 = scalar_lea.vmem %s0, %s265
        %s267 = smul.u32 2, %s25
        %s268 = smul.u32 2, %s25
        %v270 = vld [vmem:[%s3] sm:$0xff]
        %v271 = vld [vmem:[%s3 + $0x8] sm:$0xff]
        %v272 = vld [vmem:[%s3 + $0x10] sm:$0xff]
        %v273 = vld [vmem:[%s3 + $0x18] sm:$0xff]
        %v274 = vld [vmem:[%s3 + $0x20] sm:$0xff]
        %v275 = vld [vmem:[%s3 + $0x28] sm:$0xff]
        %v276 = vld [vmem:[%s3 + $0x30] sm:$0xff]
        %v277 = vld [vmem:[%s3 + $0x38] sm:$0xff]
        %v278 = vld [vmem:[%s3 + $0x40] sm:$0xff]
        %v279 = vld [vmem:[%s3 + $0x48] sm:$0xff]
        %v280 = vld [vmem:[%s3 + $0x50] sm:$0xff]
        %v281 = vld [vmem:[%s3 + $0x58] sm:$0xff]
        %v282 = vld [vmem:[%s3 + $0x60] sm:$0xff]
        %v283 = vld [vmem:[%s3 + $0x68] sm:$0xff]
        %v284 = vld [vmem:[%s3 + $0x70] sm:$0xff]
        %v285 = vld [vmem:[%s3 + $0x78] sm:$0xff]
        %v286 = vld [vmem:[%s266] sm:$0xff]
        %v287 = vld [vmem:[%s266 + $0x8] sm:$0xff]
        %v288 = vld [vmem:[%s266 + $0x10] sm:$0xff]
        %v289 = vld [vmem:[%s266 + $0x18] sm:$0xff]
        %v290 = vld [vmem:[%s266 + $0x20] sm:$0xff]
        %v291 = vld [vmem:[%s266 + $0x28] sm:$0xff]
        %v292 = vld [vmem:[%s266 + $0x30] sm:$0xff]
        %v293 = vld [vmem:[%s266 + $0x38] sm:$0xff]
        %v294 = vld [vmem:[%s266 + $0x40] sm:$0xff]
        %v295 = vld [vmem:[%s266 + $0x48] sm:$0xff]
        %v296 = vld [vmem:[%s266 + $0x50] sm:$0xff]
        %v297 = vld [vmem:[%s266 + $0x58] sm:$0xff]
        %v298 = vld [vmem:[%s266 + $0x60] sm:$0xff]
        %v299 = vld [vmem:[%s266 + $0x68] sm:$0xff]
        %v300 = vld [vmem:[%s266 + $0x70] sm:$0xff]
        %v301 = vld [vmem:[%s266 + $0x78] sm:$0xff]
        %v302 = vld [vmem:[#allocation2] sm:$0xf]
        %v303 = vld [vmem:[#allocation2 + $0x4] sm:$0xf]
        %v304 = vld [vmem:[#allocation2 + $0x8] sm:$0xf]
        %v305 = vld [vmem:[#allocation2 + $0xc] sm:$0xf]
        %v306 = vld [vmem:[#allocation2 + $0x10] sm:$0xf]
        %v307 = vld [vmem:[#allocation2 + $0x14] sm:$0xf]
        %v308 = vld [vmem:[#allocation2 + $0x18] sm:$0xf]
        %v309 = vld [vmem:[#allocation2 + $0x1c] sm:$0xf]
        %v310 = vld [vmem:[#allocation2 + $0x20] sm:$0xf]
        %v311 = vld [vmem:[#allocation2 + $0x24] sm:$0xf]
        %v312 = vld [vmem:[#allocation2 + $0x28] sm:$0xf]
        %v313 = vld [vmem:[#allocation2 + $0x2c] sm:$0xf]
        %v314 = vld [vmem:[#allocation2 + $0x30] sm:$0xf]
        %v315 = vld [vmem:[#allocation2 + $0x34] sm:$0xf]
        %v316 = vld [vmem:[#allocation2 + $0x38] sm:$0xf]
        %v317 = vld [vmem:[#allocation2 + $0x3c] sm:$0xf]
        %319 = vset.pattern.permute.xlu0 0
        %320 = vperm.xlu0 %319, %v270
        %v321 = vpop.permute.xlu0 %320
        %324 = vset.pattern.permute.xlu0 0
        %325 = vperm.xlu0 %324, %v271
        %v326 = vpop.permute.xlu0 %325
        %329 = vset.pattern.permute.xlu0 0
        %330 = vperm.xlu0 %329, %v272
        %v331 = vpop.permute.xlu0 %330
        %334 = vset.pattern.permute.xlu0 0
        %335 = vperm.xlu0 %334, %v273
        %v336 = vpop.permute.xlu0 %335
        %339 = vset.pattern.permute.xlu0 0
        %340 = vperm.xlu0 %339, %v274
        %v341 = vpop.permute.xlu0 %340
        %344 = vset.pattern.permute.xlu0 0
        %345 = vperm.xlu0 %344, %v275
        %v346 = vpop.permute.xlu0 %345
        %349 = vset.pattern.permute.xlu0 0
        %350 = vperm.xlu0 %349, %v276
        %v351 = vpop.permute.xlu0 %350
        %354 = vset.pattern.permute.xlu0 0
        %355 = vperm.xlu0 %354, %v277
        %v356 = vpop.permute.xlu0 %355
        %359 = vset.pattern.permute.xlu0 0
        %360 = vperm.xlu0 %359, %v278
        %v361 = vpop.permute.xlu0 %360
        %364 = vset.pattern.permute.xlu0 0
        %365 = vperm.xlu0 %364, %v279
        %v366 = vpop.permute.xlu0 %365
        %369 = vset.pattern.permute.xlu0 0
        %370 = vperm.xlu0 %369, %v280
        %v371 = vpop.permute.xlu0 %370
        %374 = vset.pattern.permute.xlu0 0
        %375 = vperm.xlu0 %374, %v281
        %v376 = vpop.permute.xlu0 %375
        %379 = vset.pattern.permute.xlu0 0
        %380 = vperm.xlu0 %379, %v282
        %v381 = vpop.permute.xlu0 %380
        %384 = vset.pattern.permute.xlu0 0
        %385 = vperm.xlu0 %384, %v283
        %v386 = vpop.permute.xlu0 %385
        %389 = vset.pattern.permute.xlu0 0
        %390 = vperm.xlu0 %389, %v284
        %v391 = vpop.permute.xlu0 %390
        %394 = vset.pattern.permute.xlu0 0
        %395 = vperm.xlu0 %394, %v285
        %v396 = vpop.permute.xlu0 %395
        %v414 = vunpack.c.l.b16 %v302
        %v415 = vunpack.c.l.b16 %v303
        %v416 = vunpack.c.l.b16 %v304
        %v417 = vunpack.c.l.b16 %v305
        %v418 = vunpack.c.l.b16 %v306
        %v419 = vunpack.c.l.b16 %v307
        %v420 = vunpack.c.l.b16 %v308
        %v421 = vunpack.c.l.b16 %v309
        %v422 = vunpack.c.l.b16 %v310
        %v423 = vunpack.c.l.b16 %v311
        %v424 = vunpack.c.l.b16 %v312
        %v425 = vunpack.c.l.b16 %v313
        %v426 = vunpack.c.l.b16 %v314
        %v427 = vunpack.c.l.b16 %v315
        %v428 = vunpack.c.l.b16 %v316
        %v429 = vunpack.c.l.b16 %v317
        %v430 = vpack.c.b16 %v415, %v414
        %v431 = vpack.c.b16 %v417, %v416
        %v432 = vpack.c.b16 %v419, %v418
        %v433 = vpack.c.b16 %v421, %v420
        %v434 = vpack.c.b16 %v423, %v422
        %v435 = vpack.c.b16 %v425, %v424
        %v436 = vpack.c.b16 %v427, %v426
        %v437 = vpack.c.b16 %v429, %v428
        %v462 = vunpack.c.l.b16 %v286
        %v463 = vunpack.c.h.b16 %v286
        %v464 = vunpack.c.l.b16 %v287
        %v465 = vunpack.c.h.b16 %v287
        %v466 = vunpack.c.l.b16 %v288
        %v467 = vunpack.c.h.b16 %v288
        %v468 = vunpack.c.l.b16 %v289
        %v469 = vunpack.c.h.b16 %v289
        %v470 = vunpack.c.l.b16 %v290
        %v471 = vunpack.c.h.b16 %v290
        %v472 = vunpack.c.l.b16 %v291
        %v473 = vunpack.c.h.b16 %v291
        %v474 = vunpack.c.l.b16 %v292
        %v475 = vunpack.c.h.b16 %v292
        %v476 = vunpack.c.l.b16 %v293
        %v477 = vunpack.c.h.b16 %v293
        %v478 = vunpack.c.l.b16 %v294
        %v479 = vunpack.c.h.b16 %v294
        %v480 = vunpack.c.l.b16 %v295
        %v481 = vunpack.c.h.b16 %v295
        %v482 = vunpack.c.l.b16 %v296
        %v483 = vunpack.c.h.b16 %v296
        %v484 = vunpack.c.l.b16 %v297
        %v485 = vunpack.c.h.b16 %v297
        %v486 = vunpack.c.l.b16 %v298
        %v487 = vunpack.c.h.b16 %v298
        %v488 = vunpack.c.l.b16 %v299
        %v489 = vunpack.c.h.b16 %v299
        %v490 = vunpack.c.l.b16 %v300
        %v491 = vunpack.c.h.b16 %v300
        %v492 = vunpack.c.l.b16 %v301
        %v493 = vunpack.c.h.b16 %v301
        %v494 = vpack.c.b16 %v464, %v462
        %v495 = vpack.c.b16 %v465, %v463
        %v496 = vpack.c.b16 %v468, %v466
        %v497 = vpack.c.b16 %v469, %v467
        %v498 = vpack.c.b16 %v472, %v470
        %v499 = vpack.c.b16 %v473, %v471
        %v500 = vpack.c.b16 %v476, %v474
        %v501 = vpack.c.b16 %v477, %v475
        %v502 = vpack.c.b16 %v480, %v478
        %v503 = vpack.c.b16 %v481, %v479
        %v504 = vpack.c.b16 %v484, %v482
        %v505 = vpack.c.b16 %v485, %v483
        %v506 = vpack.c.b16 %v488, %v486
        %v507 = vpack.c.b16 %v489, %v487
        %v508 = vpack.c.b16 %v492, %v490
        %v509 = vpack.c.b16 %v493, %v491
        %526 = vmatprep.subr.bf16.mxu0 %v509
        %527 = vmatpush1.bf16.msra.mxu0 %v508
        %528 = vmatprep.subr.bf16.mxu0 %v507
        %529 = vmatpush1.bf16.msra.mxu0 %v506
        %530 = vmatprep.subr.bf16.mxu0 %v505
        %531 = vmatpush1.bf16.msra.mxu0 %v504
        %532 = vmatprep.subr.bf16.mxu0 %v503
        %533 = vmatpush1.bf16.msra.mxu0 %v502
        %534 = vmatprep.subr.bf16.mxu0 %v501
        %535 = vmatpush1.bf16.msra.mxu0 %v500
        %536 = vmatprep.subr.bf16.mxu0 %v499
        %537 = vmatpush1.bf16.msra.mxu0 %v498
        %538 = vmatprep.subr.bf16.mxu0 %v497
        %539 = vmatpush1.bf16.msra.mxu0 %v496
        %540 = vmatprep.subr.bf16.mxu0 %v495
        %541 = vmatpush1.bf16.msra.mxu0 %v494
        %542 = vmatprep.subr.bf16.mxu0 0
        %543 = vmatpush2.bf16.msra.mxu0 0
        %544 = vmatprep.subr.bf16.mxu0 0
        %545 = vmatpush2.bf16.msra.mxu0 0
        %546 = vmatprep.subr.bf16.mxu0 0
        %547 = vmatpush2.bf16.msra.mxu0 0
        %548 = vmatprep.subr.bf16.mxu0 0
        %549 = vmatpush2.bf16.msra.mxu0 0
        %550 = vmatprep.subr.bf16.mxu0 0
        %551 = vmatpush2.bf16.msra.mxu0 0
        %552 = vmatprep.subr.bf16.mxu0 0
        %553 = vmatpush2.bf16.msra.mxu0 0
        %554 = vmatprep.subr.bf16.mxu0 0
        %555 = vmatpush2.bf16.msra.mxu0 0
        %556 = vmatprep.subr.bf16.mxu0 0
        %557 = vmatpush2.bf16.msra.mxu0 0
        %558 = vmatprep.mubr.bf16.mxu0 0
        %559 = vmatmul.mubr.bf16.gmra.mxu0 %v430
        %v560 = vpop.f32.mrf.mxu0
        %v561 = vadd.f32 %v321, %v560
        %v562 = vpop.f32.mrf.mxu0
        %v563 = vadd.f32 %v321, %v562
        %v564 = vpop.f32.mrf.mxu0
        %v565 = vadd.f32 %v326, %v564
        %v566 = vpop.f32.mrf.mxu0
        %v567 = vadd.f32 %v326, %v566
        %568 = vmatprep.mubr.bf16.mxu0 0
        %569 = vmatmul.mubr.bf16.gmra.mxu0 %v431
        %v570 = vpop.f32.mrf.mxu0
        %v571 = vadd.f32 %v331, %v570
        %v572 = vpop.f32.mrf.mxu0
        %v573 = vadd.f32 %v331, %v572
        %v574 = vpop.f32.mrf.mxu0
        %v575 = vadd.f32 %v336, %v574
        %v576 = vpop.f32.mrf.mxu0
        %v577 = vadd.f32 %v336, %v576
        %578 = vmatprep.mubr.bf16.mxu0 0
        %579 = vmatmul.mubr.bf16.gmra.mxu0 %v432
        %v580 = vpop.f32.mrf.mxu0
        %v581 = vadd.f32 %v341, %v580
        %v582 = vpop.f32.mrf.mxu0
        %v583 = vadd.f32 %v341, %v582
        %v584 = vpop.f32.mrf.mxu0
        %v585 = vadd.f32 %v346, %v584
        %v586 = vpop.f32.mrf.mxu0
        %v587 = vadd.f32 %v346, %v586
        %588 = vmatprep.mubr.bf16.mxu0 0
        %589 = vmatmul.mubr.bf16.gmra.mxu0 %v433
        %v590 = vpop.f32.mrf.mxu0
        %v591 = vadd.f32 %v351, %v590
        %v592 = vpop.f32.mrf.mxu0
        %v593 = vadd.f32 %v351, %v592
        %v594 = vpop.f32.mrf.mxu0
        %v595 = vadd.f32 %v356, %v594
        %v596 = vpop.f32.mrf.mxu0
        %v597 = vadd.f32 %v356, %v596
        %598 = vmatprep.mubr.bf16.mxu0 0
        %599 = vmatmul.mubr.bf16.gmra.mxu0 %v434
        %v600 = vpop.f32.mrf.mxu0
        %v601 = vadd.f32 %v361, %v600
        %v602 = vpop.f32.mrf.mxu0
        %v603 = vadd.f32 %v361, %v602
        %v604 = vpop.f32.mrf.mxu0
        %v605 = vadd.f32 %v366, %v604
        %v606 = vpop.f32.mrf.mxu0
        %v607 = vadd.f32 %v366, %v606
        %608 = vmatprep.mubr.bf16.mxu0 0
        %609 = vmatmul.mubr.bf16.gmra.mxu0 %v435
        %v610 = vpop.f32.mrf.mxu0
        %v611 = vadd.f32 %v371, %v610
        %v612 = vpop.f32.mrf.mxu0
        %v613 = vadd.f32 %v371, %v612
        %v614 = vpop.f32.mrf.mxu0
        %v615 = vadd.f32 %v376, %v614
        %v616 = vpop.f32.mrf.mxu0
        %v617 = vadd.f32 %v376, %v616
        %618 = vmatprep.mubr.bf16.mxu0 0
        %619 = vmatmul.mubr.bf16.gmra.mxu0 %v436
        %v620 = vpop.f32.mrf.mxu0
        %v621 = vadd.f32 %v381, %v620
        %v622 = vpop.f32.mrf.mxu0
        %v623 = vadd.f32 %v381, %v622
        %v624 = vpop.f32.mrf.mxu0
        %v625 = vadd.f32 %v386, %v624
        %v626 = vpop.f32.mrf.mxu0
        %v627 = vadd.f32 %v386, %v626
        %628 = vmatprep.mubr.bf16.mxu0 0
        %629 = vmatmul.mubr.bf16.gmra.mxu0 %v437
        %v630 = vpop.f32.mrf.mxu0
        %v631 = vadd.f32 %v391, %v630
        %v632 = vpop.f32.mrf.mxu0
        %v633 = vadd.f32 %v391, %v632
        %v634 = vpop.f32.mrf.mxu0
        %v635 = vadd.f32 %v396, %v634
        %v636 = vpop.f32.mrf.mxu0
        %v637 = vadd.f32 %v396, %v636
        %638 = vdwg.mxu0
        %v639 = vadd.f32 %v561, %v565
        %v640 = vadd.f32 %v639, %v571
        %v641 = vadd.f32 %v640, %v575
        %v642 = vadd.f32 %v641, %v581
        %v643 = vadd.f32 %v642, %v585
        %v644 = vadd.f32 %v643, %v591
        %v645 = vadd.f32 %v644, %v595
        %v646 = vadd.f32 %v645, %v601
        %v647 = vadd.f32 %v646, %v605
        %v648 = vadd.f32 %v647, %v611
        %v649 = vadd.f32 %v648, %v615
        %v650 = vadd.f32 %v649, %v621
        %v651 = vadd.f32 %v650, %v625
        %v652 = vadd.f32 %v651, %v631
        %v653 = vadd.f32 %v652, %v635
        %v654 = vrot.slane %v653, 4
        %v655 = vadd.f32 %v653, %v654
        %v656 = vrot.slane %v655, 2
        %v657 = vadd.f32 %v655, %v656
        %v658 = vrot.slane %v657, 1
        %v659 = vadd.f32 %v657, %v658
        %v660 = vadd.f32 %v563, %v567
        %v661 = vadd.f32 %v660, %v573
        %v662 = vadd.f32 %v661, %v577
        %v663 = vadd.f32 %v662, %v583
        %v664 = vadd.f32 %v663, %v587
        %v665 = vadd.f32 %v664, %v593
        %v666 = vadd.f32 %v665, %v597
        %v667 = vadd.f32 %v666, %v603
        %v668 = vadd.f32 %v667, %v607
        %v669 = vadd.f32 %v668, %v613
        %v670 = vadd.f32 %v669, %v617
        %v671 = vadd.f32 %v670, %v623
        %v672 = vadd.f32 %v671, %v627
        %v673 = vadd.f32 %v672, %v633
        %v674 = vadd.f32 %v673, %v637
        %v675 = vrot.slane %v674, 4
        %v676 = vadd.f32 %v674, %v675
        %v677 = vrot.slane %v676, 2
        %v678 = vadd.f32 %v676, %v677
        %v679 = vrot.slane %v678, 1
        %v680 = vadd.f32 %v678, %v679
        %v681 = vrcp.pop 128.0
        %v682 = vmul.f32 %v659, %v681
        %v683 = vmul.f32 %v680, %v681
        %v684 = vsub.f32 %v561, %v682
        %v685 = vsub.f32 %v563, %v683
        %v686 = vsub.f32 %v565, %v682
        %v687 = vsub.f32 %v567, %v683
        %v688 = vsub.f32 %v571, %v682
        %v689 = vsub.f32 %v573, %v683
        %v690 = vsub.f32 %v575, %v682
        %v691 = vsub.f32 %v577, %v683
        %v692 = vsub.f32 %v581, %v682
        %v693 = vsub.f32 %v583, %v683
        %v694 = vsub.f32 %v585, %v682
        %v695 = vsub.f32 %v587, %v683
        %v696 = vsub.f32 %v591, %v682
        %v697 = vsub.f32 %v593, %v683
        %v698 = vsub.f32 %v595, %v682
        %v699 = vsub.f32 %v597, %v683
        %v700 = vsub.f32 %v601, %v682
        %v701 = vsub.f32 %v603, %v683
        %v702 = vsub.f32 %v605, %v682
        %v703 = vsub.f32 %v607, %v683
        %v704 = vsub.f32 %v611, %v682
        %v705 = vsub.f32 %v613, %v683
        %v706 = vsub.f32 %v615, %v682
        %v707 = vsub.f32 %v617, %v683
        %v708 = vsub.f32 %v621, %v682
        %v709 = vsub.f32 %v623, %v683
        %v710 = vsub.f32 %v625, %v682
        %v711 = vsub.f32 %v627, %v683
        %v712 = vsub.f32 %v631, %v682
        %v713 = vsub.f32 %v633, %v683
        %v714 = vsub.f32 %v635, %v682
        %v715 = vsub.f32 %v637, %v683
        %v716 = vmul.f32 %v684, %v684
        %v717 = vmul.f32 %v685, %v685
        %v718 = vmul.f32 %v686, %v686
        %v719 = vmul.f32 %v687, %v687
        %v720 = vmul.f32 %v688, %v688
        %v721 = vmul.f32 %v689, %v689
        %v722 = vmul.f32 %v690, %v690
        %v723 = vmul.f32 %v691, %v691
        %v724 = vmul.f32 %v692, %v692
        %v725 = vmul.f32 %v693, %v693
        %v726 = vmul.f32 %v694, %v694
        %v727 = vmul.f32 %v695, %v695
        %v728 = vmul.f32 %v696, %v696
        %v729 = vmul.f32 %v697, %v697
        %v730 = vmul.f32 %v698, %v698
        %v731 = vmul.f32 %v699, %v699
        %v732 = vmul.f32 %v700, %v700
        %v733 = vmul.f32 %v701, %v701
        %v734 = vmul.f32 %v702, %v702
        %v735 = vmul.f32 %v703, %v703
        %v736 = vmul.f32 %v704, %v704
        %v737 = vmul.f32 %v705, %v705
        %v738 = vmul.f32 %v706, %v706
        %v739 = vmul.f32 %v707, %v707
        %v740 = vmul.f32 %v708, %v708
        %v741 = vmul.f32 %v709, %v709
        %v742 = vmul.f32 %v710, %v710
        %v743 = vmul.f32 %v711, %v711
        %v744 = vmul.f32 %v712, %v712
        %v745 = vmul.f32 %v713, %v713
        %v746 = vmul.f32 %v714, %v714
        %v747 = vmul.f32 %v715, %v715
        %v748 = vadd.f32 %v716, %v718
        %v749 = vadd.f32 %v748, %v720
        %v750 = vadd.f32 %v749, %v722
        %v751 = vadd.f32 %v750, %v724
        %v752 = vadd.f32 %v751, %v726
        %v753 = vadd.f32 %v752, %v728
        %v754 = vadd.f32 %v753, %v730
        %v755 = vadd.f32 %v754, %v732
        %v756 = vadd.f32 %v755, %v734
        %v757 = vadd.f32 %v756, %v736
        %v758 = vadd.f32 %v757, %v738
        %v759 = vadd.f32 %v758, %v740
        %v760 = vadd.f32 %v759, %v742
        %v761 = vadd.f32 %v760, %v744
        %v762 = vadd.f32 %v761, %v746
        %v763 = vrot.slane %v762, 4
        %v764 = vadd.f32 %v762, %v763
        %v765 = vrot.slane %v764, 2
        %v766 = vadd.f32 %v764, %v765
        %v767 = vrot.slane %v766, 1
        %v768 = vadd.f32 %v766, %v767
        %v769 = vadd.f32 %v717, %v719
        %v770 = vadd.f32 %v769, %v721
        %v771 = vadd.f32 %v770, %v723
        %v772 = vadd.f32 %v771, %v725
        %v773 = vadd.f32 %v772, %v727
        %v774 = vadd.f32 %v773, %v729
        %v775 = vadd.f32 %v774, %v731
        %v776 = vadd.f32 %v775, %v733
        %v777 = vadd.f32 %v776, %v735
        %v778 = vadd.f32 %v777, %v737
        %v779 = vadd.f32 %v778, %v739
        %v780 = vadd.f32 %v779, %v741
        %v781 = vadd.f32 %v780, %v743
        %v782 = vadd.f32 %v781, %v745
        %v783 = vadd.f32 %v782, %v747
        %v784 = vrot.slane %v783, 4
        %v785 = vadd.f32 %v783, %v784
        %v786 = vrot.slane %v785, 2
        %v787 = vadd.f32 %v785, %v786
        %v788 = vrot.slane %v787, 1
        %v789 = vadd.f32 %v787, %v788
        %v790 = vmul.f32 %v768, %v681
        %v791 = vmul.f32 %v789, %v681
        %v792 = vadd.f32 %v790, 1e-05
        %v793 = vadd.f32 %v791, 1e-05
        %v794 = vrsqrt.pop %v792
        %v795 = vrsqrt.pop %v793
        %v796 = vmul.f32 %v684, %v794
        %v797 = vmul.f32 %v685, %v795
        %v798 = vmul.f32 %v686, %v794
        %v799 = vmul.f32 %v687, %v795
        %v800 = vmul.f32 %v688, %v794
        %v801 = vmul.f32 %v689, %v795
        %v802 = vmul.f32 %v690, %v794
        %v803 = vmul.f32 %v691, %v795
        %v804 = vmul.f32 %v692, %v794
        %v805 = vmul.f32 %v693, %v795
        %v806 = vmul.f32 %v694, %v794
        %v807 = vmul.f32 %v695, %v795
        %v808 = vmul.f32 %v696, %v794
        %v809 = vmul.f32 %v697, %v795
        %v810 = vmul.f32 %v698, %v794
        %v811 = vmul.f32 %v699, %v795
        %v812 = vmul.f32 %v700, %v794
        %v813 = vmul.f32 %v701, %v795
        %v814 = vmul.f32 %v702, %v794
        %v815 = vmul.f32 %v703, %v795
        %v816 = vmul.f32 %v704, %v794
        %v817 = vmul.f32 %v705, %v795
        %v818 = vmul.f32 %v706, %v794
        %v819 = vmul.f32 %v707, %v795
        %v820 = vmul.f32 %v708, %v794
        %v821 = vmul.f32 %v709, %v795
        %v822 = vmul.f32 %v710, %v794
        %v823 = vmul.f32 %v711, %v795
        %v824 = vmul.f32 %v712, %v794
        %v825 = vmul.f32 %v713, %v795
        %v826 = vmul.f32 %v714, %v794
        %v827 = vmul.f32 %v715, %v795
        %828 = vset.pattern.permute.xlu0 1
        %829 = vperm.xlu0 %828, %v270
        %v830 = vpop.permute.xlu0 %829
        %832 = vset.pattern.permute.xlu0 1
        %833 = vperm.xlu0 %832, %v271
        %v834 = vpop.permute.xlu0 %833
        %836 = vset.pattern.permute.xlu0 1
        %837 = vperm.xlu0 %836, %v272
        %v838 = vpop.permute.xlu0 %837
        %840 = vset.pattern.permute.xlu0 1
        %841 = vperm.xlu0 %840, %v273
        %v842 = vpop.permute.xlu0 %841
        %844 = vset.pattern.permute.xlu0 1
        %845 = vperm.xlu0 %844, %v274
        %v846 = vpop.permute.xlu0 %845
        %848 = vset.pattern.permute.xlu0 1
        %849 = vperm.xlu0 %848, %v275
        %v850 = vpop.permute.xlu0 %849
        %852 = vset.pattern.permute.xlu0 1
        %853 = vperm.xlu0 %852, %v276
        %v854 = vpop.permute.xlu0 %853
        %856 = vset.pattern.permute.xlu0 1
        %857 = vperm.xlu0 %856, %v277
        %v858 = vpop.permute.xlu0 %857
        %860 = vset.pattern.permute.xlu0 1
        %861 = vperm.xlu0 %860, %v278
        %v862 = vpop.permute.xlu0 %861
        %864 = vset.pattern.permute.xlu0 1
        %865 = vperm.xlu0 %864, %v279
        %v866 = vpop.permute.xlu0 %865
        %868 = vset.pattern.permute.xlu0 1
        %869 = vperm.xlu0 %868, %v280
        %v870 = vpop.permute.xlu0 %869
        %872 = vset.pattern.permute.xlu0 1
        %873 = vperm.xlu0 %872, %v281
        %v874 = vpop.permute.xlu0 %873
        %876 = vset.pattern.permute.xlu0 1
        %877 = vperm.xlu0 %876, %v282
        %v878 = vpop.permute.xlu0 %877
        %880 = vset.pattern.permute.xlu0 1
        %881 = vperm.xlu0 %880, %v283
        %v882 = vpop.permute.xlu0 %881
        %884 = vset.pattern.permute.xlu0 1
        %885 = vperm.xlu0 %884, %v284
        %v886 = vpop.permute.xlu0 %885
        %888 = vset.pattern.permute.xlu0 1
        %889 = vperm.xlu0 %888, %v285
        %v890 = vpop.permute.xlu0 %889
        %v892 = vmul.f32 %v796, %v830
        %v893 = vmul.f32 %v797, %v830
        %v894 = vmul.f32 %v798, %v834
        %v895 = vmul.f32 %v799, %v834
        %v896 = vmul.f32 %v800, %v838
        %v897 = vmul.f32 %v801, %v838
        %v898 = vmul.f32 %v802, %v842
        %v899 = vmul.f32 %v803, %v842
        %v900 = vmul.f32 %v804, %v846
        %v901 = vmul.f32 %v805, %v846
        %v902 = vmul.f32 %v806, %v850
        %v903 = vmul.f32 %v807, %v850
        %v904 = vmul.f32 %v808, %v854
        %v905 = vmul.f32 %v809, %v854
        %v906 = vmul.f32 %v810, %v858
        %v907 = vmul.f32 %v811, %v858
        %v908 = vmul.f32 %v812, %v862
        %v909 = vmul.f32 %v813, %v862
        %v910 = vmul.f32 %v814, %v866
        %v911 = vmul.f32 %v815, %v866
        %v912 = vmul.f32 %v816, %v870
        %v913 = vmul.f32 %v817, %v870
        %v914 = vmul.f32 %v818, %v874
        %v915 = vmul.f32 %v819, %v874
        %v916 = vmul.f32 %v820, %v878
        %v917 = vmul.f32 %v821, %v878
        %v918 = vmul.f32 %v822, %v882
        %v919 = vmul.f32 %v823, %v882
        %v920 = vmul.f32 %v824, %v886
        %v921 = vmul.f32 %v825, %v886
        %v922 = vmul.f32 %v826, %v890
        %v923 = vmul.f32 %v827, %v890
        %924 = vset.pattern.permute.xlu0 2
        %925 = vperm.xlu0 %924, %v270
        %v926 = vpop.permute.xlu0 %925
        %928 = vset.pattern.permute.xlu0 2
        %929 = vperm.xlu0 %928, %v271
        %v930 = vpop.permute.xlu0 %929
        %932 = vset.pattern.permute.xlu0 2
        %933 = vperm.xlu0 %932, %v272
        %v934 = vpop.permute.xlu0 %933
        %936 = vset.pattern.permute.xlu0 2
        %937 = vperm.xlu0 %936, %v273
        %v938 = vpop.permute.xlu0 %937
        %940 = vset.pattern.permute.xlu0 2
        %941 = vperm.xlu0 %940, %v274
        %v942 = vpop.permute.xlu0 %941
        %944 = vset.pattern.permute.xlu0 2
        %945 = vperm.xlu0 %944, %v275
        %v946 = vpop.permute.xlu0 %945
        %948 = vset.pattern.permute.xlu0 2
        %949 = vperm.xlu0 %948, %v276
        %v950 = vpop.permute.xlu0 %949
        %952 = vset.pattern.permute.xlu0 2
        %953 = vperm.xlu0 %952, %v277
        %v954 = vpop.permute.xlu0 %953
        %956 = vset.pattern.permute.xlu0 2
        %957 = vperm.xlu0 %956, %v278
        %v958 = vpop.permute.xlu0 %957
        %960 = vset.pattern.permute.xlu0 2
        %961 = vperm.xlu0 %960, %v279
        %v962 = vpop.permute.xlu0 %961
        %964 = vset.pattern.permute.xlu0 2
        %965 = vperm.xlu0 %964, %v280
        %v966 = vpop.permute.xlu0 %965
        %968 = vset.pattern.permute.xlu0 2
        %969 = vperm.xlu0 %968, %v281
        %v970 = vpop.permute.xlu0 %969
        %972 = vset.pattern.permute.xlu0 2
        %973 = vperm.xlu0 %972, %v282
        %v974 = vpop.permute.xlu0 %973
        %976 = vset.pattern.permute.xlu0 2
        %977 = vperm.xlu0 %976, %v283
        %v978 = vpop.permute.xlu0 %977
        %980 = vset.pattern.permute.xlu0 2
        %981 = vperm.xlu0 %980, %v284
        %v982 = vpop.permute.xlu0 %981
        %984 = vset.pattern.permute.xlu0 2
        %985 = vperm.xlu0 %984, %v285
        %v986 = vpop.permute.xlu0 %985
        %v988 = vadd.f32 %v892, %v926
        %v989 = vadd.f32 %v893, %v926
        %v990 = vadd.f32 %v894, %v930
        %v991 = vadd.f32 %v895, %v930
        %v992 = vadd.f32 %v896, %v934
        %v993 = vadd.f32 %v897, %v934
        %v994 = vadd.f32 %v898, %v938
        %v995 = vadd.f32 %v899, %v938
        %v996 = vadd.f32 %v900, %v942
        %v997 = vadd.f32 %v901, %v942
        %v998 = vadd.f32 %v902, %v946
        %v999 = vadd.f32 %v903, %v946
        %v1000 = vadd.f32 %v904, %v950
        %v1001 = vadd.f32 %v905, %v950
        %v1002 = vadd.f32 %v906, %v954
        %v1003 = vadd.f32 %v907, %v954
        %v1004 = vadd.f32 %v908, %v958
        %v1005 = vadd.f32 %v909, %v958
        %v1006 = vadd.f32 %v910, %v962
        %v1007 = vadd.f32 %v911, %v962
        %v1008 = vadd.f32 %v912, %v966
        %v1009 = vadd.f32 %v913, %v966
        %v1010 = vadd.f32 %v914, %v970
        %v1011 = vadd.f32 %v915, %v970
        %v1012 = vadd.f32 %v916, %v974
        %v1013 = vadd.f32 %v917, %v974
        %v1014 = vadd.f32 %v918, %v978
        %v1015 = vadd.f32 %v919, %v978
        %v1016 = vadd.f32 %v920, %v982
        %v1017 = vadd.f32 %v921, %v982
        %v1018 = vadd.f32 %v922, %v986
        %v1019 = vadd.f32 %v923, %v986
        %v1020 = vld [vmem:[%s2] sm:$0xf]
        %v1021 = vld [vmem:[%s2 + $0x4] sm:$0xf]
        %v1022 = vld [vmem:[%s2 + $0x8] sm:$0xf]
        %v1023 = vld [vmem:[%s2 + $0xc] sm:$0xf]
        %v1024 = vld [vmem:[%s2 + $0x10] sm:$0xf]
        %v1025 = vld [vmem:[%s2 + $0x14] sm:$0xf]
        %v1026 = vld [vmem:[%s2 + $0x18] sm:$0xf]
        %v1027 = vld [vmem:[%s2 + $0x1c] sm:$0xf]
        %v1028 = vld [vmem:[%s2 + $0x20] sm:$0xf]
        %v1029 = vld [vmem:[%s2 + $0x24] sm:$0xf]
        %v1030 = vld [vmem:[%s2 + $0x28] sm:$0xf]
        %v1031 = vld [vmem:[%s2 + $0x2c] sm:$0xf]
        %v1032 = vld [vmem:[%s2 + $0x30] sm:$0xf]
        %v1033 = vld [vmem:[%s2 + $0x34] sm:$0xf]
        %v1034 = vld [vmem:[%s2 + $0x38] sm:$0xf]
        %v1035 = vld [vmem:[%s2 + $0x3c] sm:$0xf]
        %v1036 = vld [vmem:[%s2 + $0x40] sm:$0xf]
        %v1037 = vld [vmem:[%s2 + $0x44] sm:$0xf]
        %v1038 = vld [vmem:[%s2 + $0x48] sm:$0xf]
        %v1039 = vld [vmem:[%s2 + $0x4c] sm:$0xf]
        %v1040 = vld [vmem:[%s2 + $0x50] sm:$0xf]
        %v1041 = vld [vmem:[%s2 + $0x54] sm:$0xf]
        %v1042 = vld [vmem:[%s2 + $0x58] sm:$0xf]
        %v1043 = vld [vmem:[%s2 + $0x5c] sm:$0xf]
        %v1044 = vld [vmem:[%s2 + $0x60] sm:$0xf]
        %v1045 = vld [vmem:[%s2 + $0x64] sm:$0xf]
        %v1046 = vld [vmem:[%s2 + $0x68] sm:$0xf]
        %v1047 = vld [vmem:[%s2 + $0x6c] sm:$0xf]
        %v1048 = vld [vmem:[%s2 + $0x70] sm:$0xf]
        %v1049 = vld [vmem:[%s2 + $0x74] sm:$0xf]
        %v1050 = vld [vmem:[%s2 + $0x78] sm:$0xf]
        %v1051 = vld [vmem:[%s2 + $0x7c] sm:$0xf]
        %v1052 = vpack.c.bf16 %v990, %v988
        %v1053 = vpack.c.bf16 %v991, %v989
        %v1054 = vpack.c.bf16 %v994, %v992
        %v1055 = vpack.c.bf16 %v995, %v993
        %v1056 = vpack.c.bf16 %v998, %v996
        %v1057 = vpack.c.bf16 %v999, %v997
        %v1058 = vpack.c.bf16 %v1002, %v1000
        %v1059 = vpack.c.bf16 %v1003, %v1001
        %v1060 = vpack.c.bf16 %v1006, %v1004
        %v1061 = vpack.c.bf16 %v1007, %v1005
        %v1062 = vpack.c.bf16 %v1010, %v1008
        %v1063 = vpack.c.bf16 %v1011, %v1009
        %v1064 = vpack.c.bf16 %v1014, %v1012
        %v1065 = vpack.c.bf16 %v1015, %v1013
        %v1066 = vpack.c.bf16 %v1018, %v1016
        %v1067 = vpack.c.bf16 %v1019, %v1017
        %v1068 = vld [vmem:[%s4] sm:$0xff]
        %v1069 = vld [vmem:[%s4 + $0x8] sm:$0xff]
        %v1070 = vld [vmem:[%s4 + $0x10] sm:$0xff]
        %v1071 = vld [vmem:[%s4 + $0x18] sm:$0xff]
        %v1072 = vld [vmem:[%s4 + $0x20] sm:$0xff]
        %v1073 = vld [vmem:[%s4 + $0x28] sm:$0xff]
        %v1074 = vld [vmem:[%s4 + $0x30] sm:$0xff]
        %v1075 = vld [vmem:[%s4 + $0x38] sm:$0xff]
        %v1076 = vld [vmem:[%s4 + $0x40] sm:$0xff]
        %v1077 = vld [vmem:[%s4 + $0x48] sm:$0xff]
        %v1078 = vld [vmem:[%s4 + $0x50] sm:$0xff]
        %v1079 = vld [vmem:[%s4 + $0x58] sm:$0xff]
        %v1080 = vld [vmem:[%s4 + $0x60] sm:$0xff]
        %v1081 = vld [vmem:[%s4 + $0x68] sm:$0xff]
        %v1082 = vld [vmem:[%s4 + $0x70] sm:$0xff]
        %v1083 = vld [vmem:[%s4 + $0x78] sm:$0xff]
        %v1084 = vld [vmem:[%s4 + $0x80] sm:$0xff]
        %v1085 = vld [vmem:[%s4 + $0x88] sm:$0xff]
        %v1086 = vld [vmem:[%s4 + $0x90] sm:$0xff]
        %v1087 = vld [vmem:[%s4 + $0x98] sm:$0xff]
        %v1088 = vld [vmem:[%s4 + $0xa0] sm:$0xff]
        %v1089 = vld [vmem:[%s4 + $0xa8] sm:$0xff]
        %v1090 = vld [vmem:[%s4 + $0xb0] sm:$0xff]
        %v1091 = vld [vmem:[%s4 + $0xb8] sm:$0xff]
        %v1092 = vld [vmem:[%s4 + $0xc0] sm:$0xff]
        %v1093 = vld [vmem:[%s4 + $0xc8] sm:$0xff]
        %v1094 = vld [vmem:[%s4 + $0xd0] sm:$0xff]
        %v1095 = vld [vmem:[%s4 + $0xd8] sm:$0xff]
        %v1096 = vld [vmem:[%s4 + $0xe0] sm:$0xff]
        %v1097 = vld [vmem:[%s4 + $0xe8] sm:$0xff]
        %v1098 = vld [vmem:[%s4 + $0xf0] sm:$0xff]
        %v1099 = vld [vmem:[%s4 + $0xf8] sm:$0xff]
        %1101 = vset.pattern.permute.xlu0 0
        %1102 = vperm.xlu0 %1101, %v1068
        %v1103 = vpop.permute.xlu0 %1102
        %1106 = vset.pattern.permute.xlu0 0
        %1107 = vperm.xlu0 %1106, %v1069
        %v1108 = vpop.permute.xlu0 %1107
        %1111 = vset.pattern.permute.xlu0 0
        %1112 = vperm.xlu0 %1111, %v1070
        %v1113 = vpop.permute.xlu0 %1112
        %1116 = vset.pattern.permute.xlu0 0
        %1117 = vperm.xlu0 %1116, %v1071
        %v1118 = vpop.permute.xlu0 %1117
        %1121 = vset.pattern.permute.xlu0 0
        %1122 = vperm.xlu0 %1121, %v1072
        %v1123 = vpop.permute.xlu0 %1122
        %1126 = vset.pattern.permute.xlu0 0
        %1127 = vperm.xlu0 %1126, %v1073
        %v1128 = vpop.permute.xlu0 %1127
        %1131 = vset.pattern.permute.xlu0 0
        %1132 = vperm.xlu0 %1131, %v1074
        %v1133 = vpop.permute.xlu0 %1132
        %1136 = vset.pattern.permute.xlu0 0
        %1137 = vperm.xlu0 %1136, %v1075
        %v1138 = vpop.permute.xlu0 %1137
        %1141 = vset.pattern.permute.xlu0 0
        %1142 = vperm.xlu0 %1141, %v1076
        %v1143 = vpop.permute.xlu0 %1142
        %1146 = vset.pattern.permute.xlu0 0
        %1147 = vperm.xlu0 %1146, %v1077
        %v1148 = vpop.permute.xlu0 %1147
        %1151 = vset.pattern.permute.xlu0 0
        %1152 = vperm.xlu0 %1151, %v1078
        %v1153 = vpop.permute.xlu0 %1152
        %1156 = vset.pattern.permute.xlu0 0
        %1157 = vperm.xlu0 %1156, %v1079
        %v1158 = vpop.permute.xlu0 %1157
        %1161 = vset.pattern.permute.xlu0 0
        %1162 = vperm.xlu0 %1161, %v1080
        %v1163 = vpop.permute.xlu0 %1162
        %1166 = vset.pattern.permute.xlu0 0
        %1167 = vperm.xlu0 %1166, %v1081
        %v1168 = vpop.permute.xlu0 %1167
        %1171 = vset.pattern.permute.xlu0 0
        %1172 = vperm.xlu0 %1171, %v1082
        %v1173 = vpop.permute.xlu0 %1172
        %1176 = vset.pattern.permute.xlu0 0
        %1177 = vperm.xlu0 %1176, %v1083
        %v1178 = vpop.permute.xlu0 %1177
        %1181 = vset.pattern.permute.xlu0 0
        %1182 = vperm.xlu0 %1181, %v1084
        %v1183 = vpop.permute.xlu0 %1182
        %1186 = vset.pattern.permute.xlu0 0
        %1187 = vperm.xlu0 %1186, %v1085
        %v1188 = vpop.permute.xlu0 %1187
        %1191 = vset.pattern.permute.xlu0 0
        %1192 = vperm.xlu0 %1191, %v1086
        %v1193 = vpop.permute.xlu0 %1192
        %1196 = vset.pattern.permute.xlu0 0
        %1197 = vperm.xlu0 %1196, %v1087
        %v1198 = vpop.permute.xlu0 %1197
        %1201 = vset.pattern.permute.xlu0 0
        %1202 = vperm.xlu0 %1201, %v1088
        %v1203 = vpop.permute.xlu0 %1202
        %1206 = vset.pattern.permute.xlu0 0
        %1207 = vperm.xlu0 %1206, %v1089
        %v1208 = vpop.permute.xlu0 %1207
        %1211 = vset.pattern.permute.xlu0 0
        %1212 = vperm.xlu0 %1211, %v1090
        %v1213 = vpop.permute.xlu0 %1212
        %1216 = vset.pattern.permute.xlu0 0
        %1217 = vperm.xlu0 %1216, %v1091
        %v1218 = vpop.permute.xlu0 %1217
        %1221 = vset.pattern.permute.xlu0 0
        %1222 = vperm.xlu0 %1221, %v1092
        %v1223 = vpop.permute.xlu0 %1222
        %1226 = vset.pattern.permute.xlu0 0
        %1227 = vperm.xlu0 %1226, %v1093
        %v1228 = vpop.permute.xlu0 %1227
        %1231 = vset.pattern.permute.xlu0 0
        %1232 = vperm.xlu0 %1231, %v1094
        %v1233 = vpop.permute.xlu0 %1232
        %1236 = vset.pattern.permute.xlu0 0
        %1237 = vperm.xlu0 %1236, %v1095
        %v1238 = vpop.permute.xlu0 %1237
        %1241 = vset.pattern.permute.xlu0 0
        %1242 = vperm.xlu0 %1241, %v1096
        %v1243 = vpop.permute.xlu0 %1242
        %1246 = vset.pattern.permute.xlu0 0
        %1247 = vperm.xlu0 %1246, %v1097
        %v1248 = vpop.permute.xlu0 %1247
        %1251 = vset.pattern.permute.xlu0 0
        %1252 = vperm.xlu0 %1251, %v1098
        %v1253 = vpop.permute.xlu0 %1252
        %1256 = vset.pattern.permute.xlu0 0
        %1257 = vperm.xlu0 %1256, %v1099
        %v1258 = vpop.permute.xlu0 %1257
        %v1292 = vunpack.c.l.b16 %v1020
        %v1293 = vunpack.c.l.b16 %v1021
        %v1294 = vunpack.c.l.b16 %v1022
        %v1295 = vunpack.c.l.b16 %v1023
        %v1296 = vunpack.c.l.b16 %v1024
        %v1297 = vunpack.c.l.b16 %v1025
        %v1298 = vunpack.c.l.b16 %v1026
        %v1299 = vunpack.c.l.b16 %v1027
        %v1300 = vunpack.c.l.b16 %v1028
        %v1301 = vunpack.c.l.b16 %v1029
        %v1302 = vunpack.c.l.b16 %v1030
        %v1303 = vunpack.c.l.b16 %v1031
        %v1304 = vunpack.c.l.b16 %v1032
        %v1305 = vunpack.c.l.b16 %v1033
        %v1306 = vunpack.c.l.b16 %v1034
        %v1307 = vunpack.c.l.b16 %v1035
        %v1308 = vunpack.c.l.b16 %v1036
        %v1309 = vunpack.c.l.b16 %v1037
        %v1310 = vunpack.c.l.b16 %v1038
        %v1311 = vunpack.c.l.b16 %v1039
        %v1312 = vunpack.c.l.b16 %v1040
        %v1313 = vunpack.c.l.b16 %v1041
        %v1314 = vunpack.c.l.b16 %v1042
        %v1315 = vunpack.c.l.b16 %v1043
        %v1316 = vunpack.c.l.b16 %v1044
        %v1317 = vunpack.c.l.b16 %v1045
        %v1318 = vunpack.c.l.b16 %v1046
        %v1319 = vunpack.c.l.b16 %v1047
        %v1320 = vunpack.c.l.b16 %v1048
        %v1321 = vunpack.c.l.b16 %v1049
        %v1322 = vunpack.c.l.b16 %v1050
        %v1323 = vunpack.c.l.b16 %v1051
        %v1324 = vpack.c.b16 %v1293, %v1292
        %v1325 = vpack.c.b16 %v1295, %v1294
        %v1326 = vpack.c.b16 %v1297, %v1296
        %v1327 = vpack.c.b16 %v1299, %v1298
        %v1328 = vpack.c.b16 %v1301, %v1300
        %v1329 = vpack.c.b16 %v1303, %v1302
        %v1330 = vpack.c.b16 %v1305, %v1304
        %v1331 = vpack.c.b16 %v1307, %v1306
        %v1332 = vpack.c.b16 %v1309, %v1308
        %v1333 = vpack.c.b16 %v1311, %v1310
        %v1334 = vpack.c.b16 %v1313, %v1312
        %v1335 = vpack.c.b16 %v1315, %v1314
        %v1336 = vpack.c.b16 %v1317, %v1316
        %v1337 = vpack.c.b16 %v1319, %v1318
        %v1338 = vpack.c.b16 %v1321, %v1320
        %v1339 = vpack.c.b16 %v1323, %v1322
        %1356 = vmatprep.subr.bf16.mxu0 %v1067
        %1357 = vmatpush1.bf16.msra.mxu0 %v1066
        %1358 = vmatprep.subr.bf16.mxu0 %v1065
        %1359 = vmatpush1.bf16.msra.mxu0 %v1064
        %1360 = vmatprep.subr.bf16.mxu0 %v1063
        %1361 = vmatpush1.bf16.msra.mxu0 %v1062
        %1362 = vmatprep.subr.bf16.mxu0 %v1061
        %1363 = vmatpush1.bf16.msra.mxu0 %v1060
        %1364 = vmatprep.subr.bf16.mxu0 %v1059
        %1365 = vmatpush1.bf16.msra.mxu0 %v1058
        %1366 = vmatprep.subr.bf16.mxu0 %v1057
        %1367 = vmatpush1.bf16.msra.mxu0 %v1056
        %1368 = vmatprep.subr.bf16.mxu0 %v1055
        %1369 = vmatpush1.bf16.msra.mxu0 %v1054
        %1370 = vmatprep.subr.bf16.mxu0 %v1053
        %1371 = vmatpush1.bf16.msra.mxu0 %v1052
        %1372 = vmatprep.subr.bf16.mxu0 0
        %1373 = vmatpush2.bf16.msra.mxu0 0
        %1374 = vmatprep.subr.bf16.mxu0 0
        %1375 = vmatpush2.bf16.msra.mxu0 0
        %1376 = vmatprep.subr.bf16.mxu0 0
        %1377 = vmatpush2.bf16.msra.mxu0 0
        %1378 = vmatprep.subr.bf16.mxu0 0
        %1379 = vmatpush2.bf16.msra.mxu0 0
        %1380 = vmatprep.subr.bf16.mxu0 0
        %1381 = vmatpush2.bf16.msra.mxu0 0
        %1382 = vmatprep.subr.bf16.mxu0 0
        %1383 = vmatpush2.bf16.msra.mxu0 0
        %1384 = vmatprep.subr.bf16.mxu0 0
        %1385 = vmatpush2.bf16.msra.mxu0 0
        %1386 = vmatprep.subr.bf16.mxu0 0
        %1387 = vmatpush2.bf16.msra.mxu0 0
        %1388 = vmatprep.mubr.bf16.mxu0 0
        %1389 = vmatmul.mubr.bf16.gmra.mxu0 %v1324
        %v1390 = vpop.f32.mrf.mxu0
        %v1391 = vadd.f32 %v1103, %v1390
        %v1392 = vpop.f32.mrf.mxu0
        %v1393 = vadd.f32 %v1103, %v1392
        %v1394 = vpop.f32.mrf.mxu0
        %v1395 = vadd.f32 %v1108, %v1394
        %v1396 = vpop.f32.mrf.mxu0
        %v1397 = vadd.f32 %v1108, %v1396
        %1398 = vmatprep.mubr.bf16.mxu0 0
        %1399 = vmatmul.mubr.bf16.gmra.mxu0 %v1325
        %v1400 = vpop.f32.mrf.mxu0
        %v1401 = vadd.f32 %v1113, %v1400
        %v1402 = vpop.f32.mrf.mxu0
        %v1403 = vadd.f32 %v1113, %v1402
        %v1404 = vpop.f32.mrf.mxu0
        %v1405 = vadd.f32 %v1118, %v1404
        %v1406 = vpop.f32.mrf.mxu0
        %v1407 = vadd.f32 %v1118, %v1406
        %1408 = vmatprep.mubr.bf16.mxu0 0
        %1409 = vmatmul.mubr.bf16.gmra.mxu0 %v1326
        %v1410 = vpop.f32.mrf.mxu0
        %v1411 = vadd.f32 %v1123, %v1410
        %v1412 = vpop.f32.mrf.mxu0
        %v1413 = vadd.f32 %v1123, %v1412
        %v1414 = vpop.f32.mrf.mxu0
        %v1415 = vadd.f32 %v1128, %v1414
        %v1416 = vpop.f32.mrf.mxu0
        %v1417 = vadd.f32 %v1128, %v1416
        %1418 = vmatprep.mubr.bf16.mxu0 0
        %1419 = vmatmul.mubr.bf16.gmra.mxu0 %v1327
        %v1420 = vpop.f32.mrf.mxu0
        %v1421 = vadd.f32 %v1133, %v1420
        %v1422 = vpop.f32.mrf.mxu0
        %v1423 = vadd.f32 %v1133, %v1422
        %v1424 = vpop.f32.mrf.mxu0
        %v1425 = vadd.f32 %v1138, %v1424
        %v1426 = vpop.f32.mrf.mxu0
        %v1427 = vadd.f32 %v1138, %v1426
        %1428 = vmatprep.mubr.bf16.mxu0 0
        %1429 = vmatmul.mubr.bf16.gmra.mxu0 %v1328
        %v1430 = vpop.f32.mrf.mxu0
        %v1431 = vadd.f32 %v1143, %v1430
        %v1432 = vpop.f32.mrf.mxu0
        %v1433 = vadd.f32 %v1143, %v1432
        %v1434 = vpop.f32.mrf.mxu0
        %v1435 = vadd.f32 %v1148, %v1434
        %v1436 = vpop.f32.mrf.mxu0
        %v1437 = vadd.f32 %v1148, %v1436
        %1438 = vmatprep.mubr.bf16.mxu0 0
        %1439 = vmatmul.mubr.bf16.gmra.mxu0 %v1329
        %v1440 = vpop.f32.mrf.mxu0
        %v1441 = vadd.f32 %v1153, %v1440
        %v1442 = vpop.f32.mrf.mxu0
        %v1443 = vadd.f32 %v1153, %v1442
        %v1444 = vpop.f32.mrf.mxu0
        %v1445 = vadd.f32 %v1158, %v1444
        %v1446 = vpop.f32.mrf.mxu0
        %v1447 = vadd.f32 %v1158, %v1446
        %1448 = vmatprep.mubr.bf16.mxu0 0
        %1449 = vmatmul.mubr.bf16.gmra.mxu0 %v1330
        %v1450 = vpop.f32.mrf.mxu0
        %v1451 = vadd.f32 %v1163, %v1450
        %v1452 = vpop.f32.mrf.mxu0
        %v1453 = vadd.f32 %v1163, %v1452
        %v1454 = vpop.f32.mrf.mxu0
        %v1455 = vadd.f32 %v1168, %v1454
        %v1456 = vpop.f32.mrf.mxu0
        %v1457 = vadd.f32 %v1168, %v1456
        %1458 = vmatprep.mubr.bf16.mxu0 0
        %1459 = vmatmul.mubr.bf16.gmra.mxu0 %v1331
        %v1460 = vpop.f32.mrf.mxu0
        %v1461 = vadd.f32 %v1173, %v1460
        %v1462 = vpop.f32.mrf.mxu0
        %v1463 = vadd.f32 %v1173, %v1462
        %v1464 = vpop.f32.mrf.mxu0
        %v1465 = vadd.f32 %v1178, %v1464
        %v1466 = vpop.f32.mrf.mxu0
        %v1467 = vadd.f32 %v1178, %v1466
        %1468 = vmatprep.mubr.bf16.mxu0 0
        %1469 = vmatmul.mubr.bf16.gmra.mxu0 %v1332
        %v1470 = vpop.f32.mrf.mxu0
        %v1471 = vadd.f32 %v1183, %v1470
        %v1472 = vpop.f32.mrf.mxu0
        %v1473 = vadd.f32 %v1183, %v1472
        %v1474 = vpop.f32.mrf.mxu0
        %v1475 = vadd.f32 %v1188, %v1474
        %v1476 = vpop.f32.mrf.mxu0
        %v1477 = vadd.f32 %v1188, %v1476
        %1478 = vmatprep.mubr.bf16.mxu0 0
        %1479 = vmatmul.mubr.bf16.gmra.mxu0 %v1333
        %v1480 = vpop.f32.mrf.mxu0
        %v1481 = vadd.f32 %v1193, %v1480
        %v1482 = vpop.f32.mrf.mxu0
        %v1483 = vadd.f32 %v1193, %v1482
        %v1484 = vpop.f32.mrf.mxu0
        %v1485 = vadd.f32 %v1198, %v1484
        %v1486 = vpop.f32.mrf.mxu0
        %v1487 = vadd.f32 %v1198, %v1486
        %1488 = vmatprep.mubr.bf16.mxu0 0
        %1489 = vmatmul.mubr.bf16.gmra.mxu0 %v1334
        %v1490 = vpop.f32.mrf.mxu0
        %v1491 = vadd.f32 %v1203, %v1490
        %v1492 = vpop.f32.mrf.mxu0
        %v1493 = vadd.f32 %v1203, %v1492
        %v1494 = vpop.f32.mrf.mxu0
        %v1495 = vadd.f32 %v1208, %v1494
        %v1496 = vpop.f32.mrf.mxu0
        %v1497 = vadd.f32 %v1208, %v1496
        %1498 = vmatprep.mubr.bf16.mxu0 0
        %1499 = vmatmul.mubr.bf16.gmra.mxu0 %v1335
        %v1500 = vpop.f32.mrf.mxu0
        %v1501 = vadd.f32 %v1213, %v1500
        %v1502 = vpop.f32.mrf.mxu0
        %v1503 = vadd.f32 %v1213, %v1502
        %v1504 = vpop.f32.mrf.mxu0
        %v1505 = vadd.f32 %v1218, %v1504
        %v1506 = vpop.f32.mrf.mxu0
        %v1507 = vadd.f32 %v1218, %v1506
        %1508 = vmatprep.mubr.bf16.mxu0 0
        %1509 = vmatmul.mubr.bf16.gmra.mxu0 %v1336
        %v1510 = vpop.f32.mrf.mxu0
        %v1511 = vadd.f32 %v1223, %v1510
        %v1512 = vpop.f32.mrf.mxu0
        %v1513 = vadd.f32 %v1223, %v1512
        %v1514 = vpop.f32.mrf.mxu0
        %v1515 = vadd.f32 %v1228, %v1514
        %v1516 = vpop.f32.mrf.mxu0
        %v1517 = vadd.f32 %v1228, %v1516
        %1518 = vmatprep.mubr.bf16.mxu0 0
        %1519 = vmatmul.mubr.bf16.gmra.mxu0 %v1337
        %v1520 = vpop.f32.mrf.mxu0
        %v1521 = vadd.f32 %v1233, %v1520
        %v1522 = vpop.f32.mrf.mxu0
        %v1523 = vadd.f32 %v1233, %v1522
        %v1524 = vpop.f32.mrf.mxu0
        %v1525 = vadd.f32 %v1238, %v1524
        %v1526 = vpop.f32.mrf.mxu0
        %v1527 = vadd.f32 %v1238, %v1526
        %1528 = vmatprep.mubr.bf16.mxu0 0
        %1529 = vmatmul.mubr.bf16.gmra.mxu0 %v1338
        %v1530 = vpop.f32.mrf.mxu0
        %v1531 = vadd.f32 %v1243, %v1530
        %v1532 = vpop.f32.mrf.mxu0
        %v1533 = vadd.f32 %v1243, %v1532
        %v1534 = vpop.f32.mrf.mxu0
        %v1535 = vadd.f32 %v1248, %v1534
        %v1536 = vpop.f32.mrf.mxu0
        %v1537 = vadd.f32 %v1248, %v1536
        %1538 = vmatprep.mubr.bf16.mxu0 0
        %1539 = vmatmul.mubr.bf16.gmra.mxu0 %v1339
        %v1540 = vpop.f32.mrf.mxu0
        %v1541 = vadd.f32 %v1253, %v1540
        %v1542 = vpop.f32.mrf.mxu0
        %v1543 = vadd.f32 %v1253, %v1542
        %v1544 = vpop.f32.mrf.mxu0
        %v1545 = vadd.f32 %v1258, %v1544
        %v1546 = vpop.f32.mrf.mxu0
        %v1547 = vadd.f32 %v1258, %v1546
        %1548 = vdwg.mxu0
        %v1549 = vpack.c.bf16 %v1395, %v1391
        %v1550 = vpack.c.bf16 %v1397, %v1393
        %v1551 = vpack.c.bf16 %v1405, %v1401
        %v1552 = vpack.c.bf16 %v1407, %v1403
        %v1553 = vpack.c.bf16 %v1415, %v1411
        %v1554 = vpack.c.bf16 %v1417, %v1413
        %v1555 = vpack.c.bf16 %v1425, %v1421
        %v1556 = vpack.c.bf16 %v1427, %v1423
        %v1557 = vpack.c.bf16 %v1435, %v1431
        %v1558 = vpack.c.bf16 %v1437, %v1433
        %v1559 = vpack.c.bf16 %v1445, %v1441
        %v1560 = vpack.c.bf16 %v1447, %v1443
        %v1561 = vpack.c.bf16 %v1455, %v1451
        %v1562 = vpack.c.bf16 %v1457, %v1453
        %v1563 = vpack.c.bf16 %v1465, %v1461
        %v1564 = vpack.c.bf16 %v1467, %v1463
        %v1565 = vpack.c.bf16 %v1475, %v1471
        %v1566 = vpack.c.bf16 %v1477, %v1473
        %v1567 = vpack.c.bf16 %v1485, %v1481
        %v1568 = vpack.c.bf16 %v1487, %v1483
        %v1569 = vpack.c.bf16 %v1495, %v1491
        %v1570 = vpack.c.bf16 %v1497, %v1493
        %v1571 = vpack.c.bf16 %v1505, %v1501
        %v1572 = vpack.c.bf16 %v1507, %v1503
        %v1573 = vpack.c.bf16 %v1515, %v1511
        %v1574 = vpack.c.bf16 %v1517, %v1513
        %v1575 = vpack.c.bf16 %v1525, %v1521
        %v1576 = vpack.c.bf16 %v1527, %v1523
        %v1577 = vpack.c.bf16 %v1535, %v1531
        %v1578 = vpack.c.bf16 %v1537, %v1533
        %v1579 = vpack.c.bf16 %v1545, %v1541
        %v1580 = vpack.c.bf16 %v1547, %v1543
        %v1613 = vunpack.c.l.b16 %v1549
        %v1614 = vunpack.c.l.b16 %v1550
        %v1615 = vunpack.c.h.b16 %v1549
        %v1616 = vunpack.c.h.b16 %v1550
        %v1617 = vunpack.c.l.b16 %v1551
        %v1618 = vunpack.c.l.b16 %v1552
        %v1619 = vunpack.c.h.b16 %v1551
        %v1620 = vunpack.c.h.b16 %v1552
        %v1621 = vunpack.c.l.b16 %v1553
        %v1622 = vunpack.c.l.b16 %v1554
        %v1623 = vunpack.c.h.b16 %v1553
        %v1624 = vunpack.c.h.b16 %v1554
        %v1625 = vunpack.c.l.b16 %v1555
        %v1626 = vunpack.c.l.b16 %v1556
        %v1627 = vunpack.c.h.b16 %v1555
        %v1628 = vunpack.c.h.b16 %v1556
        %v1629 = vunpack.c.l.b16 %v1557
        %v1630 = vunpack.c.l.b16 %v1558
        %v1631 = vunpack.c.h.b16 %v1557
        %v1632 = vunpack.c.h.b16 %v1558
        %v1633 = vunpack.c.l.b16 %v1559
        %v1634 = vunpack.c.l.b16 %v1560
        %v1635 = vunpack.c.h.b16 %v1559
        %v1636 = vunpack.c.h.b16 %v1560
        %v1637 = vunpack.c.l.b16 %v1561
        %v1638 = vunpack.c.l.b16 %v1562
        %v1639 = vunpack.c.h.b16 %v1561
        %v1640 = vunpack.c.h.b16 %v1562
        %v1641 = vunpack.c.l.b16 %v1563
        %v1642 = vunpack.c.l.b16 %v1564
        %v1643 = vunpack.c.h.b16 %v1563
        %v1644 = vunpack.c.h.b16 %v1564
        %v1645 = vunpack.c.l.b16 %v1565
        %v1646 = vunpack.c.l.b16 %v1566
        %v1647 = vunpack.c.h.b16 %v1565
        %v1648 = vunpack.c.h.b16 %v1566
        %v1649 = vunpack.c.l.b16 %v1567
        %v1650 = vunpack.c.l.b16 %v1568
        %v1651 = vunpack.c.h.b16 %v1567
        %v1652 = vunpack.c.h.b16 %v1568
        %v1653 = vunpack.c.l.b16 %v1569
        %v1654 = vunpack.c.l.b16 %v1570
        %v1655 = vunpack.c.h.b16 %v1569
        %v1656 = vunpack.c.h.b16 %v1570
        %v1657 = vunpack.c.l.b16 %v1571
        %v1658 = vunpack.c.l.b16 %v1572
        %v1659 = vunpack.c.h.b16 %v1571
        %v1660 = vunpack.c.h.b16 %v1572
        %v1661 = vunpack.c.l.b16 %v1573
        %v1662 = vunpack.c.l.b16 %v1574
        %v1663 = vunpack.c.h.b16 %v1573
        %v1664 = vunpack.c.h.b16 %v1574
        %v1665 = vunpack.c.l.b16 %v1575
        %v1666 = vunpack.c.l.b16 %v1576
        %v1667 = vunpack.c.h.b16 %v1575
        %v1668 = vunpack.c.h.b16 %v1576
        %v1669 = vunpack.c.l.b16 %v1577
        %v1670 = vunpack.c.l.b16 %v1578
        %v1671 = vunpack.c.h.b16 %v1577
        %v1672 = vunpack.c.h.b16 %v1578
        %v1673 = vunpack.c.l.b16 %v1579
        %v1674 = vunpack.c.l.b16 %v1580
        %v1675 = vunpack.c.h.b16 %v1579
        %v1676 = vunpack.c.h.b16 %v1580
        %v1677 = vpack.c.b16 %v1614, %v1613
        %v1678 = vpack.c.b16 %v1616, %v1615
        %v1679 = vpack.c.b16 %v1618, %v1617
        %v1680 = vpack.c.b16 %v1620, %v1619
        %v1681 = vpack.c.b16 %v1622, %v1621
        %v1682 = vpack.c.b16 %v1624, %v1623
        %v1683 = vpack.c.b16 %v1626, %v1625
        %v1684 = vpack.c.b16 %v1628, %v1627
        %v1685 = vpack.c.b16 %v1630, %v1629
        %v1686 = vpack.c.b16 %v1632, %v1631
        %v1687 = vpack.c.b16 %v1634, %v1633
        %v1688 = vpack.c.b16 %v1636, %v1635
        %v1689 = vpack.c.b16 %v1638, %v1637
        %v1690 = vpack.c.b16 %v1640, %v1639
        %v1691 = vpack.c.b16 %v1642, %v1641
        %v1692 = vpack.c.b16 %v1644, %v1643
        %v1693 = vpack.c.b16 %v1646, %v1645
        %v1694 = vpack.c.b16 %v1648, %v1647
        %v1695 = vpack.c.b16 %v1650, %v1649
        %v1696 = vpack.c.b16 %v1652, %v1651
        %v1697 = vpack.c.b16 %v1654, %v1653
        %v1698 = vpack.c.b16 %v1656, %v1655
        %v1699 = vpack.c.b16 %v1658, %v1657
        %v1700 = vpack.c.b16 %v1660, %v1659
        %v1701 = vpack.c.b16 %v1662, %v1661
        %v1702 = vpack.c.b16 %v1664, %v1663
        %v1703 = vpack.c.b16 %v1666, %v1665
        %v1704 = vpack.c.b16 %v1668, %v1667
        %v1705 = vpack.c.b16 %v1670, %v1669
        %v1706 = vpack.c.b16 %v1672, %v1671
        %v1707 = vpack.c.b16 %v1674, %v1673
        %v1708 = vpack.c.b16 %v1676, %v1675
        %1741 = vst [vmem:[%s257] sm:$0xff] %v1677
        %1742 = vst [vmem:[%s257 + $0x8] sm:$0xff] %v1678
        %1743 = vst [vmem:[%s257 + $0x10] sm:$0xff] %v1679
        %1744 = vst [vmem:[%s257 + $0x18] sm:$0xff] %v1680
        %1745 = vst [vmem:[%s257 + $0x20] sm:$0xff] %v1681
        %1746 = vst [vmem:[%s257 + $0x28] sm:$0xff] %v1682
        %1747 = vst [vmem:[%s257 + $0x30] sm:$0xff] %v1683
        %1748 = vst [vmem:[%s257 + $0x38] sm:$0xff] %v1684
        %1749 = vst [vmem:[%s257 + $0x40] sm:$0xff] %v1685
        %1750 = vst [vmem:[%s257 + $0x48] sm:$0xff] %v1686
        %1751 = vst [vmem:[%s257 + $0x50] sm:$0xff] %v1687
        %1752 = vst [vmem:[%s257 + $0x58] sm:$0xff] %v1688
        %1753 = vst [vmem:[%s257 + $0x60] sm:$0xff] %v1689
        %1754 = vst [vmem:[%s257 + $0x68] sm:$0xff] %v1690
        %1755 = vst [vmem:[%s257 + $0x70] sm:$0xff] %v1691
        %1756 = vst [vmem:[%s257 + $0x78] sm:$0xff] %v1692
        %1757 = vst [vmem:[%s257 + $0x80] sm:$0xff] %v1693
        %1758 = vst [vmem:[%s257 + $0x88] sm:$0xff] %v1694
        %1759 = vst [vmem:[%s257 + $0x90] sm:$0xff] %v1695
        %1760 = vst [vmem:[%s257 + $0x98] sm:$0xff] %v1696
        %1761 = vst [vmem:[%s257 + $0xa0] sm:$0xff] %v1697
        %1762 = vst [vmem:[%s257 + $0xa8] sm:$0xff] %v1698
        %1763 = vst [vmem:[%s257 + $0xb0] sm:$0xff] %v1699
        %1764 = vst [vmem:[%s257 + $0xb8] sm:$0xff] %v1700
        %1765 = vst [vmem:[%s257 + $0xc0] sm:$0xff] %v1701
        %1766 = vst [vmem:[%s257 + $0xc8] sm:$0xff] %v1702
        %1767 = vst [vmem:[%s257 + $0xd0] sm:$0xff] %v1703
        %1768 = vst [vmem:[%s257 + $0xd8] sm:$0xff] %v1704
        %1769 = vst [vmem:[%s257 + $0xe0] sm:$0xff] %v1705
        %1770 = vst [vmem:[%s257 + $0xe8] sm:$0xff] %v1706
        %1771 = vst [vmem:[%s257 + $0xf0] sm:$0xff] %v1707
        %1772 = vst [vmem:[%s257 + $0xf8] sm:$0xff] %v1708
        %s1773 = sand.u32 %s154, 1
        %s1774 = scalar_lea.sflag [#allocation4], %s1773
        %s1775 = sand.u32 %s154, 1
        %s1776 = smul.addr %s1775, 256
        %s1777 = scalar_lea.vmem [#allocation5], %s1776
        // Predicated region
        $region45: #{tpu_custom_call.1} parent=39 // pred_check
          %p1778 = pneg %p164
        $region46: #{tpu_custom_call.1} parent=39 // pred_check_branch
          %1780 = sbr.rel (%p1778) target = $region48
        $region47: #{tpu_custom_call.1} parent=39 // pred_region
          %s1781 = smul.u32 2, %s25
          %s1783 = ssub.s32 4096, 4096
          %1784 = vsyncadd %s1774, %s1783
          %s1785 = smul.addr %s24, 64
          %s1786 = sadd.s32 %s1781, %s1785
          %s1787 = smul.addr %s1786, 64
          %s1788 = scalar_lea.hbm %s5, %s1787
          %s1789 = sshll.u32 %s1777, 4
          %s1790 = int_to_ptr.vmem [resolvable:$true] %s1789
          %1795 = dma.vmem_to_hbm [thread:$0]  %s1790, 4096, %s1788, %s1774, 128, 128, 8
        $region48: #{tpu_custom_call.1} parent=39 // pred_fallthru
          _
      $region40: #{tpu_custom_call.1} parent=5 // pred_fallthru
        _
      %p1796 = scmp.le.s32.totalorder 2, %s15
      // Predicated region
      $region49: #{tpu_custom_call.1} parent=5 // pred_check
        %p1797 = pneg %p1796
      $region50: #{tpu_custom_call.1} parent=5 // pred_check_branch
        %1799 = sbr.rel (%p1797) target = $region52
      $region51: #{tpu_custom_call.1} parent=5 // pred_region
        %s1800 = ssub.s32 %s15, 2
        // Predicated region
        $region53: #{tpu_custom_call.1} parent=51 // pred_check
          %p1801 = pneg %p170
        $region54: #{tpu_custom_call.1} parent=51 // pred_check_branch
          %1803 = sbr.rel (%p1801) target = $region56
        $region55: #{tpu_custom_call.1} parent=51 // pred_region
          %s1804 = sand.u32 %s155, 1
          %s1805 = scalar_lea.sflag [#allocation4], %s1804
          %s1806 = sand.u32 %s155, 1
          %s1807 = smul.addr %s1806, 256
          %s1808 = scalar_lea.vmem [#allocation5], %s1807
          %1809 = dma.done %s1805, 4096
        $region56: #{tpu_custom_call.1} parent=51 // pred_fallthru
          _
      $region52: #{tpu_custom_call.1} parent=5 // pred_fallthru
        _
    $region6: #{tpu_custom_call.1} parent=1 // loop_footer
      %s19 = sadd.s32 1, %s15
    $region7: #{tpu_custom_call.1} parent=1 // loop_footer_branch
      %14 = sbr.rel target = $region3
    $region8: #{tpu_custom_call.1} parent=1 // loop_exit
      _
    %1810 = vsyncpa [#allocation3], 1
    %s1811 = scalar_lea.sflag [#allocation3], 1
    %1812 = vsyncpa %s1811, 1
    %1813 = vsyncpa [#allocation4], 1
    %s1814 = scalar_lea.sflag [#allocation4], 1
    %1815 = vsyncpa %s1814, 1

// kernel: tpu_custom_call.1
$region0: #{tpu_custom_call.1}
  #allocation0 [shape = 'u32[]', space=smem, size = 0x4, offset = 0x4, fixed_abs, tag = 'smem constant byte address 0x4 - core index']
  #allocation1 [shape = 'u32[144,128]{1,0:T(1,128)}', space=vmem, size = 0x12000, scoped, tag = 'internal scratch']
  %s0 = inlined_call_operand.vmem [shape: bf16[2,128,256], index: 0, kind: input, shape index: {}]
  %s1 = inlined_call_operand.hbm [shape: bf16[128,128], index: 1, kind: input, shape index: {}]
  %s2 = inlined_call_operand.vmem [shape: bf16[256,128], index: 2, kind: input, shape index: {}]
  %s3 = inlined_call_operand.vmem [shape: f32[128,8], index: 3, kind: input, shape index: {}]
  %s4 = inlined_call_operand.vmem [shape: f32[256,1], index: 4, kind: input, shape index: {}]
  %s5 = inlined_call_operand.hbm [shape: bf16[2,256,256], index: 5, kind: output, shape index: {}]
  %s6 = sld [smem:[#allocation0]]
  $region57: #{tpu_custom_call.1} parent=0
    _
  %s8 = ssub.s32 1, %s6
  %s9 = scalar_select 0, %s8, %s6
  $region1: #{tpu_custom_call.1} parent=0
    #allocation2 [shape = 'u8[32768]{0}', space=vmem, size = 0x8000, scoped, tag = 'input window, operand 1, single buffered']
    #allocation3 [shape = 's32[2]{0}', space=sflag, size = 0x8, scoped, tag = 'scoped memory for tpu_custom_call.1']
    #allocation4 [shape = 's32[2]{0}', space=sflag, size = 0x8, scoped, tag = 'scoped memory for tpu_custom_call.1']
    #allocation5 [shape = 'u8[262144]{0}', space=vmem, size = 0x40000, scoped, tag = 'output window, operand 0']
    %10 = vsyncpa [#allocation3], 0
    %11 = vsyncpa [#allocation4], 0
    %s12 = scalar_lea.sflag [#allocation4], 1
    %13 = vsyncpa %s12, 0
    loop: start=0, step=1, limit=4
    $region2: #{tpu_custom_call.1} parent=1 // loop_pre_header
      _
    $region3: #{tpu_custom_call.1} parent=1 // loop_header
      %s15 = sphi 0, %s19
      %p16 = scmp.ge.s32.totalorder %s15, 4
      %s22 = sphi 0, %s34
      %s23 = sphi 0, %s30
      %s24 = sphi 0, %s22
      %s25 = sphi 0, %s23
      %s26 = sphi 0, %s24
      %s27 = sphi 0, %s25
      %s39 = sphi 0, %s41
      %s42 = sphi 0, %s39
      %s43 = sphi 0, %s42
      %s59 = sphi 0, %s43
      %s63 = sphi 0, %s63
      %s65 = sphi 0, %s63
      %s66 = sphi 0, %s65
      %s80 = sphi 0, %s66
      %s84 = sphi 0, %s84
      %s86 = sphi 0, %s84
      %s87 = sphi 0, %s86
      %s101 = sphi 0, %s87
      %s105 = sphi 0, %s105
      %s107 = sphi 0, %s105
      %s108 = sphi 0, %s107
      %s122 = sphi 0, %s108
      %s126 = sphi 0, %s126
      %s128 = sphi 0, %s126
      %s129 = sphi 0, %s128
      %s143 = sphi 0, %s129
      %s151 = sphi 0, %s153
      %s154 = sphi 0, %s151
      %s155 = sphi 0, %s154
      %s171 = sphi 0, %s155
    $region4: #{tpu_custom_call.1} parent=1 // loop_header_branch
      %18 = sbr.rel (%p16) target = $region8
    $region5: #{tpu_custom_call.1} parent=1 // loop_body
      %s20 = ssub.s32 %s15, 1
      %s21 = ssub.s32 %s15, 2
      %s28 = sadd.s32 1, %s23
      %p29 = scmp.ge.s32.totalorder %s28, 1
      %s30 = scalar_select %p29, 0, %s28
      %s31 = sadd.s32 1, %s22
      %s32 = scalar_select %p29, %s31, %s22
      %p33 = scmp.ge.s32.totalorder %s32, 2
      %s34 = scalar_select %p33, 0, %s32
      %s35 = ssub.s32 %s22, %s34
      %s36 = ssub.s32 %s23, %s30
      %s37 = sor.u32 %s35, %s36
      %p38 = scmp.eq.s32.totalorder %s37, 0
      %s40 = sadd.s32 %s39, 1
      %s41 = scalar_select %p38, %s39, %s40
      %p44 = pneg %p38
      %p45 = scmp.eq.s32.totalorder %s15, 1
      %p46 = por %p44, %p45
      %p47 = scmp.ne.s32.totalorder %s39, %s42
      %p48 = scmp.eq.s32.totalorder %s15, 0
      %p49 = por %p47, %p48
      %p50 = scmp.ne.s32.totalorder %s39, %s42
      %p51 = scmp.eq.s32.totalorder %s20, 1
      %p52 = por %p50, %p51
      %p53 = scmp.ne.s32.totalorder %s42, %s43
      %p54 = scmp.eq.s32.totalorder %s20, 0
      %p55 = por %p53, %p54
      %p56 = scmp.ne.s32.totalorder %s42, %s43
      %p57 = scmp.eq.s32.totalorder %s21, 1
      %p58 = por %p56, %p57
      %p60 = scmp.ne.s32.totalorder %s43, %s59
      %p61 = scmp.eq.s32.totalorder %s21, 0
      %p62 = por %p60, %p61
      %s64 = sadd.s32 %s63, 1
      %p67 = scmp.eq.s32.totalorder %s15, 1
      %p68 = scmp.ne.s32.totalorder %s63, %s65
      %p69 = scmp.eq.s32.totalorder %s15, 0
      %p70 = por %p68, %p69
      %p71 = scmp.ne.s32.totalorder %s63, %s65
      %p72 = scmp.eq.s32.totalorder %s20, 1
      %p73 = por %p71, %p72
      %p74 = scmp.ne.s32.totalorder %s65, %s66
      %p75 = scmp.eq.s32.totalorder %s20, 0
      %p76 = por %p74, %p75
      %p77 = scmp.ne.s32.totalorder %s65, %s66
      %p78 = scmp.eq.s32.totalorder %s21, 1
      %p79 = por %p77, %p78
      %p81 = scmp.ne.s32.totalorder %s66, %s80
      %p82 = scmp.eq.s32.totalorder %s21, 0
      %p83 = por %p81, %p82
      %s85 = sadd.s32 %s84, 1
      %p88 = scmp.eq.s32.totalorder %s15, 1
      %p89 = scmp.ne.s32.totalorder %s84, %s86
      %p90 = scmp.eq.s32.totalorder %s15, 0
      %p91 = por %p89, %p90
      %p92 = scmp.ne.s32.totalorder %s84, %s86
      %p93 = scmp.eq.s32.totalorder %s20, 1
      %p94 = por %p92, %p93
      %p95 = scmp.ne.s32.totalorder %s86, %s87
      %p96 = scmp.eq.s32.totalorder %s20, 0
      %p97 = por %p95, %p96
      %p98 = scmp.ne.s32.totalorder %s86, %s87
      %p99 = scmp.eq.s32.totalorder %s21, 1
      %p100 = por %p98, %p99
      %p102 = scmp.ne.s32.totalorder %s87, %s101
      %p103 = scmp.eq.s32.totalorder %s21, 0
      %p104 = por %p102, %p103
      %s106 = sadd.s32 %s105, 1
      %p109 = scmp.eq.s32.totalorder %s15, 1
      %p110 = scmp.ne.s32.totalorder %s105, %s107
      %p111 = scmp.eq.s32.totalorder %s15, 0
      %p112 = por %p110, %p111
      %p113 = scmp.ne.s32.totalorder %s105, %s107
      %p114 = scmp.eq.s32.totalorder %s20, 1
      %p115 = por %p113, %p114
      %p116 = scmp.ne.s32.totalorder %s107, %s108
      %p117 = scmp.eq.s32.totalorder %s20, 0
      %p118 = por %p116, %p117
      %p119 = scmp.ne.s32.totalorder %s107, %s108
      %p120 = scmp.eq.s32.totalorder %s21, 1
      %p121 = por %p119, %p120
      %p123 = scmp.ne.s32.totalorder %s108, %s122
      %p124 = scmp.eq.s32.totalorder %s21, 0
      %p125 = por %p123, %p124
      %s127 = sadd.s32 %s126, 1
      %p130 = scmp.eq.s32.totalorder %s15, 1
      %p131 = scmp.ne.s32.totalorder %s126, %s128
      %p132 = scmp.eq.s32.totalorder %s15, 0
      %p133 = por %p131, %p132
      %p134 = scmp.ne.s32.totalorder %s126, %s128
      %p135 = scmp.eq.s32.totalorder %s20, 1
      %p136 = por %p134, %p135
      %p137 = scmp.ne.s32.totalorder %s128, %s129
      %p138 = scmp.eq.s32.totalorder %s20, 0
      %p139 = por %p137, %p138
      %p140 = scmp.ne.s32.totalorder %s128, %s129
      %p141 = scmp.eq.s32.totalorder %s21, 1
      %p142 = por %p140, %p141
      %p144 = scmp.ne.s32.totalorder %s129, %s143
      %p145 = scmp.eq.s32.totalorder %s21, 0
      %p146 = por %p144, %p145
      %s147 = ssub.s32 %s22, %s34
      %s148 = ssub.s32 %s23, %s30
      %s149 = sor.u32 %s147, %s148
      %p150 = scmp.eq.s32.totalorder %s149, 0
      %s152 = sadd.s32 %s151, 1
      %s153 = scalar_select %p150, %s151, %s152
      %p156 = pneg %p150
      %p157 = scmp.eq.s32.totalorder %s15, 1
      %p158 = por %p156, %p157
      %p159 = scmp.ne.s32.totalorder %s151, %s154
      %p160 = scmp.eq.s32.totalorder %s15, 0
      %p161 = por %p159, %p160
      %p162 = scmp.ne.s32.totalorder %s151, %s154
      %p163 = scmp.eq.s32.totalorder %s20, 1
      %p164 = por %p162, %p163
      %p165 = scmp.ne.s32.totalorder %s154, %s155
      %p166 = scmp.eq.s32.totalorder %s20, 0
      %p167 = por %p165, %p166
      %p168 = scmp.ne.s32.totalorder %s154, %s155
      %p169 = scmp.eq.s32.totalorder %s21, 1
      %p170 = por %p168, %p169
      %p172 = scmp.ne.s32.totalorder %s155, %s171
      %p173 = scmp.eq.s32.totalorder %s21, 0
      %p174 = por %p172, %p173
      %p175 = scmp.le.s32.totalorder 1, %s15
      %p176 = scmp.lt.s32.totalorder %s15, 3
      %p177 = pnand %p175, %p176
      %p178 = pneg %p177
      // Predicated region
      $region9: #{tpu_custom_call.1} parent=5 // pred_check
        _
      $region10: #{tpu_custom_call.1} parent=5 // pred_check_branch
        %180 = sbr.rel (%p177) target = $region12
      $region11: #{tpu_custom_call.1} parent=5 // pred_region
        %s181 = ssub.s32 %s15, 1
        // Predicated region
        $region13: #{tpu_custom_call.1} parent=11 // pred_check
          %p182 = pneg %p76
        $region14: #{tpu_custom_call.1} parent=11 // pred_check_branch
          %184 = sbr.rel (%p182) target = $region16
        $region15: #{tpu_custom_call.1} parent=11 // pred_region
          %s186 = ssub.s32 1024, 1024
          %187 = vsyncadd [#allocation3], %s186
          %s188 = sshll.u32 [#allocation2], 4
          %s189 = int_to_ptr.vmem [resolvable:$true] %s188
          %194 = dma.hbm_to_vmem [thread:$0]  %s1, 1024, %s189, [#allocation3], 64, 64, 4
        $region16: #{tpu_custom_call.1} parent=11 // pred_fallthru
          _
        // Predicated region
        $region17: #{tpu_custom_call.1} parent=11 // pred_check
          %p195 = pneg %p97
        $region18: #{tpu_custom_call.1} parent=11 // pred_check_branch
          %197 = sbr.rel (%p195) target = $region20
        $region19: #{tpu_custom_call.1} parent=11 // pred_region
          _
        $region20: #{tpu_custom_call.1} parent=11 // pred_fallthru
          _
        // Predicated region
        $region21: #{tpu_custom_call.1} parent=11 // pred_check
          %p198 = pneg %p118
        $region22: #{tpu_custom_call.1} parent=11 // pred_check_branch
          %200 = sbr.rel (%p198) target = $region24
        $region23: #{tpu_custom_call.1} parent=11 // pred_region
          _
        $region24: #{tpu_custom_call.1} parent=11 // pred_fallthru
          _
        // Predicated region
        $region25: #{tpu_custom_call.1} parent=11 // pred_check
          %p201 = pneg %p139
        $region26: #{tpu_custom_call.1} parent=11 // pred_check_branch
          %203 = sbr.rel (%p201) target = $region28
        $region27: #{tpu_custom_call.1} parent=11 // pred_region
          _
        $region28: #{tpu_custom_call.1} parent=11 // pred_fallthru
          _
      $region12: #{tpu_custom_call.1} parent=5 // pred_fallthru
        _
      %p204 = scmp.lt.s32.totalorder %s15, 2
      // Predicated region
      $region29: #{tpu_custom_call.1} parent=5 // pred_check
        %p205 = pneg %p204
      $region30: #{tpu_custom_call.1} parent=5 // pred_check_branch
        %207 = sbr.rel (%p205) target = $region32
      $region31: #{tpu_custom_call.1} parent=5 // pred_region
        // Predicated region
        $region33: #{tpu_custom_call.1} parent=31 // pred_check
          %p208 = pneg %p49
        $region34: #{tpu_custom_call.1} parent=31 // pred_check_branch
          %210 = sbr.rel (%p208) target = $region36
        $region35: #{tpu_custom_call.1} parent=31 // pred_region
          %s211 = smul.u32 2, %s23
          %p212 = scmp.lt.s32.totalorder %s22, 1
          %s213 = scalar_select %p212, %s22, 1
          %p214 = scmp.lt.s32.totalorder %s211, 1
          %s215 = scalar_select %p214, %s211, 1
          %s216 = smul.addr %s213, 32
          %s217 = sadd.s32 %s215, %s216
          %s218 = smul.addr %s217, 4
          %s219 = scalar_lea.vmem %s0, %s218
          %s220 = smul.u32 2, %s23
        $region36: #{tpu_custom_call.1} parent=31 // pred_fallthru
          _
      $region32: #{tpu_custom_call.1} parent=5 // pred_fallthru
        _
      %p221 = scmp.le.s32.totalorder 1, %s15
      %p222 = scmp.lt.s32.totalorder %s15, 3
      %p223 = pnand %p221, %p222
      %p224 = pneg %p223
      // Predicated region
      $region37: #{tpu_custom_call.1} parent=5 // pred_check
        _
      $region38: #{tpu_custom_call.1} parent=5 // pred_check_branch
        %226 = sbr.rel (%p223) target = $region40
      $region39: #{tpu_custom_call.1} parent=5 // pred_region
        %s227 = ssub.s32 %s15, 1
        // Predicated region
        $region41: #{tpu_custom_call.1} parent=39 // pred_check
          %p228 = pneg %p76
        $region42: #{tpu_custom_call.1} parent=39 // pred_check_branch
          %230 = sbr.rel (%p228) target = $region44
        $region43: #{tpu_custom_call.1} parent=39 // pred_region
          %231 = dma.done [#allocation3], 1024
        $region44: #{tpu_custom_call.1} parent=39 // pred_fallthru
          _
        %s232 = smul.u32 2, %s25
        %p233 = scmp.lt.s32.totalorder %s24, 1
        %s234 = scalar_select %p233, %s24, 1
        %p235 = scmp.lt.s32.totalorder %s232, 1
        %s236 = scalar_select %p235, %s232, 1
        %s237 = smul.addr %s234, 32
        %s238 = sadd.s32 %s236, %s237
        %s239 = smul.addr %s238, 4
        %s240 = scalar_lea.vmem %s0, %s239
        %p241 = pneg %p55
        %p242 = pneg %p52
        %p243 = pneg %p76
        %p244 = pneg %p73
        %p245 = pneg %p97
        %p246 = pneg %p94
        %p247 = pneg %p118
        %p248 = pneg %p115
        %p249 = pneg %p139
        %p250 = pneg %p136
        %p251 = pneg %p167
        %p252 = pneg %p164
        %s253 = sand.u32 %s154, 1
        %s254 = scalar_lea.sflag [#allocation4], %s253
        %s255 = sand.u32 %s154, 1
        %s256 = smul.addr %s255, 256
        %s257 = scalar_lea.vmem [#allocation5], %s256
        %s258 = smul.u32 2, %s25
        %p259 = scmp.lt.s32.totalorder %s24, 1
        %s260 = scalar_select %p259, %s24, 1
        %p261 = scmp.lt.s32.totalorder %s258, 1
        %s262 = scalar_select %p261, %s258, 1
        %s263 = smul.addr %s260, 32
        %s264 = sadd.s32 %s262, %s263
        %s265 = smul.addr %s264, 4
        %s266 = scalar_lea.vmem %s0, %s265
        %s267 = smul.u32 2, %s25
        %s268 = smul.u32 2, %s25
        %v270 = vld [vmem:[%s3] sm:$0xff]
        %v271 = vld [vmem:[%s3 + $0x8] sm:$0xff]
        %v272 = vld [vmem:[%s3 + $0x10] sm:$0xff]
        %v273 = vld [vmem:[%s3 + $0x18] sm:$0xff]
        %v274 = vld [vmem:[%s3 + $0x20] sm:$0xff]
        %v275 = vld [vmem:[%s3 + $0x28] sm:$0xff]
        %v276 = vld [vmem:[%s3 + $0x30] sm:$0xff]
        %v277 = vld [vmem:[%s3 + $0x38] sm:$0xff]
        %v278 = vld [vmem:[%s3 + $0x40] sm:$0xff]
        %v279 = vld [vmem:[%s3 + $0x48] sm:$0xff]
        %v280 = vld [vmem:[%s3 + $0x50] sm:$0xff]
        %v281 = vld [vmem:[%s3 + $0x58] sm:$0xff]
        %v282 = vld [vmem:[%s3 + $0x60] sm:$0xff]
        %v283 = vld [vmem:[%s3 + $0x68] sm:$0xff]
        %v284 = vld [vmem:[%s3 + $0x70] sm:$0xff]
        %v285 = vld [vmem:[%s3 + $0x78] sm:$0xff]
        %v286 = vld [vmem:[%s266] sm:$0xff]
        %v287 = vld [vmem:[%s266 + $0x8] sm:$0xff]
        %v288 = vld [vmem:[%s266 + $0x10] sm:$0xff]
        %v289 = vld [vmem:[%s266 + $0x18] sm:$0xff]
        %v290 = vld [vmem:[%s266 + $0x20] sm:$0xff]
        %v291 = vld [vmem:[%s266 + $0x28] sm:$0xff]
        %v292 = vld [vmem:[%s266 + $0x30] sm:$0xff]
        %v293 = vld [vmem:[%s266 + $0x38] sm:$0xff]
        %v294 = vld [vmem:[%s266 + $0x40] sm:$0xff]
        %v295 = vld [vmem:[%s266 + $0x48] sm:$0xff]
        %v296 = vld [vmem:[%s266 + $0x50] sm:$0xff]
        %v297 = vld [vmem:[%s266 + $0x58] sm:$0xff]
        %v298 = vld [vmem:[%s266 + $0x60] sm:$0xff]
        %v299 = vld [vmem:[%s266 + $0x68] sm:$0xff]
        %v300 = vld [vmem:[%s266 + $0x70] sm:$0xff]
        %v301 = vld [vmem:[%s266 + $0x78] sm:$0xff]
        %v302 = vld [vmem:[#allocation2] sm:$0xf]
        %v303 = vld [vmem:[#allocation2 + $0x4] sm:$0xf]
        %v304 = vld [vmem:[#allocation2 + $0x8] sm:$0xf]
        %v305 = vld [vmem:[#allocation2 + $0xc] sm:$0xf]
        %v306 = vld [vmem:[#allocation2 + $0x10] sm:$0xf]
        %v307 = vld [vmem:[#allocation2 + $0x14] sm:$0xf]
        %v308 = vld [vmem:[#allocation2 + $0x18] sm:$0xf]
        %v309 = vld [vmem:[#allocation2 + $0x1c] sm:$0xf]
        %v310 = vld [vmem:[#allocation2 + $0x20] sm:$0xf]
        %v311 = vld [vmem:[#allocation2 + $0x24] sm:$0xf]
        %v312 = vld [vmem:[#allocation2 + $0x28] sm:$0xf]
        %v313 = vld [vmem:[#allocation2 + $0x2c] sm:$0xf]
        %v314 = vld [vmem:[#allocation2 + $0x30] sm:$0xf]
        %v315 = vld [vmem:[#allocation2 + $0x34] sm:$0xf]
        %v316 = vld [vmem:[#allocation2 + $0x38] sm:$0xf]
        %v317 = vld [vmem:[#allocation2 + $0x3c] sm:$0xf]
        %319 = vset.pattern.permute.xlu0 0
        %320 = vperm.xlu0 %319, %v270
        %v321 = vpop.permute.xlu0 %320
        %324 = vset.pattern.permute.xlu0 0
        %325 = vperm.xlu0 %324, %v271
        %v326 = vpop.permute.xlu0 %325
        %329 = vset.pattern.permute.xlu0 0
        %330 = vperm.xlu0 %329, %v272
        %v331 = vpop.permute.xlu0 %330
        %334 = vset.pattern.permute.xlu0 0
        %335 = vperm.xlu0 %334, %v273
        %v336 = vpop.permute.xlu0 %335
        %339 = vset.pattern.permute.xlu0 0
        %340 = vperm.xlu0 %339, %v274
        %v341 = vpop.permute.xlu0 %340
        %344 = vset.pattern.permute.xlu0 0
        %345 = vperm.xlu0 %344, %v275
        %v346 = vpop.permute.xlu0 %345
        %349 = vset.pattern.permute.xlu0 0
        %350 = vperm.xlu0 %349, %v276
        %v351 = vpop.permute.xlu0 %350
        %354 = vset.pattern.permute.xlu0 0
        %355 = vperm.xlu0 %354, %v277
        %v356 = vpop.permute.xlu0 %355
        %359 = vset.pattern.permute.xlu0 0
        %360 = vperm.xlu0 %359, %v278
        %v361 = vpop.permute.xlu0 %360
        %364 = vset.pattern.permute.xlu0 0
        %365 = vperm.xlu0 %364, %v279
        %v366 = vpop.permute.xlu0 %365
        %369 = vset.pattern.permute.xlu0 0
        %370 = vperm.xlu0 %369, %v280
        %v371 = vpop.permute.xlu0 %370
        %374 = vset.pattern.permute.xlu0 0
        %375 = vperm.xlu0 %374, %v281
        %v376 = vpop.permute.xlu0 %375
        %379 = vset.pattern.permute.xlu0 0
        %380 = vperm.xlu0 %379, %v282
        %v381 = vpop.permute.xlu0 %380
        %384 = vset.pattern.permute.xlu0 0
        %385 = vperm.xlu0 %384, %v283
        %v386 = vpop.permute.xlu0 %385
        %389 = vset.pattern.permute.xlu0 0
        %390 = vperm.xlu0 %389, %v284
        %v391 = vpop.permute.xlu0 %390
        %394 = vset.pattern.permute.xlu0 0
        %395 = vperm.xlu0 %394, %v285
        %v396 = vpop.permute.xlu0 %395
        %v414 = vunpack.c.l.b16 %v302
        %v415 = vunpack.c.l.b16 %v303
        %v416 = vunpack.c.l.b16 %v304
        %v417 = vunpack.c.l.b16 %v305
        %v418 = vunpack.c.l.b16 %v306
        %v419 = vunpack.c.l.b16 %v307
        %v420 = vunpack.c.l.b16 %v308
        %v421 = vunpack.c.l.b16 %v309
        %v422 = vunpack.c.l.b16 %v310
        %v423 = vunpack.c.l.b16 %v311
        %v424 = vunpack.c.l.b16 %v312
        %v425 = vunpack.c.l.b16 %v313
        %v426 = vunpack.c.l.b16 %v314
        %v427 = vunpack.c.l.b16 %v315
        %v428 = vunpack.c.l.b16 %v316
        %v429 = vunpack.c.l.b16 %v317
        %v430 = vpack.c.b16 %v415, %v414
        %v431 = vpack.c.b16 %v417, %v416
        %v432 = vpack.c.b16 %v419, %v418
        %v433 = vpack.c.b16 %v421, %v420
        %v434 = vpack.c.b16 %v423, %v422
        %v435 = vpack.c.b16 %v425, %v424
        %v436 = vpack.c.b16 %v427, %v426
        %v437 = vpack.c.b16 %v429, %v428
        %v462 = vunpack.c.l.b16 %v286
        %v463 = vunpack.c.h.b16 %v286
        %v464 = vunpack.c.l.b16 %v287
        %v465 = vunpack.c.h.b16 %v287
        %v466 = vunpack.c.l.b16 %v288
        %v467 = vunpack.c.h.b16 %v288
        %v468 = vunpack.c.l.b16 %v289
        %v469 = vunpack.c.h.b16 %v289
        %v470 = vunpack.c.l.b16 %v290
        %v471 = vunpack.c.h.b16 %v290
        %v472 = vunpack.c.l.b16 %v291
        %v473 = vunpack.c.h.b16 %v291
        %v474 = vunpack.c.l.b16 %v292
        %v475 = vunpack.c.h.b16 %v292
        %v476 = vunpack.c.l.b16 %v293
        %v477 = vunpack.c.h.b16 %v293
        %v478 = vunpack.c.l.b16 %v294
        %v479 = vunpack.c.h.b16 %v294
        %v480 = vunpack.c.l.b16 %v295
        %v481 = vunpack.c.h.b16 %v295
        %v482 = vunpack.c.l.b16 %v296
        %v483 = vunpack.c.h.b16 %v296
        %v484 = vunpack.c.l.b16 %v297
        %v485 = vunpack.c.h.b16 %v297
        %v486 = vunpack.c.l.b16 %v298
        %v487 = vunpack.c.h.b16 %v298
        %v488 = vunpack.c.l.b16 %v299
        %v489 = vunpack.c.h.b16 %v299
        %v490 = vunpack.c.l.b16 %v300
        %v491 = vunpack.c.h.b16 %v300
        %v492 = vunpack.c.l.b16 %v301
        %v493 = vunpack.c.h.b16 %v301
        %v494 = vpack.c.b16 %v464, %v462
        %v495 = vpack.c.b16 %v465, %v463
        %v496 = vpack.c.b16 %v468, %v466
        %v497 = vpack.c.b16 %v469, %v467
        %v498 = vpack.c.b16 %v472, %v470
        %v499 = vpack.c.b16 %v473, %v471
        %v500 = vpack.c.b16 %v476, %v474
        %v501 = vpack.c.b16 %v477, %v475
        %v502 = vpack.c.b16 %v480, %v478
        %v503 = vpack.c.b16 %v481, %v479
        %v504 = vpack.c.b16 %v484, %v482
        %v505 = vpack.c.b16 %v485, %v483
        %v506 = vpack.c.b16 %v488, %v486
        %v507 = vpack.c.b16 %v489, %v487
        %v508 = vpack.c.b16 %v492, %v490
        %v509 = vpack.c.b16 %v493, %v491
        %526 = vmatprep.subr.bf16.mxu0 %v509
        %527 = vmatpush1.bf16.msra.mxu0 %v508
        %528 = vmatprep.subr.bf16.mxu0 %v507
        %529 = vmatpush1.bf16.msra.mxu0 %v506
        %530 = vmatprep.subr.bf16.mxu0 %v505
        %531 = vmatpush1.bf16.msra.mxu0 %v504
        %532 = vmatprep.subr.bf16.mxu0 %v503
        %533 = vmatpush1.bf16.msra.mxu0 %v502
        %534 = vmatprep.subr.bf16.mxu0 %v501
        %535 = vmatpush1.bf16.msra.mxu0 %v500
        %536 = vmatprep.subr.bf16.mxu0 %v499
        %537 = vmatpush1.bf16.msra.mxu0 %v498
        %538 = vmatprep.subr.bf16.mxu0 %v497
        %539 = vmatpush1.bf16.msra.mxu0 %v496
        %540 = vmatprep.subr.bf16.mxu0 %v495
        %541 = vmatpush1.bf16.msra.mxu0 %v494
        %542 = vmatprep.subr.bf16.mxu0 0
        %543 = vmatpush2.bf16.msra.mxu0 0
        %544 = vmatprep.subr.bf16.mxu0 0
        %545 = vmatpush2.bf16.msra.mxu0 0
        %546 = vmatprep.subr.bf16.mxu0 0
        %547 = vmatpush2.bf16.msra.mxu0 0
        %548 = vmatprep.subr.bf16.mxu0 0
        %549 = vmatpush2.bf16.msra.mxu0 0
        %550 = vmatprep.subr.bf16.mxu0 0
        %551 = vmatpush2.bf16.msra.mxu0 0
        %552 = vmatprep.subr.bf16.mxu0 0
        %553 = vmatpush2.bf16.msra.mxu0 0
        %554 = vmatprep.subr.bf16.mxu0 0
        %555 = vmatpush2.bf16.msra.mxu0 0
        %556 = vmatprep.subr.bf16.mxu0 0
        %557 = vmatpush2.bf16.msra.mxu0 0
        %558 = vmatprep.mubr.bf16.mxu0 0
        %559 = vmatmul.mubr.bf16.gmra.mxu0 %v430
        %v560 = vpop.f32.mrf.mxu0
        %v561 = vadd.f32 %v321, %v560
        %v562 = vpop.f32.mrf.mxu0
        %v563 = vadd.f32 %v321, %v562
        %v564 = vpop.f32.mrf.mxu0
        %v565 = vadd.f32 %v326, %v564
        %v566 = vpop.f32.mrf.mxu0
        %v567 = vadd.f32 %v326, %v566
        %568 = vmatprep.mubr.bf16.mxu0 0
        %569 = vmatmul.mubr.bf16.gmra.mxu0 %v431
        %v570 = vpop.f32.mrf.mxu0
        %v571 = vadd.f32 %v331, %v570
        %v572 = vpop.f32.mrf.mxu0
        %v573 = vadd.f32 %v331, %v572
        %v574 = vpop.f32.mrf.mxu0
        %v575 = vadd.f32 %v336, %v574
        %v576 = vpop.f32.mrf.mxu0
        %v577 = vadd.f32 %v336, %v576
        %578 = vmatprep.mubr.bf16.mxu0 0
        %579 = vmatmul.mubr.bf16.gmra.mxu0 %v432
        %v580 = vpop.f32.mrf.mxu0
        %v581 = vadd.f32 %v341, %v580
        %v582 = vpop.f32.mrf.mxu0
        %v583 = vadd.f32 %v341, %v582
        %v584 = vpop.f32.mrf.mxu0
        %v585 = vadd.f32 %v346, %v584
        %v586 = vpop.f32.mrf.mxu0
        %v587 = vadd.f32 %v346, %v586
        %588 = vmatprep.mubr.bf16.mxu0 0
        %589 = vmatmul.mubr.bf16.gmra.mxu0 %v433
        %v590 = vpop.f32.mrf.mxu0
        %v591 = vadd.f32 %v351, %v590
        %v592 = vpop.f32.mrf.mxu0
        %v593 = vadd.f32 %v351, %v592
        %v594 = vpop.f32.mrf.mxu0
        %v595 = vadd.f32 %v356, %v594
        %v596 = vpop.f32.mrf.mxu0
        %v597 = vadd.f32 %v356, %v596
        %598 = vmatprep.mubr.bf16.mxu0 0
        %599 = vmatmul.mubr.bf16.gmra.mxu0 %v434
        %v600 = vpop.f32.mrf.mxu0
        %v601 = vadd.f32 %v361, %v600
        %v602 = vpop.f32.mrf.mxu0
        %v603 = vadd.f32 %v361, %v602
        %v604 = vpop.f32.mrf.mxu0
        %v605 = vadd.f32 %v366, %v604
        %v606 = vpop.f32.mrf.mxu0
        %v607 = vadd.f32 %v366, %v606
        %608 = vmatprep.mubr.bf16.mxu0 0
        %609 = vmatmul.mubr.bf16.gmra.mxu0 %v435
        %v610 = vpop.f32.mrf.mxu0
        %v611 = vadd.f32 %v371, %v610
        %v612 = vpop.f32.mrf.mxu0
        %v613 = vadd.f32 %v371, %v612
        %v614 = vpop.f32.mrf.mxu0
        %v615 = vadd.f32 %v376, %v614
        %v616 = vpop.f32.mrf.mxu0
        %v617 = vadd.f32 %v376, %v616
        %618 = vmatprep.mubr.bf16.mxu0 0
        %619 = vmatmul.mubr.bf16.gmra.mxu0 %v436
        %v620 = vpop.f32.mrf.mxu0
        %v621 = vadd.f32 %v381, %v620
        %v622 = vpop.f32.mrf.mxu0
        %v623 = vadd.f32 %v381, %v622
        %v624 = vpop.f32.mrf.mxu0
        %v625 = vadd.f32 %v386, %v624
        %v626 = vpop.f32.mrf.mxu0
        %v627 = vadd.f32 %v386, %v626
        %628 = vmatprep.mubr.bf16.mxu0 0
        %629 = vmatmul.mubr.bf16.gmra.mxu0 %v437
        %v630 = vpop.f32.mrf.mxu0
        %v631 = vadd.f32 %v391, %v630
        %v632 = vpop.f32.mrf.mxu0
        %v633 = vadd.f32 %v391, %v632
        %v634 = vpop.f32.mrf.mxu0
        %v635 = vadd.f32 %v396, %v634
        %v636 = vpop.f32.mrf.mxu0
        %v637 = vadd.f32 %v396, %v636
        %638 = vdwg.mxu0
        %v639 = vadd.f32 %v561, %v565
        %v640 = vadd.f32 %v639, %v571
        %v641 = vadd.f32 %v640, %v575
        %v642 = vadd.f32 %v641, %v581
        %v643 = vadd.f32 %v642, %v585
        %v644 = vadd.f32 %v643, %v591
        %v645 = vadd.f32 %v644, %v595
        %v646 = vadd.f32 %v645, %v601
        %v647 = vadd.f32 %v646, %v605
        %v648 = vadd.f32 %v647, %v611
        %v649 = vadd.f32 %v648, %v615
        %v650 = vadd.f32 %v649, %v621
        %v651 = vadd.f32 %v650, %v625
        %v652 = vadd.f32 %v651, %v631
        %v653 = vadd.f32 %v652, %v635
        %v654 = vrot.slane %v653, 4
        %v655 = vadd.f32 %v653, %v654
        %v656 = vrot.slane %v655, 2
        %v657 = vadd.f32 %v655, %v656
        %v658 = vrot.slane %v657, 1
        %v659 = vadd.f32 %v657, %v658
        %v660 = vadd.f32 %v563, %v567
        %v661 = vadd.f32 %v660, %v573
        %v662 = vadd.f32 %v661, %v577
        %v663 = vadd.f32 %v662, %v583
        %v664 = vadd.f32 %v663, %v587
        %v665 = vadd.f32 %v664, %v593
        %v666 = vadd.f32 %v665, %v597
        %v667 = vadd.f32 %v666, %v603
        %v668 = vadd.f32 %v667, %v607
        %v669 = vadd.f32 %v668, %v613
        %v670 = vadd.f32 %v669, %v617
        %v671 = vadd.f32 %v670, %v623
        %v672 = vadd.f32 %v671, %v627
        %v673 = vadd.f32 %v672, %v633
        %v674 = vadd.f32 %v673, %v637
        %v675 = vrot.slane %v674, 4
        %v676 = vadd.f32 %v674, %v675
        %v677 = vrot.slane %v676, 2
        %v678 = vadd.f32 %v676, %v677
        %v679 = vrot.slane %v678, 1
        %v680 = vadd.f32 %v678, %v679
        %v681 = vrcp.pop 128.0
        %v682 = vmul.f32 %v659, %v681
        %v683 = vmul.f32 %v680, %v681
        %v684 = vsub.f32 %v561, %v682
        %v685 = vsub.f32 %v563, %v683
        %v686 = vsub.f32 %v565, %v682
        %v687 = vsub.f32 %v567, %v683
        %v688 = vsub.f32 %v571, %v682
        %v689 = vsub.f32 %v573, %v683
        %v690 = vsub.f32 %v575, %v682
        %v691 = vsub.f32 %v577, %v683
        %v692 = vsub.f32 %v581, %v682
        %v693 = vsub.f32 %v583, %v683
        %v694 = vsub.f32 %v585, %v682
        %v695 = vsub.f32 %v587, %v683
        %v696 = vsub.f32 %v591, %v682
        %v697 = vsub.f32 %v593, %v683
        %v698 = vsub.f32 %v595, %v682
        %v699 = vsub.f32 %v597, %v683
        %v700 = vsub.f32 %v601, %v682
        %v701 = vsub.f32 %v603, %v683
        %v702 = vsub.f32 %v605, %v682
        %v703 = vsub.f32 %v607, %v683
        %v704 = vsub.f32 %v611, %v682
        %v705 = vsub.f32 %v613, %v683
        %v706 = vsub.f32 %v615, %v682
        %v707 = vsub.f32 %v617, %v683
        %v708 = vsub.f32 %v621, %v682
        %v709 = vsub.f32 %v623, %v683
        %v710 = vsub.f32 %v625, %v682
        %v711 = vsub.f32 %v627, %v683
        %v712 = vsub.f32 %v631, %v682
        %v713 = vsub.f32 %v633, %v683
        %v714 = vsub.f32 %v635, %v682
        %v715 = vsub.f32 %v637, %v683
        %v716 = vmul.f32 %v684, %v684
        %v717 = vmul.f32 %v685, %v685
        %v718 = vmul.f32 %v686, %v686
        %v719 = vmul.f32 %v687, %v687
        %v720 = vmul.f32 %v688, %v688
        %v721 = vmul.f32 %v689, %v689
        %v722 = vmul.f32 %v690, %v690
        %v723 = vmul.f32 %v691, %v691
        %v724 = vmul.f32 %v692, %v692
        %v725 = vmul.f32 %v693, %v693
        %v726 = vmul.f32 %v694, %v694
        %v727 = vmul.f32 %v695, %v695
        %v728 = vmul.f32 %v696, %v696
        %v729 = vmul.f32 %v697, %v697
        %v730 = vmul.f32 %v698, %v698
        %v731 = vmul.f32 %v699, %v699
        %v732 = vmul.f32 %v700, %v700
        %v733 = vmul.f32 %v701, %v701
        %v734 = vmul.f32 %v702, %v702
        %v735 = vmul.f32 %v703, %v703
        %v736 = vmul.f32 %v704, %v704
        %v737 = vmul.f32 %v705, %v705
        %v738 = vmul.f32 %v706, %v706
        %v739 = vmul.f32 %v707, %v707
        %v740 = vmul.f32 %v708, %v708
        %v741 = vmul.f32 %v709, %v709
        %v742 = vmul.f32 %v710, %v710
        %v743 = vmul.f32 %v711, %v711
        %v744 = vmul.f32 %v712, %v712
        %v745 = vmul.f32 %v713, %v713
        %v746 = vmul.f32 %v714, %v714
        %v747 = vmul.f32 %v715, %v715
        %v748 = vadd.f32 %v716, %v718
        %v749 = vadd.f32 %v748, %v720
        %v750 = vadd.f32 %v749, %v722
        %v751 = vadd.f32 %v750, %v724
        %v752 = vadd.f32 %v751, %v726
        %v753 = vadd.f32 %v752, %v728
        %v754 = vadd.f32 %v753, %v730
        %v755 = vadd.f32 %v754, %v732
        %v756 = vadd.f32 %v755, %v734
        %v757 = vadd.f32 %v756, %v736
        %v758 = vadd.f32 %v757, %v738
        %v759 = vadd.f32 %v758, %v740
        %v760 = vadd.f32 %v759, %v742
        %v761 = vadd.f32 %v760, %v744
        %v762 = vadd.f32 %v761, %v746
        %v763 = vrot.slane %v762, 4
        %v764 = vadd.f32 %v762, %v763
        %v765 = vrot.slane %v764, 2
        %v766 = vadd.f32 %v764, %v765
        %v767 = vrot.slane %v766, 1
        %v768 = vadd.f32 %v766, %v767
        %v769 = vadd.f32 %v717, %v719
        %v770 = vadd.f32 %v769, %v721
        %v771 = vadd.f32 %v770, %v723
        %v772 = vadd.f32 %v771, %v725
        %v773 = vadd.f32 %v772, %v727
        %v774 = vadd.f32 %v773, %v729
        %v775 = vadd.f32 %v774, %v731
        %v776 = vadd.f32 %v775, %v733
        %v777 = vadd.f32 %v776, %v735
        %v778 = vadd.f32 %v777, %v737
        %v779 = vadd.f32 %v778, %v739
        %v780 = vadd.f32 %v779, %v741
        %v781 = vadd.f32 %v780, %v743
        %v782 = vadd.f32 %v781, %v745
        %v783 = vadd.f32 %v782, %v747
        %v784 = vrot.slane %v783, 4
        %v785 = vadd.f32 %v783, %v784
        %v786 = vrot.slane %v785, 2
        %v787 = vadd.f32 %v785, %v786
        %v788 = vrot.slane %v787, 1
        %v789 = vadd.f32 %v787, %v788
        %v790 = vmul.f32 %v768, %v681
        %v791 = vmul.f32 %v789, %v681
        %v792 = vadd.f32 %v790, 1e-05
        %v793 = vadd.f32 %v791, 1e-05
        %v794 = vrsqrt.pop %v792
        %v795 = vrsqrt.pop %v793
        %v796 = vmul.f32 %v684, %v794
        %v797 = vmul.f32 %v685, %v795
        %v798 = vmul.f32 %v686, %v794
        %v799 = vmul.f32 %v687, %v795
        %v800 = vmul.f32 %v688, %v794
        %v801 = vmul.f32 %v689, %v795
        %v802 = vmul.f32 %v690, %v794
        %v803 = vmul.f32 %v691, %v795
        %v804 = vmul.f32 %v692, %v794
        %v805 = vmul.f32 %v693, %v795
        %v806 = vmul.f32 %v694, %v794
        %v807 = vmul.f32 %v695, %v795
        %v808 = vmul.f32 %v696, %v794
        %v809 = vmul.f32 %v697, %v795
        %v810 = vmul.f32 %v698, %v794
        %v811 = vmul.f32 %v699, %v795
        %v812 = vmul.f32 %v700, %v794
        %v813 = vmul.f32 %v701, %v795
        %v814 = vmul.f32 %v702, %v794
        %v815 = vmul.f32 %v703, %v795
        %v816 = vmul.f32 %v704, %v794
        %v817 = vmul.f32 %v705, %v795
        %v818 = vmul.f32 %v706, %v794
        %v819 = vmul.f32 %v707, %v795
        %v820 = vmul.f32 %v708, %v794
        %v821 = vmul.f32 %v709, %v795
        %v822 = vmul.f32 %v710, %v794
        %v823 = vmul.f32 %v711, %v795
        %v824 = vmul.f32 %v712, %v794
        %v825 = vmul.f32 %v713, %v795
        %v826 = vmul.f32 %v714, %v794
        %v827 = vmul.f32 %v715, %v795
        %828 = vset.pattern.permute.xlu0 1
        %829 = vperm.xlu0 %828, %v270
        %v830 = vpop.permute.xlu0 %829
        %832 = vset.pattern.permute.xlu0 1
        %833 = vperm.xlu0 %832, %v271
        %v834 = vpop.permute.xlu0 %833
        %836 = vset.pattern.permute.xlu0 1
        %837 = vperm.xlu0 %836, %v272
        %v838 = vpop.permute.xlu0 %837
        %840 = vset.pattern.permute.xlu0 1
        %841 = vperm.xlu0 %840, %v273
        %v842 = vpop.permute.xlu0 %841
        %844 = vset.pattern.permute.xlu0 1
        %845 = vperm.xlu0 %844, %v274
        %v846 = vpop.permute.xlu0 %845
        %848 = vset.pattern.permute.xlu0 1
        %849 = vperm.xlu0 %848, %v275
        %v850 = vpop.permute.xlu0 %849
        %852 = vset.pattern.permute.xlu0 1
        %853 = vperm.xlu0 %852, %v276
        %v854 = vpop.permute.xlu0 %853
        %856 = vset.pattern.permute.xlu0 1
        %857 = vperm.xlu0 %856, %v277
        %v858 = vpop.permute.xlu0 %857
        %860 = vset.pattern.permute.xlu0 1
        %861 = vperm.xlu0 %860, %v278
        %v862 = vpop.permute.xlu0 %861
        %864 = vset.pattern.permute.xlu0 1
        %865 = vperm.xlu0 %864, %v279
        %v866 = vpop.permute.xlu0 %865
        %868 = vset.pattern.permute.xlu0 1
        %869 = vperm.xlu0 %868, %v280
        %v870 = vpop.permute.xlu0 %869
        %872 = vset.pattern.permute.xlu0 1
        %873 = vperm.xlu0 %872, %v281
        %v874 = vpop.permute.xlu0 %873
        %876 = vset.pattern.permute.xlu0 1
        %877 = vperm.xlu0 %876, %v282
        %v878 = vpop.permute.xlu0 %877
        %880 = vset.pattern.permute.xlu0 1
        %881 = vperm.xlu0 %880, %v283
        %v882 = vpop.permute.xlu0 %881
        %884 = vset.pattern.permute.xlu0 1
        %885 = vperm.xlu0 %884, %v284
        %v886 = vpop.permute.xlu0 %885
        %888 = vset.pattern.permute.xlu0 1
        %889 = vperm.xlu0 %888, %v285
        %v890 = vpop.permute.xlu0 %889
        %v892 = vmul.f32 %v796, %v830
        %v893 = vmul.f32 %v797, %v830
        %v894 = vmul.f32 %v798, %v834
        %v895 = vmul.f32 %v799, %v834
        %v896 = vmul.f32 %v800, %v838
        %v897 = vmul.f32 %v801, %v838
        %v898 = vmul.f32 %v802, %v842
        %v899 = vmul.f32 %v803, %v842
        %v900 = vmul.f32 %v804, %v846
        %v901 = vmul.f32 %v805, %v846
        %v902 = vmul.f32 %v806, %v850
        %v903 = vmul.f32 %v807, %v850
        %v904 = vmul.f32 %v808, %v854
        %v905 = vmul.f32 %v809, %v854
        %v906 = vmul.f32 %v810, %v858
        %v907 = vmul.f32 %v811, %v858
        %v908 = vmul.f32 %v812, %v862
        %v909 = vmul.f32 %v813, %v862
        %v910 = vmul.f32 %v814, %v866
        %v911 = vmul.f32 %v815, %v866
        %v912 = vmul.f32 %v816, %v870
        %v913 = vmul.f32 %v817, %v870
        %v914 = vmul.f32 %v818, %v874
        %v915 = vmul.f32 %v819, %v874
        %v916 = vmul.f32 %v820, %v878
        %v917 = vmul.f32 %v821, %v878
        %v918 = vmul.f32 %v822, %v882
        %v919 = vmul.f32 %v823, %v882
        %v920 = vmul.f32 %v824, %v886
        %v921 = vmul.f32 %v825, %v886
        %v922 = vmul.f32 %v826, %v890
        %v923 = vmul.f32 %v827, %v890
        %924 = vset.pattern.permute.xlu0 2
        %925 = vperm.xlu0 %924, %v270
        %v926 = vpop.permute.xlu0 %925
        %928 = vset.pattern.permute.xlu0 2
        %929 = vperm.xlu0 %928, %v271
        %v930 = vpop.permute.xlu0 %929
        %932 = vset.pattern.permute.xlu0 2
        %933 = vperm.xlu0 %932, %v272
        %v934 = vpop.permute.xlu0 %933
        %936 = vset.pattern.permute.xlu0 2
        %937 = vperm.xlu0 %936, %v273
        %v938 = vpop.permute.xlu0 %937
        %940 = vset.pattern.permute.xlu0 2
        %941 = vperm.xlu0 %940, %v274
        %v942 = vpop.permute.xlu0 %941
        %944 = vset.pattern.permute.xlu0 2
        %945 = vperm.xlu0 %944, %v275
        %v946 = vpop.permute.xlu0 %945
        %948 = vset.pattern.permute.xlu0 2
        %949 = vperm.xlu0 %948, %v276
        %v950 = vpop.permute.xlu0 %949
        %952 = vset.pattern.permute.xlu0 2
        %953 = vperm.xlu0 %952, %v277
        %v954 = vpop.permute.xlu0 %953
        %956 = vset.pattern.permute.xlu0 2
        %957 = vperm.xlu0 %956, %v278
        %v958 = vpop.permute.xlu0 %957
        %960 = vset.pattern.permute.xlu0 2
        %961 = vperm.xlu0 %960, %v279
        %v962 = vpop.permute.xlu0 %961
        %964 = vset.pattern.permute.xlu0 2
        %965 = vperm.xlu0 %964, %v280
        %v966 = vpop.permute.xlu0 %965
        %968 = vset.pattern.permute.xlu0 2
        %969 = vperm.xlu0 %968, %v281
        %v970 = vpop.permute.xlu0 %969
        %972 = vset.pattern.permute.xlu0 2
        %973 = vperm.xlu0 %972, %v282
        %v974 = vpop.permute.xlu0 %973
        %976 = vset.pattern.permute.xlu0 2
        %977 = vperm.xlu0 %976, %v283
        %v978 = vpop.permute.xlu0 %977
        %980 = vset.pattern.permute.xlu0 2
        %981 = vperm.xlu0 %980, %v284
        %v982 = vpop.permute.xlu0 %981
        %984 = vset.pattern.permute.xlu0 2
        %985 = vperm.xlu0 %984, %v285
        %v986 = vpop.permute.xlu0 %985
        %v988 = vadd.f32 %v892, %v926
        %v989 = vadd.f32 %v893, %v926
        %v990 = vadd.f32 %v894, %v930
        %v991 = vadd.f32 %v895, %v930
        %v992 = vadd.f32 %v896, %v934
        %v993 = vadd.f32 %v897, %v934
        %v994 = vadd.f32 %v898, %v938
        %v995 = vadd.f32 %v899, %v938
        %v996 = vadd.f32 %v900, %v942
        %v997 = vadd.f32 %v901, %v942
        %v998 = vadd.f32 %v902, %v946
        %v999 = vadd.f32 %v903, %v946
        %v1000 = vadd.f32 %v904, %v950
        %v1001 = vadd.f32 %v905, %v950
        %v1002 = vadd.f32 %v906, %v954
        %v1003 = vadd.f32 %v907, %v954
        %v1004 = vadd.f32 %v908, %v958
        %v1005 = vadd.f32 %v909, %v958
        %v1006 = vadd.f32 %v910, %v962
        %v1007 = vadd.f32 %v911, %v962
        %v1008 = vadd.f32 %v912, %v966
        %v1009 = vadd.f32 %v913, %v966
        %v1010 = vadd.f32 %v914, %v970
        %v1011 = vadd.f32 %v915, %v970
        %v1012 = vadd.f32 %v916, %v974
        %v1013 = vadd.f32 %v917, %v974
        %v1014 = vadd.f32 %v918, %v978
        %v1015 = vadd.f32 %v919, %v978
        %v1016 = vadd.f32 %v920, %v982
        %v1017 = vadd.f32 %v921, %v982
        %v1018 = vadd.f32 %v922, %v986
        %v1019 = vadd.f32 %v923, %v986
        %v1020 = vld [vmem:[%s2] sm:$0xf]
        %v1021 = vld [vmem:[%s2 + $0x4] sm:$0xf]
        %v1022 = vld [vmem:[%s2 + $0x8] sm:$0xf]
        %v1023 = vld [vmem:[%s2 + $0xc] sm:$0xf]
        %v1024 = vld [vmem:[%s2 + $0x10] sm:$0xf]
        %v1025 = vld [vmem:[%s2 + $0x14] sm:$0xf]
        %v1026 = vld [vmem:[%s2 + $0x18] sm:$0xf]
        %v1027 = vld [vmem:[%s2 + $0x1c] sm:$0xf]
        %v1028 = vld [vmem:[%s2 + $0x20] sm:$0xf]
        %v1029 = vld [vmem:[%s2 + $0x24] sm:$0xf]
        %v1030 = vld [vmem:[%s2 + $0x28] sm:$0xf]
        %v1031 = vld [vmem:[%s2 + $0x2c] sm:$0xf]
        %v1032 = vld [vmem:[%s2 + $0x30] sm:$0xf]
        %v1033 = vld [vmem:[%s2 + $0x34] sm:$0xf]
        %v1034 = vld [vmem:[%s2 + $0x38] sm:$0xf]
        %v1035 = vld [vmem:[%s2 + $0x3c] sm:$0xf]
        %v1036 = vld [vmem:[%s2 + $0x40] sm:$0xf]
        %v1037 = vld [vmem:[%s2 + $0x44] sm:$0xf]
        %v1038 = vld [vmem:[%s2 + $0x48] sm:$0xf]
        %v1039 = vld [vmem:[%s2 + $0x4c] sm:$0xf]
        %v1040 = vld [vmem:[%s2 + $0x50] sm:$0xf]
        %v1041 = vld [vmem:[%s2 + $0x54] sm:$0xf]
        %v1042 = vld [vmem:[%s2 + $0x58] sm:$0xf]
        %v1043 = vld [vmem:[%s2 + $0x5c] sm:$0xf]
        %v1044 = vld [vmem:[%s2 + $0x60] sm:$0xf]
        %v1045 = vld [vmem:[%s2 + $0x64] sm:$0xf]
        %v1046 = vld [vmem:[%s2 + $0x68] sm:$0xf]
        %v1047 = vld [vmem:[%s2 + $0x6c] sm:$0xf]
        %v1048 = vld [vmem:[%s2 + $0x70] sm:$0xf]
        %v1049 = vld [vmem:[%s2 + $0x74] sm:$0xf]
        %v1050 = vld [vmem:[%s2 + $0x78] sm:$0xf]
        %v1051 = vld [vmem:[%s2 + $0x7c] sm:$0xf]
        %v1052 = vpack.c.bf16 %v990, %v988
        %v1053 = vpack.c.bf16 %v991, %v989
        %v1054 = vpack.c.bf16 %v994, %v992
        %v1055 = vpack.c.bf16 %v995, %v993
        %v1056 = vpack.c.bf16 %v998, %v996
        %v1057 = vpack.c.bf16 %v999, %v997
        %v1058 = vpack.c.bf16 %v1002, %v1000
        %v1059 = vpack.c.bf16 %v1003, %v1001
        %v1060 = vpack.c.bf16 %v1006, %v1004
        %v1061 = vpack.c.bf16 %v1007, %v1005
        %v1062 = vpack.c.bf16 %v1010, %v1008
        %v1063 = vpack.c.bf16 %v1011, %v1009
        %v1064 = vpack.c.bf16 %v1014, %v1012
        %v1065 = vpack.c.bf16 %v1015, %v1013
        %v1066 = vpack.c.bf16 %v1018, %v1016
        %v1067 = vpack.c.bf16 %v1019, %v1017
        %v1068 = vld [vmem:[%s4] sm:$0xff]
        %v1069 = vld [vmem:[%s4 + $0x8] sm:$0xff]
        %v1070 = vld [vmem:[%s4 + $0x10] sm:$0xff]
        %v1071 = vld [vmem:[%s4 + $0x18] sm:$0xff]
        %v1072 = vld [vmem:[%s4 + $0x20] sm:$0xff]
        %v1073 = vld [vmem:[%s4 + $0x28] sm:$0xff]
        %v1074 = vld [vmem:[%s4 + $0x30] sm:$0xff]
        %v1075 = vld [vmem:[%s4 + $0x38] sm:$0xff]
        %v1076 = vld [vmem:[%s4 + $0x40] sm:$0xff]
        %v1077 = vld [vmem:[%s4 + $0x48] sm:$0xff]
        %v1078 = vld [vmem:[%s4 + $0x50] sm:$0xff]
        %v1079 = vld [vmem:[%s4 + $0x58] sm:$0xff]
        %v1080 = vld [vmem:[%s4 + $0x60] sm:$0xff]
        %v1081 = vld [vmem:[%s4 + $0x68] sm:$0xff]
        %v1082 = vld [vmem:[%s4 + $0x70] sm:$0xff]
        %v1083 = vld [vmem:[%s4 + $0x78] sm:$0xff]
        %v1084 = vld [vmem:[%s4 + $0x80] sm:$0xff]
        %v1085 = vld [vmem:[%s4 + $0x88] sm:$0xff]
        %v1086 = vld [vmem:[%s4 + $0x90] sm:$0xff]
        %v1087 = vld [vmem:[%s4 + $0x98] sm:$0xff]
        %v1088 = vld [vmem:[%s4 + $0xa0] sm:$0xff]
        %v1089 = vld [vmem:[%s4 + $0xa8] sm:$0xff]
        %v1090 = vld [vmem:[%s4 + $0xb0] sm:$0xff]
        %v1091 = vld [vmem:[%s4 + $0xb8] sm:$0xff]
        %v1092 = vld [vmem:[%s4 + $0xc0] sm:$0xff]
        %v1093 = vld [vmem:[%s4 + $0xc8] sm:$0xff]
        %v1094 = vld [vmem:[%s4 + $0xd0] sm:$0xff]
        %v1095 = vld [vmem:[%s4 + $0xd8] sm:$0xff]
        %v1096 = vld [vmem:[%s4 + $0xe0] sm:$0xff]
        %v1097 = vld [vmem:[%s4 + $0xe8] sm:$0xff]
        %v1098 = vld [vmem:[%s4 + $0xf0] sm:$0xff]
        %v1099 = vld [vmem:[%s4 + $0xf8] sm:$0xff]
        %1101 = vset.pattern.permute.xlu0 0
        %1102 = vperm.xlu0 %1101, %v1068
        %v1103 = vpop.permute.xlu0 %1102
        %1106 = vset.pattern.permute.xlu0 0
        %1107 = vperm.xlu0 %1106, %v1069
        %v1108 = vpop.permute.xlu0 %1107
        %1111 = vset.pattern.permute.xlu0 0
        %1112 = vperm.xlu0 %1111, %v1070
        %v1113 = vpop.permute.xlu0 %1112
        %1116 = vset.pattern.permute.xlu0 0
        %1117 = vperm.xlu0 %1116, %v1071
        %v1118 = vpop.permute.xlu0 %1117
        %1121 = vset.pattern.permute.xlu0 0
        %1122 = vperm.xlu0 %1121, %v1072
        %v1123 = vpop.permute.xlu0 %1122
        %1126 = vset.pattern.permute.xlu0 0
        %1127 = vperm.xlu0 %1126, %v1073
        %v1128 = vpop.permute.xlu0 %1127
        %1131 = vset.pattern.permute.xlu0 0
        %1132 = vperm.xlu0 %1131, %v1074
        %v1133 = vpop.permute.xlu0 %1132
        %1136 = vset.pattern.permute.xlu0 0
        %1137 = vperm.xlu0 %1136, %v1075
        %v1138 = vpop.permute.xlu0 %1137
        %1141 = vset.pattern.permute.xlu0 0
        %1142 = vperm.xlu0 %1141, %v1076
        %v1143 = vpop.permute.xlu0 %1142
        %1146 = vset.pattern.permute.xlu0 0
        %1147 = vperm.xlu0 %1146, %v1077
        %v1148 = vpop.permute.xlu0 %1147
        %1151 = vset.pattern.permute.xlu0 0
        %1152 = vperm.xlu0 %1151, %v1078
        %v1153 = vpop.permute.xlu0 %1152
        %1156 = vset.pattern.permute.xlu0 0
        %1157 = vperm.xlu0 %1156, %v1079
        %v1158 = vpop.permute.xlu0 %1157
        %1161 = vset.pattern.permute.xlu0 0
        %1162 = vperm.xlu0 %1161, %v1080
        %v1163 = vpop.permute.xlu0 %1162
        %1166 = vset.pattern.permute.xlu0 0
        %1167 = vperm.xlu0 %1166, %v1081
        %v1168 = vpop.permute.xlu0 %1167
        %1171 = vset.pattern.permute.xlu0 0
        %1172 = vperm.xlu0 %1171, %v1082
        %v1173 = vpop.permute.xlu0 %1172
        %1176 = vset.pattern.permute.xlu0 0
        %1177 = vperm.xlu0 %1176, %v1083
        %v1178 = vpop.permute.xlu0 %1177
        %1181 = vset.pattern.permute.xlu0 0
        %1182 = vperm.xlu0 %1181, %v1084
        %v1183 = vpop.permute.xlu0 %1182
        %1186 = vset.pattern.permute.xlu0 0
        %1187 = vperm.xlu0 %1186, %v1085
        %v1188 = vpop.permute.xlu0 %1187
        %1191 = vset.pattern.permute.xlu0 0
        %1192 = vperm.xlu0 %1191, %v1086
        %v1193 = vpop.permute.xlu0 %1192
        %1196 = vset.pattern.permute.xlu0 0
        %1197 = vperm.xlu0 %1196, %v1087
        %v1198 = vpop.permute.xlu0 %1197
        %1201 = vset.pattern.permute.xlu0 0
        %1202 = vperm.xlu0 %1201, %v1088
        %v1203 = vpop.permute.xlu0 %1202
        %1206 = vset.pattern.permute.xlu0 0
        %1207 = vperm.xlu0 %1206, %v1089
        %v1208 = vpop.permute.xlu0 %1207
        %1211 = vset.pattern.permute.xlu0 0
        %1212 = vperm.xlu0 %1211, %v1090
        %v1213 = vpop.permute.xlu0 %1212
        %1216 = vset.pattern.permute.xlu0 0
        %1217 = vperm.xlu0 %1216, %v1091
        %v1218 = vpop.permute.xlu0 %1217
        %1221 = vset.pattern.permute.xlu0 0
        %1222 = vperm.xlu0 %1221, %v1092
        %v1223 = vpop.permute.xlu0 %1222
        %1226 = vset.pattern.permute.xlu0 0
        %1227 = vperm.xlu0 %1226, %v1093
        %v1228 = vpop.permute.xlu0 %1227
        %1231 = vset.pattern.permute.xlu0 0
        %1232 = vperm.xlu0 %1231, %v1094
        %v1233 = vpop.permute.xlu0 %1232
        %1236 = vset.pattern.permute.xlu0 0
        %1237 = vperm.xlu0 %1236, %v1095
        %v1238 = vpop.permute.xlu0 %1237
        %1241 = vset.pattern.permute.xlu0 0
        %1242 = vperm.xlu0 %1241, %v1096
        %v1243 = vpop.permute.xlu0 %1242
        %1246 = vset.pattern.permute.xlu0 0
        %1247 = vperm.xlu0 %1246, %v1097
        %v1248 = vpop.permute.xlu0 %1247
        %1251 = vset.pattern.permute.xlu0 0
        %1252 = vperm.xlu0 %1251, %v1098
        %v1253 = vpop.permute.xlu0 %1252
        %1256 = vset.pattern.permute.xlu0 0
        %1257 = vperm.xlu0 %1256, %v1099
        %v1258 = vpop.permute.xlu0 %1257
        %v1292 = vunpack.c.l.b16 %v1020
        %v1293 = vunpack.c.l.b16 %v1021
        %v1294 = vunpack.c.l.b16 %v1022
        %v1295 = vunpack.c.l.b16 %v1023
        %v1296 = vunpack.c.l.b16 %v1024
        %v1297 = vunpack.c.l.b16 %v1025
        %v1298 = vunpack.c.l.b16 %v1026
        %v1299 = vunpack.c.l.b16 %v1027
        %v1300 = vunpack.c.l.b16 %v1028
        %v1301 = vunpack.c.l.b16 %v1029
        %v1302 = vunpack.c.l.b16 %v1030
        %v1303 = vunpack.c.l.b16 %v1031
        %v1304 = vunpack.c.l.b16 %v1032
        %v1305 = vunpack.c.l.b16 %v1033
        %v1306 = vunpack.c.l.b16 %v1034
        %v1307 = vunpack.c.l.b16 %v1035
        %v1308 = vunpack.c.l.b16 %v1036
        %v1309 = vunpack.c.l.b16 %v1037
        %v1310 = vunpack.c.l.b16 %v1038
        %v1311 = vunpack.c.l.b16 %v1039
        %v1312 = vunpack.c.l.b16 %v1040
        %v1313 = vunpack.c.l.b16 %v1041
        %v1314 = vunpack.c.l.b16 %v1042
        %v1315 = vunpack.c.l.b16 %v1043
        %v1316 = vunpack.c.l.b16 %v1044
        %v1317 = vunpack.c.l.b16 %v1045
        %v1318 = vunpack.c.l.b16 %v1046
        %v1319 = vunpack.c.l.b16 %v1047
        %v1320 = vunpack.c.l.b16 %v1048
        %v1321 = vunpack.c.l.b16 %v1049
        %v1322 = vunpack.c.l.b16 %v1050
        %v1323 = vunpack.c.l.b16 %v1051
        %v1324 = vpack.c.b16 %v1293, %v1292
        %v1325 = vpack.c.b16 %v1295, %v1294
        %v1326 = vpack.c.b16 %v1297, %v1296
        %v1327 = vpack.c.b16 %v1299, %v1298
        %v1328 = vpack.c.b16 %v1301, %v1300
        %v1329 = vpack.c.b16 %v1303, %v1302
        %v1330 = vpack.c.b16 %v1305, %v1304
        %v1331 = vpack.c.b16 %v1307, %v1306
        %v1332 = vpack.c.b16 %v1309, %v1308
        %v1333 = vpack.c.b16 %v1311, %v1310
        %v1334 = vpack.c.b16 %v1313, %v1312
        %v1335 = vpack.c.b16 %v1315, %v1314
        %v1336 = vpack.c.b16 %v1317, %v1316
        %v1337 = vpack.c.b16 %v1319, %v1318
        %v1338 = vpack.c.b16 %v1321, %v1320
        %v1339 = vpack.c.b16 %v1323, %v1322
        %1356 = vmatprep.subr.bf16.mxu0 %v1067
        %1357 = vmatpush1.bf16.msra.mxu0 %v1066
        %1358 = vmatprep.subr.bf16.mxu0 %v1065
        %1359 = vmatpush1.bf16.msra.mxu0 %v1064
        %1360 = vmatprep.subr.bf16.mxu0 %v1063
        %1361 = vmatpush1.bf16.msra.mxu0 %v1062
        %1362 = vmatprep.subr.bf16.mxu0 %v1061
        %1363 = vmatpush1.bf16.msra.mxu0 %v1060
        %1364 = vmatprep.subr.bf16.mxu0 %v1059
        %1365 = vmatpush1.bf16.msra.mxu0 %v1058
        %1366 = vmatprep.subr.bf16.mxu0 %v1057
        %1367 = vmatpush1.bf16.msra.mxu0 %v1056
        %1368 = vmatprep.subr.bf16.mxu0 %v1055
        %1369 = vmatpush1.bf16.msra.mxu0 %v1054
        %1370 = vmatprep.subr.bf16.mxu0 %v1053
        %1371 = vmatpush1.bf16.msra.mxu0 %v1052
        %1372 = vmatprep.subr.bf16.mxu0 0
        %1373 = vmatpush2.bf16.msra.mxu0 0
        %1374 = vmatprep.subr.bf16.mxu0 0
        %1375 = vmatpush2.bf16.msra.mxu0 0
        %1376 = vmatprep.subr.bf16.mxu0 0
        %1377 = vmatpush2.bf16.msra.mxu0 0
        %1378 = vmatprep.subr.bf16.mxu0 0
        %1379 = vmatpush2.bf16.msra.mxu0 0
        %1380 = vmatprep.subr.bf16.mxu0 0
        %1381 = vmatpush2.bf16.msra.mxu0 0
        %1382 = vmatprep.subr.bf16.mxu0 0
        %1383 = vmatpush2.bf16.msra.mxu0 0
        %1384 = vmatprep.subr.bf16.mxu0 0
        %1385 = vmatpush2.bf16.msra.mxu0 0
        %1386 = vmatprep.subr.bf16.mxu0 0
        %1387 = vmatpush2.bf16.msra.mxu0 0
        %1388 = vmatprep.mubr.bf16.mxu0 0
        %1389 = vmatmul.mubr.bf16.gmra.mxu0 %v1324
        %v1390 = vpop.f32.mrf.mxu0
        %v1391 = vadd.f32 %v1103, %v1390
        %v1392 = vpop.f32.mrf.mxu0
        %v1393 = vadd.f32 %v1103, %v1392
        %v1394 = vpop.f32.mrf.mxu0
        %v1395 = vadd.f32 %v1108, %v1394
        %v1396 = vpop.f32.mrf.mxu0
        %v1397 = vadd.f32 %v1108, %v1396
        %1398 = vmatprep.mubr.bf16.mxu0 0
        %1399 = vmatmul.mubr.bf16.gmra.mxu0 %v1325
        %v1400 = vpop.f32.mrf.mxu0
        %v1401 = vadd.f32 %v1113, %v1400
        %v1402 = vpop.f32.mrf.mxu0
        %v1403 = vadd.f32 %v1113, %v1402
        %v1404 = vpop.f32.mrf.mxu0
        %v1405 = vadd.f32 %v1118, %v1404
        %v1406 = vpop.f32.mrf.mxu0
        %v1407 = vadd.f32 %v1118, %v1406
        %1408 = vmatprep.mubr.bf16.mxu0 0
        %1409 = vmatmul.mubr.bf16.gmra.mxu0 %v1326
        %v1410 = vpop.f32.mrf.mxu0
        %v1411 = vadd.f32 %v1123, %v1410
        %v1412 = vpop.f32.mrf.mxu0
        %v1413 = vadd.f32 %v1123, %v1412
        %v1414 = vpop.f32.mrf.mxu0
        %v1415 = vadd.f32 %v1128, %v1414
        %v1416 = vpop.f32.mrf.mxu0
        %v1417 = vadd.f32 %v1128, %v1416
        %1418 = vmatprep.mubr.bf16.mxu0 0
        %1419 = vmatmul.mubr.bf16.gmra.mxu0 %v1327
        %v1420 = vpop.f32.mrf.mxu0
        %v1421 = vadd.f32 %v1133, %v1420
        %v1422 = vpop.f32.mrf.mxu0
        %v1423 = vadd.f32 %v1133, %v1422
        %v1424 = vpop.f32.mrf.mxu0
        %v1425 = vadd.f32 %v1138, %v1424
        %v1426 = vpop.f32.mrf.mxu0
        %v1427 = vadd.f32 %v1138, %v1426
        %1428 = vmatprep.mubr.bf16.mxu0 0
        %1429 = vmatmul.mubr.bf16.gmra.mxu0 %v1328
        %v1430 = vpop.f32.mrf.mxu0
        %v1431 = vadd.f32 %v1143, %v1430
        %v1432 = vpop.f32.mrf.mxu0
        %v1433 = vadd.f32 %v1143, %v1432
        %v1434 = vpop.f32.mrf.mxu0
        %v1435 = vadd.f32 %v1148, %v1434
        %v1436 = vpop.f32.mrf.mxu0
        %v1437 = vadd.f32 %v1148, %v1436
        %1438 = vmatprep.mubr.bf16.mxu0 0
        %1439 = vmatmul.mubr.bf16.gmra.mxu0 %v1329
        %v1440 = vpop.f32.mrf.mxu0
        %v1441 = vadd.f32 %v1153, %v1440
        %v1442 = vpop.f32.mrf.mxu0
        %v1443 = vadd.f32 %v1153, %v1442
        %v1444 = vpop.f32.mrf.mxu0
        %v1445 = vadd.f32 %v1158, %v1444
        %v1446 = vpop.f32.mrf.mxu0
        %v1447 = vadd.f32 %v1158, %v1446
        %1448 = vmatprep.mubr.bf16.mxu0 0
        %1449 = vmatmul.mubr.bf16.gmra.mxu0 %v1330
        %v1450 = vpop.f32.mrf.mxu0
        %v1451 = vadd.f32 %v1163, %v1450
        %v1452 = vpop.f32.mrf.mxu0
        %v1453 = vadd.f32 %v1163, %v1452
        %v1454 = vpop.f32.mrf.mxu0
        %v1455 = vadd.f32 %v1168, %v1454
        %v1456 = vpop.f32.mrf.mxu0
        %v1457 = vadd.f32 %v1168, %v1456
        %1458 = vmatprep.mubr.bf16.mxu0 0
        %1459 = vmatmul.mubr.bf16.gmra.mxu0 %v1331
        %v1460 = vpop.f32.mrf.mxu0
        %v1461 = vadd.f32 %v1173, %v1460
        %v1462 = vpop.f32.mrf.mxu0
        %v1463 = vadd.f32 %v1173, %v1462
        %v1464 = vpop.f32.mrf.mxu0
        %v1465 = vadd.f32 %v1178, %v1464
        %v1466 = vpop.f32.mrf.mxu0
        %v1467 = vadd.f32 %v1178, %v1466
        %1468 = vmatprep.mubr.bf16.mxu0 0
        %1469 = vmatmul.mubr.bf16.gmra.mxu0 %v1332
        %v1470 = vpop.f32.mrf.mxu0
        %v1471 = vadd.f32 %v1183, %v1470
        %v1472 = vpop.f32.mrf.mxu0
        %v1473 = vadd.f32 %v1183, %v1472
        %v1474 = vpop.f32.mrf.mxu0
        %v1475 = vadd.f32 %v1188, %v1474
        %v1476 = vpop.f32.mrf.mxu0
        %v1477 = vadd.f32 %v1188, %v1476
        %1478 = vmatprep.mubr.bf16.mxu0 0
        %1479 = vmatmul.mubr.bf16.gmra.mxu0 %v1333
        %v1480 = vpop.f32.mrf.mxu0
        %v1481 = vadd.f32 %v1193, %v1480
        %v1482 = vpop.f32.mrf.mxu0
        %v1483 = vadd.f32 %v1193, %v1482
        %v1484 = vpop.f32.mrf.mxu0
        %v1485 = vadd.f32 %v1198, %v1484
        %v1486 = vpop.f32.mrf.mxu0
        %v1487 = vadd.f32 %v1198, %v1486
        %1488 = vmatprep.mubr.bf16.mxu0 0
        %1489 = vmatmul.mubr.bf16.gmra.mxu0 %v1334
        %v1490 = vpop.f32.mrf.mxu0
        %v1491 = vadd.f32 %v1203, %v1490
        %v1492 = vpop.f32.mrf.mxu0
        %v1493 = vadd.f32 %v1203, %v1492
        %v1494 = vpop.f32.mrf.mxu0
        %v1495 = vadd.f32 %v1208, %v1494
        %v1496 = vpop.f32.mrf.mxu0
        %v1497 = vadd.f32 %v1208, %v1496
        %1498 = vmatprep.mubr.bf16.mxu0 0
        %1499 = vmatmul.mubr.bf16.gmra.mxu0 %v1335
        %v1500 = vpop.f32.mrf.mxu0
        %v1501 = vadd.f32 %v1213, %v1500
        %v1502 = vpop.f32.mrf.mxu0
        %v1503 = vadd.f32 %v1213, %v1502
        %v1504 = vpop.f32.mrf.mxu0
        %v1505 = vadd.f32 %v1218, %v1504
        %v1506 = vpop.f32.mrf.mxu0
        %v1507 = vadd.f32 %v1218, %v1506
        %1508 = vmatprep.mubr.bf16.mxu0 0
        %1509 = vmatmul.mubr.bf16.gmra.mxu0 %v1336
        %v1510 = vpop.f32.mrf.mxu0
        %v1511 = vadd.f32 %v1223, %v1510
        %v1512 = vpop.f32.mrf.mxu0
        %v1513 = vadd.f32 %v1223, %v1512
        %v1514 = vpop.f32.mrf.mxu0
        %v1515 = vadd.f32 %v1228, %v1514
        %v1516 = vpop.f32.mrf.mxu0
        %v1517 = vadd.f32 %v1228, %v1516
        %1518 = vmatprep.mubr.bf16.mxu0 0
        %1519 = vmatmul.mubr.bf16.gmra.mxu0 %v1337
        %v1520 = vpop.f32.mrf.mxu0
        %v1521 = vadd.f32 %v1233, %v1520
        %v1522 = vpop.f32.mrf.mxu0
        %v1523 = vadd.f32 %v1233, %v1522
        %v1524 = vpop.f32.mrf.mxu0
        %v1525 = vadd.f32 %v1238, %v1524
        %v1526 = vpop.f32.mrf.mxu0
        %v1527 = vadd.f32 %v1238, %v1526
        %1528 = vmatprep.mubr.bf16.mxu0 0
        %1529 = vmatmul.mubr.bf16.gmra.mxu0 %v1338
        %v1530 = vpop.f32.mrf.mxu0
        %v1531 = vadd.f32 %v1243, %v1530
        %v1532 = vpop.f32.mrf.mxu0
        %v1533 = vadd.f32 %v1243, %v1532
        %v1534 = vpop.f32.mrf.mxu0
        %v1535 = vadd.f32 %v1248, %v1534
        %v1536 = vpop.f32.mrf.mxu0
        %v1537 = vadd.f32 %v1248, %v1536
        %1538 = vmatprep.mubr.bf16.mxu0 0
        %1539 = vmatmul.mubr.bf16.gmra.mxu0 %v1339
        %v1540 = vpop.f32.mrf.mxu0
        %v1541 = vadd.f32 %v1253, %v1540
        %v1542 = vpop.f32.mrf.mxu0
        %v1543 = vadd.f32 %v1253, %v1542
        %v1544 = vpop.f32.mrf.mxu0
        %v1545 = vadd.f32 %v1258, %v1544
        %v1546 = vpop.f32.mrf.mxu0
        %v1547 = vadd.f32 %v1258, %v1546
        %1548 = vdwg.mxu0
        %v1549 = vpack.c.bf16 %v1395, %v1391
        %v1550 = vpack.c.bf16 %v1397, %v1393
        %v1551 = vpack.c.bf16 %v1405, %v1401
        %v1552 = vpack.c.bf16 %v1407, %v1403
        %v1553 = vpack.c.bf16 %v1415, %v1411
        %v1554 = vpack.c.bf16 %v1417, %v1413
        %v1555 = vpack.c.bf16 %v1425, %v1421
        %v1556 = vpack.c.bf16 %v1427, %v1423
        %v1557 = vpack.c.bf16 %v1435, %v1431
        %v1558 = vpack.c.bf16 %v1437, %v1433
        %v1559 = vpack.c.bf16 %v1445, %v1441
        %v1560 = vpack.c.bf16 %v1447, %v1443
        %v1561 = vpack.c.bf16 %v1455, %v1451
        %v1562 = vpack.c.bf16 %v1457, %v1453
        %v1563 = vpack.c.bf16 %v1465, %v1461
        %v1564 = vpack.c.bf16 %v1467, %v1463
        %v1565 = vpack.c.bf16 %v1475, %v1471
        %v1566 = vpack.c.bf16 %v1477, %v1473
        %v1567 = vpack.c.bf16 %v1485, %v1481
        %v1568 = vpack.c.bf16 %v1487, %v1483
        %v1569 = vpack.c.bf16 %v1495, %v1491
        %v1570 = vpack.c.bf16 %v1497, %v1493
        %v1571 = vpack.c.bf16 %v1505, %v1501
        %v1572 = vpack.c.bf16 %v1507, %v1503
        %v1573 = vpack.c.bf16 %v1515, %v1511
        %v1574 = vpack.c.bf16 %v1517, %v1513
        %v1575 = vpack.c.bf16 %v1525, %v1521
        %v1576 = vpack.c.bf16 %v1527, %v1523
        %v1577 = vpack.c.bf16 %v1535, %v1531
        %v1578 = vpack.c.bf16 %v1537, %v1533
        %v1579 = vpack.c.bf16 %v1545, %v1541
        %v1580 = vpack.c.bf16 %v1547, %v1543
        %v1613 = vunpack.c.l.b16 %v1549
        %v1614 = vunpack.c.l.b16 %v1550
        %v1615 = vunpack.c.h.b16 %v1549
        %v1616 = vunpack.c.h.b16 %v1550
        %v1617 = vunpack.c.l.b16 %v1551
        %v1618 = vunpack.c.l.b16 %v1552
        %v1619 = vunpack.c.h.b16 %v1551
        %v1620 = vunpack.c.h.b16 %v1552
        %v1621 = vunpack.c.l.b16 %v1553
        %v1622 = vunpack.c.l.b16 %v1554
        %v1623 = vunpack.c.h.b16 %v1553
        %v1624 = vunpack.c.h.b16 %v1554
        %v1625 = vunpack.c.l.b16 %v1555
        %v1626 = vunpack.c.l.b16 %v1556
        %v1627 = vunpack.c.h.b16 %v1555
        %v1628 = vunpack.c.h.b16 %v1556
        %v1629 = vunpack.c.l.b16 %v1557
        %v1630 = vunpack.c.l.b16 %v1558
        %v1631 = vunpack.c.h.b16 %v1557
        %v1632 = vunpack.c.h.b16 %v1558
        %v1633 = vunpack.c.l.b16 %v1559
        %v1634 = vunpack.c.l.b16 %v1560
        %v1635 = vunpack.c.h.b16 %v1559
        %v1636 = vunpack.c.h.b16 %v1560
        %v1637 = vunpack.c.l.b16 %v1561
        %v1638 = vunpack.c.l.b16 %v1562
        %v1639 = vunpack.c.h.b16 %v1561
        %v1640 = vunpack.c.h.b16 %v1562
        %v1641 = vunpack.c.l.b16 %v1563
        %v1642 = vunpack.c.l.b16 %v1564
        %v1643 = vunpack.c.h.b16 %v1563
        %v1644 = vunpack.c.h.b16 %v1564
        %v1645 = vunpack.c.l.b16 %v1565
        %v1646 = vunpack.c.l.b16 %v1566
        %v1647 = vunpack.c.h.b16 %v1565
        %v1648 = vunpack.c.h.b16 %v1566
        %v1649 = vunpack.c.l.b16 %v1567
        %v1650 = vunpack.c.l.b16 %v1568
        %v1651 = vunpack.c.h.b16 %v1567
        %v1652 = vunpack.c.h.b16 %v1568
        %v1653 = vunpack.c.l.b16 %v1569
        %v1654 = vunpack.c.l.b16 %v1570
        %v1655 = vunpack.c.h.b16 %v1569
        %v1656 = vunpack.c.h.b16 %v1570
        %v1657 = vunpack.c.l.b16 %v1571
        %v1658 = vunpack.c.l.b16 %v1572
        %v1659 = vunpack.c.h.b16 %v1571
        %v1660 = vunpack.c.h.b16 %v1572
        %v1661 = vunpack.c.l.b16 %v1573
        %v1662 = vunpack.c.l.b16 %v1574
        %v1663 = vunpack.c.h.b16 %v1573
        %v1664 = vunpack.c.h.b16 %v1574
        %v1665 = vunpack.c.l.b16 %v1575
        %v1666 = vunpack.c.l.b16 %v1576
        %v1667 = vunpack.c.h.b16 %v1575
        %v1668 = vunpack.c.h.b16 %v1576
        %v1669 = vunpack.c.l.b16 %v1577
        %v1670 = vunpack.c.l.b16 %v1578
        %v1671 = vunpack.c.h.b16 %v1577
        %v1672 = vunpack.c.h.b16 %v1578
        %v1673 = vunpack.c.l.b16 %v1579
        %v1674 = vunpack.c.l.b16 %v1580
        %v1675 = vunpack.c.h.b16 %v1579
        %v1676 = vunpack.c.h.b16 %v1580
        %v1677 = vpack.c.b16 %v1614, %v1613
        %v1678 = vpack.c.b16 %v1616, %v1615
        %v1679 = vpack.c.b16 %v1618, %v1617
        %v1680 = vpack.c.b16 %v1620, %v1619
        %v1681 = vpack.c.b16 %v1622, %v1621
        %v1682 = vpack.c.b16 %v1624, %v1623
        %v1683 = vpack.c.b16 %v1626, %v1625
        %v1684 = vpack.c.b16 %v1628, %v1627
        %v1685 = vpack.c.b16 %v1630, %v1629
        %v1686 = vpack.c.b16 %v1632, %v1631
        %v1687 = vpack.c.b16 %v1634, %v1633
        %v1688 = vpack.c.b16 %v1636, %v1635
        %v1689 = vpack.c.b16 %v1638, %v1637
        %v1690 = vpack.c.b16 %v1640, %v1639
        %v1691 = vpack.c.b16 %v1642, %v1641
        %v1692 = vpack.c.b16 %v1644, %v1643
        %v1693 = vpack.c.b16 %v1646, %v1645
        %v1694 = vpack.c.b16 %v1648, %v1647
        %v1695 = vpack.c.b16 %v1650, %v1649
        %v1696 = vpack.c.b16 %v1652, %v1651
        %v1697 = vpack.c.b16 %v1654, %v1653
        %v1698 = vpack.c.b16 %v1656, %v1655
        %v1699 = vpack.c.b16 %v1658, %v1657
        %v1700 = vpack.c.b16 %v1660, %v1659
        %v1701 = vpack.c.b16 %v1662, %v1661
        %v1702 = vpack.c.b16 %v1664, %v1663
        %v1703 = vpack.c.b16 %v1666, %v1665
        %v1704 = vpack.c.b16 %v1668, %v1667
        %v1705 = vpack.c.b16 %v1670, %v1669
        %v1706 = vpack.c.b16 %v1672, %v1671
        %v1707 = vpack.c.b16 %v1674, %v1673
        %v1708 = vpack.c.b16 %v1676, %v1675
        %1741 = vst [vmem:[%s257] sm:$0xff] %v1677
        %1742 = vst [vmem:[%s257 + $0x8] sm:$0xff] %v1678
        %1743 = vst [vmem:[%s257 + $0x10] sm:$0xff] %v1679
        %1744 = vst [vmem:[%s257 + $0x18] sm:$0xff] %v1680
        %1745 = vst [vmem:[%s257 + $0x20] sm:$0xff] %v1681
        %1746 = vst [vmem:[%s257 + $0x28] sm:$0xff] %v1682
        %1747 = vst [vmem:[%s257 + $0x30] sm:$0xff] %v1683
        %1748 = vst [vmem:[%s257 + $0x38] sm:$0xff] %v1684
        %1749 = vst [vmem:[%s257 + $0x40] sm:$0xff] %v1685
        %1750 = vst [vmem:[%s257 + $0x48] sm:$0xff] %v1686
        %1751 = vst [vmem:[%s257 + $0x50] sm:$0xff] %v1687
        %1752 = vst [vmem:[%s257 + $0x58] sm:$0xff] %v1688
        %1753 = vst [vmem:[%s257 + $0x60] sm:$0xff] %v1689
        %1754 = vst [vmem:[%s257 + $0x68] sm:$0xff] %v1690
        %1755 = vst [vmem:[%s257 + $0x70] sm:$0xff] %v1691
        %1756 = vst [vmem:[%s257 + $0x78] sm:$0xff] %v1692
        %1757 = vst [vmem:[%s257 + $0x80] sm:$0xff] %v1693
        %1758 = vst [vmem:[%s257 + $0x88] sm:$0xff] %v1694
        %1759 = vst [vmem:[%s257 + $0x90] sm:$0xff] %v1695
        %1760 = vst [vmem:[%s257 + $0x98] sm:$0xff] %v1696
        %1761 = vst [vmem:[%s257 + $0xa0] sm:$0xff] %v1697
        %1762 = vst [vmem:[%s257 + $0xa8] sm:$0xff] %v1698
        %1763 = vst [vmem:[%s257 + $0xb0] sm:$0xff] %v1699
        %1764 = vst [vmem:[%s257 + $0xb8] sm:$0xff] %v1700
        %1765 = vst [vmem:[%s257 + $0xc0] sm:$0xff] %v1701
        %1766 = vst [vmem:[%s257 + $0xc8] sm:$0xff] %v1702
        %1767 = vst [vmem:[%s257 + $0xd0] sm:$0xff] %v1703
        %1768 = vst [vmem:[%s257 + $0xd8] sm:$0xff] %v1704
        %1769 = vst [vmem:[%s257 + $0xe0] sm:$0xff] %v1705
        %1770 = vst [vmem:[%s257 + $0xe8] sm:$0xff] %v1706
        %1771 = vst [vmem:[%s257 + $0xf0] sm:$0xff] %v1707
        %1772 = vst [vmem:[%s257 + $0xf8] sm:$0xff] %v1708
        %s1773 = sand.u32 %s154, 1
        %s1774 = scalar_lea.sflag [#allocation4], %s1773
        %s1775 = sand.u32 %s154, 1
        %s1776 = smul.addr %s1775, 256
        %s1777 = scalar_lea.vmem [#allocation5], %s1776
        // Predicated region
        $region45: #{tpu_custom_call.1} parent=39 // pred_check
          %p1778 = pneg %p164
        $region46: #{tpu_custom_call.1} parent=39 // pred_check_branch
          %1780 = sbr.rel (%p1778) target = $region48
        $region47: #{tpu_custom_call.1} parent=39 // pred_region
          %s1781 = smul.u32 2, %s25
          %s1783 = ssub.s32 4096, 4096
          %1784 = vsyncadd %s1774, %s1783
          %s1785 = smul.addr %s24, 64
          %s1786 = sadd.s32 %s1781, %s1785
          %s1787 = smul.addr %s1786, 64
          %s1788 = scalar_lea.hbm %s5, %s1787
          %s1789 = sshll.u32 %s1777, 4
          %s1790 = int_to_ptr.vmem [resolvable:$true] %s1789
          %1795 = dma.vmem_to_hbm [thread:$0]  %s1790, 4096, %s1788, %s1774, 128, 128, 8
        $region48: #{tpu_custom_call.1} parent=39 // pred_fallthru
          _
      $region40: #{tpu_custom_call.1} parent=5 // pred_fallthru
        _
      %p1796 = scmp.le.s32.totalorder 2, %s15
      // Predicated region
      $region49: #{tpu_custom_call.1} parent=5 // pred_check
        %p1797 = pneg %p1796
      $region50: #{tpu_custom_call.1} parent=5 // pred_check_branch
        %1799 = sbr.rel (%p1797) target = $region52
      $region51: #{tpu_custom_call.1} parent=5 // pred_region
        %s1800 = ssub.s32 %s15, 2
        // Predicated region
        $region53: #{tpu_custom_call.1} parent=51 // pred_check
          %p1801 = pneg %p170
        $region54: #{tpu_custom_call.1} parent=51 // pred_check_branch
          %1803 = sbr.rel (%p1801) target = $region56
        $region55: #{tpu_custom_call.1} parent=51 // pred_region
          %s1804 = sand.u32 %s155, 1
          %s1805 = scalar_lea.sflag [#allocation4], %s1804
          %s1806 = sand.u32 %s155, 1
          %s1807 = smul.addr %s1806, 256
          %s1808 = scalar_lea.vmem [#allocation5], %s1807
          %1809 = dma.done %s1805, 4096
        $region56: #{tpu_custom_call.1} parent=51 // pred_fallthru
          _
      $region52: #{tpu_custom_call.1} parent=5 // pred_fallthru
        _
    $region6: #{tpu_custom_call.1} parent=1 // loop_footer
      %s19 = sadd.s32 1, %s15
    $region7: #{tpu_custom_call.1} parent=1 // loop_footer_branch
      %14 = sbr.rel target = $region3
    $region8: #{tpu_custom_call.1} parent=1 // loop_exit
      _
    %1810 = vsyncpa [#allocation3], 1
    %s1811 = scalar_lea.sflag [#allocation3], 1
    %1812 = vsyncpa %s1811, 1
    %1813 = vsyncpa [#allocation4], 1
    %s1814 = scalar_lea.sflag [#allocation4], 1
    %1815 = vsyncpa %s1814, 1

</llo_original>
